<compile_context>
chip_gen: v7x
topology: tpu7x:2x2x1
jax: 0.10.0
libtpu: 0.0.40
codegen_flags: <defaults>
</compile_context>

<pallas_src>
import functools

import numpy as np

import jax
import jax.numpy as jnp
from jax import lax
from jax.experimental import pallas as pl
from jax.experimental.pallas import tpu as pltpu


LANE = 128
SUBLANE = 8


def _round_up(v, m):
    return ((v + m - 1) // m) * m


def _resident(shape):
    """Full-array block with a constant index map -> loaded into VMEM once."""
    zeros = (0,) * len(shape)
    return pl.BlockSpec(shape, lambda *_: zeros)


# ----------------------------------------------------------------------------
# Fused kernel: one grid step per TREE LEVEL (wavefront); doc head on the last
# step.  Scalar-prefetch args (SMEM, all 1-D): child-slot table, dep-id table,
# per-sentence root slots.  h_scr is a persistent 2-D VMEM scratch of node
# hidden states laid out level-major; the last 8 rows form a reserved zero
# block (virtual child of leaves / padded child slots).
# ----------------------------------------------------------------------------
def _gated_drgt_kernel(
    # scalar prefetch (SMEM, 1-D)
    cidx_ref,            # (num_levels*lvl_max*maxk,) int32  child slots in h_scr
    didx_ref,            # (num_levels*lvl_max*maxk,) int32  rows into demb
    rslot_ref,           # (n_sent,) int32                    root slot per sentence
    # inputs
    x_ref,               # (lvl_max, in_pad) f32   this level's word vectors (streamed)
    demb_ref,            # (dep_rows, h_pad) f32   dep embeddings (+ zero rows)
    w_iu_ref, b_iu_ref,  # (in_pad+2h, 2h) bf16, (1, 2h) f32   fused iux/iuh/iue
    w_fx_ref,            # (in_pad, h) bf16
    w_fhe_ref,           # (2h, h) bf16                         fused fh/fe
    b_f_ref,             # (1, h) f32
    topic_ref,           # (1, t_pad) f32
    w_gi_ref, b_gi_ref,  # (h, 3h) bf16, (1, 3h) f32            fused GRU input
    w_gh_ref, b_gh_ref,  # (h, 3h) bf16, (1, 3h) f32            fused GRU hidden
    w_t_ref, b_t_ref,    # (t_pad, h) bf16, (1, h) f32
    w_gate_ref, b_gate_ref,  # (2h, 2h) bf16, (1, 2h) f32       fused sem/topic gates
    w_c_ref, b_c_ref,    # (h, c_pad) bf16, (1, c_pad) f32
    # output
    out_ref,             # (1, c_pad) f32 log-probs (padded lanes sliced outside)
    # scratch
    h_scr,               # (num_levels*lvl_max + 8, h_pad) f32  node hiddens, level-major
    ch_scr,              # (maxk*lvl_max, h_pad) f32            gathered child hiddens
    ce_scr,              # (maxk*lvl_max, h_pad) f32            gathered dep embeddings
    sent_scr,            # (s_pad, h_pad) f32                   sentence (root) vectors
    xproj_scr,           # (s_pad, 3h_pad) f32                  hoisted GRU input proj
    *, num_class, maxk):
    lvl = pl.program_id(0)
    n_levels = pl.num_programs(0)
    lvl_max = x_ref.shape[0]
    h_pad = w_fx_ref.shape[1]
    n_sent = rslot_ref.shape[0]
    zero_base = h_scr.shape[0] - SUBLANE          # reserved zero block (8 rows)
    bf16 = jnp.bfloat16

    @pl.when(lvl == 0)
    def _init():
        h_scr[pl.ds(zero_base, SUBLANE), :] = jnp.zeros((SUBLANE, h_pad), jnp.float32)

    # ---- gather this level's children (scratch writes, no concatenate of
    # ---- per-node rows); k-major so each child-slot block is a tile-aligned
    # ---- (lvl_max, h_pad) slab for the per-node sums below.
    tbl_base = lvl * (lvl_max * maxk)
    for j in range(lvl_max):
        for k in range(maxk):
            t = tbl_base + j * maxk + k
            row = k * lvl_max + j
            ch_scr[pl.ds(row, 1), :] = h_scr[pl.ds(cidx_ref[t], 1), :]
            ce_scr[pl.ds(row, 1), :] = demb_ref[pl.ds(didx_ref[t], 1), :]

    ch = ch_scr[...]                                             # (maxk*L, h)
    ce = ce_scr[...]
    ch_sum = jnp.zeros((lvl_max, h_pad), jnp.float32)
    ce_sum = jnp.zeros((lvl_max, h_pad), jnp.float32)
    for k in range(maxk):
        ch_sum = ch_sum + ch[k * lvl_max:(k + 1) * lvl_max, :]
        ce_sum = ce_sum + ce[k * lvl_max:(k + 1) * lvl_max, :]

    x = x_ref[...]                                               # (L, in_pad) f32

    # ---- i/u gates: one fused batched matmul over [x | ch_sum | ce_sum]
    xv = jnp.concatenate([x, ch_sum, ce_sum], axis=1).astype(bf16)
    iu = (jnp.dot(xv, w_iu_ref[...], preferred_element_type=jnp.float32)
          + b_iu_ref[...])                                       # (L, 2h)
    gate_i = jax.nn.sigmoid(iu[:, 0:h_pad])
    gate_u = jnp.tanh(iu[:, h_pad:2 * h_pad])

    # ---- forget gates: one fused matmul over all (node, child-slot) pairs
    fxb = (jnp.dot(x.astype(bf16), w_fx_ref[...],
                   preferred_element_type=jnp.float32) + b_f_ref[...])  # (L, h)
    che = jnp.concatenate([ch, ce], axis=1).astype(bf16)         # (maxk*L, 2h)
    f_pre = jnp.dot(che, w_fhe_ref[...], preferred_element_type=jnp.float32)
    fsum = jnp.zeros((lvl_max, h_pad), jnp.float32)
    for k in range(maxk):
        f_k = jax.nn.sigmoid(f_pre[k * lvl_max:(k + 1) * lvl_max, :] + fxb)
        fsum = fsum + f_k * ch[k * lvl_max:(k + 1) * lvl_max, :]

    h_new = jnp.tanh(gate_i * gate_u + fsum)                     # (L, h)

    # one aligned block store of the whole level's hidden states
    base = pl.multiple_of(lvl * lvl_max, lvl_max)
    h_scr[pl.ds(base, lvl_max), :] = h_new

    # ---------------- document head (runs once, on last level) ---------------
    @pl.when(lvl == n_levels - 1)
    def _doc():
        h3 = 3 * h_pad

        # sentence (root) vectors -> contiguous scratch
        sent_scr[...] = jnp.zeros_like(sent_scr)
        for s in range(n_sent):
            sent_scr[pl.ds(s, 1), :] = h_scr[pl.ds(rslot_ref[s], 1), :]
        sent = sent_scr[...]                                     # (s_pad, h)

        # GRU: input projections hoisted into ONE batched matmul, written to a
        # scratch; the recurrence reads the hidden weights inside the loop.
        xproj_scr[...] = (jnp.dot(sent.astype(bf16), w_gi_ref[...],
                                  preferred_element_type=jnp.float32)
                          + b_gi_ref[...])                       # (s_pad, 3h)

        def gru_step(t, hcur):
            xp = xproj_scr[pl.ds(t, 1), :]                       # (1, 3h)
            gh = (jnp.dot(hcur.astype(bf16), w_gh_ref[...],
                          preferred_element_type=jnp.float32) + b_gh_ref[...])
            r = jax.nn.sigmoid(xp[:, 0:h_pad] + gh[:, 0:h_pad])
            z = jax.nn.sigmoid(xp[:, h_pad:2 * h_pad] + gh[:, h_pad:2 * h_pad])
            n = jnp.tanh(xp[:, 2 * h_pad:h3] + r * gh[:, 2 * h_pad:h3])
            return (1.0 - z) * n + z * hcur

        doc = lax.fori_loop(0, n_sent, gru_step,
                            jnp.zeros((1, h_pad), jnp.float32), unroll=True)

        topic_h = jnp.tanh(
            jnp.dot(topic_ref[...].astype(bf16), w_t_ref[...],
                    preferred_element_type=jnp.float32) + b_t_ref[...])

        # both gates in one fused matmul over [doc | topic_h]
        dt = jnp.concatenate([doc, topic_h], axis=1).astype(bf16)
        gates = jax.nn.sigmoid(
            jnp.dot(dt, w_gate_ref[...], preferred_element_type=jnp.float32)
            + b_gate_ref[...])
        fea = jnp.tanh(doc * gates[:, 0:h_pad] + topic_h * gates[:, h_pad:2 * h_pad])

        logits = (jnp.dot(fea.astype(bf16), w_c_ref[...],
                          preferred_element_type=jnp.float32) + b_c_ref[...])
        c_pad = logits.shape[1]
        lane = lax.broadcasted_iota(jnp.int32, (1, c_pad), 1)
        logits = jnp.where(lane < num_class, logits, -1e30)      # mask padded classes
        m = jnp.max(logits, axis=1, keepdims=True)
        shifted = logits - m
        lse = jnp.log(jnp.sum(jnp.exp(shifted), axis=1, keepdims=True))
        out_ref[...] = shifted - lse


@functools.partial(jax.jit, static_argnames=("num_class", "lvl_max"))
def gated_drgt_forward(cidx, didx, rslots, xs, topic_pad, kp, *, num_class, lvl_max):
    n_rows, in_pad = xs.shape
    num_levels = n_rows // lvl_max
    maxk = cidx.shape[0] // n_rows
    n_sent = rslots.shape[0]
    h_pad = kp["w_fx"].shape[1]
    c_pad = kp["w_c"].shape[1]
    t_pad = topic_pad.shape[1]
    s_pad = _round_up(n_sent, SUBLANE)
    n_slots = n_rows + SUBLANE                     # + reserved zero block

    kernel = functools.partial(_gated_drgt_kernel, num_class=num_class, maxk=maxk)

    grid_spec = pltpu.PrefetchScalarGridSpec(
        num_scalar_prefetch=3,
        grid=(num_levels,),
        in_specs=[
            # word vectors are streamed one level block per grid step
            pl.BlockSpec((lvl_max, in_pad), lambda l, *_: (l, 0)),
            _resident(kp["demb"].shape),
            _resident(kp["w_iu"].shape), _resident(kp["b_iu"].shape),
            _resident(kp["w_fx"].shape), _resident(kp["w_fhe"].shape),
            _resident(kp["b_f"].shape),
            _resident(topic_pad.shape),
            _resident(kp["w_gi"].shape), _resident(kp["b_gi"].shape),
            _resident(kp["w_gh"].shape), _resident(kp["b_gh"].shape),
            _resident(kp["w_t"].shape), _resident(kp["b_t"].shape),
            _resident(kp["w_gate"].shape), _resident(kp["b_gate"].shape),
            _resident(kp["w_c"].shape), _resident(kp["b_c"].shape),
        ],
        out_specs=pl.BlockSpec((1, c_pad), lambda *_: (0, 0)),
        scratch_shapes=[
            pltpu.VMEM((n_slots, h_pad), jnp.float32),            # node hiddens
            pltpu.VMEM((maxk * lvl_max, h_pad), jnp.float32),     # child hiddens
            pltpu.VMEM((maxk * lvl_max, h_pad), jnp.float32),     # dep embeddings
            pltpu.VMEM((s_pad, h_pad), jnp.float32),              # sentence roots
            pltpu.VMEM((s_pad, 3 * h_pad), jnp.float32),          # GRU input proj
        ],
    )

    # advisory cost estimate so XLA schedules the surrounding graph sensibly
    flops = int(
        num_levels * 2 * (lvl_max * (in_pad + 2 * h_pad) * (2 * h_pad)
                          + lvl_max * in_pad * h_pad
                          + lvl_max * maxk * (2 * h_pad) * h_pad)
        + 2 * (s_pad * h_pad * 3 * h_pad + n_sent * h_pad * 3 * h_pad
               + t_pad * h_pad + 4 * h_pad * h_pad + h_pad * c_pad))
    transcendentals = int(num_levels * lvl_max * (2 + maxk) * h_pad
                          + n_sent * 3 * h_pad + 6 * h_pad + 2 * c_pad)
    bytes_accessed = int(sum(int(np.prod(v.shape)) * v.dtype.itemsize
                             for v in kp.values())
                         + xs.size * 4 + topic_pad.size * 4 + c_pad * 4
                         + (cidx.size + didx.size + rslots.size) * 4)

    out_pad = pl.pallas_call(
        kernel,
        out_shape=jax.ShapeDtypeStruct((1, c_pad), jnp.float32),
        grid_spec=grid_spec,
        compiler_params=pltpu.CompilerParams(
            dimension_semantics=("arbitrary",),    # levels are sequentially dependent
            vmem_limit_bytes=64 * 1024 * 1024),
        cost_estimate=pl.CostEstimate(flops=flops,
                                      transcendentals=transcendentals,
                                      bytes_accessed=bytes_accessed),
    )(cidx, didx, rslots,
      xs, kp["demb"], kp["w_iu"], kp["b_iu"], kp["w_fx"], kp["w_fhe"], kp["b_f"],
      topic_pad, kp["w_gi"], kp["b_gi"], kp["w_gh"], kp["b_gh"],
      kp["w_t"], kp["b_t"], kp["w_gate"], kp["b_gate"], kp["w_c"], kp["b_c"])
    return out_pad[:, :num_class]


# ----------------------------------------------------------------------------
# Host-side schedule: flatten the (data-dependent) recursion into LEVEL-WISE
# int32 tables.  tree := [ (word_id, dep_id), child_tree_1, child_tree_2, ... ]
# Slot layout of h_scr: level-major, lvl_max slots per level, plus an 8-row
# zero block at the end (virtual child of leaves / padded child slots).
# ----------------------------------------------------------------------------
def build_schedule(parser_data, maxk, num_dep, lvl_mult=SUBLANE):
    nodes = []            # (word_id, dep_id, children_idx, level)
    roots = []

    def walk(tree):
        child_ids = [walk(tree[k + 1]) for k in range(len(tree) - 1)]
        word_id, dep_id = tree[0]
        level = 0 if not child_ids else 1 + max(nodes[c][3] for c in child_ids)
        nodes.append((word_id, dep_id, child_ids, level))
        return len(nodes) - 1

    for tree in parser_data:
        roots.append(walk(tree))

    num_levels = 1 + max(n[3] for n in nodes)
    by_level = [[] for _ in range(num_levels)]
    for idx, n in enumerate(nodes):
        by_level[n[3]].append(idx)
    lvl_max = max(_round_up(max(len(b) for b in by_level), lvl_mult), lvl_mult)

    zero_slot = num_levels * lvl_max            # first row of the zero block
    slot_of = {}
    for l, b in enumerate(by_level):
        for p, idx in enumerate(b):
            slot_of[idx] = l * lvl_max + p

    word_ids = np.full((num_levels * lvl_max,), -1, np.int64)   # -1 == padding node
    cidx = np.full((num_levels * lvl_max, maxk), zero_slot, np.int64)
    didx = np.full((num_levels * lvl_max, maxk), num_dep, np.int64)  # zero emb row
    for idx, (word_id, dep_id, child_ids, _level) in enumerate(nodes):
        slot = slot_of[idx]
        word_ids[slot] = word_id
        if not child_ids:
            # torch leaf case: one virtual child with zero hidden and dep id 0
            cidx[slot, 0] = zero_slot
            didx[slot, 0] = 0
        else:
            assert len(child_ids) <= maxk, "increase MAX_CHILDREN"
            for k, c in enumerate(child_ids):
                cidx[slot, k] = slot_of[c]
                didx[slot, k] = nodes[c][1]     # child's own dependency id

    rslots = np.asarray([slot_of[r] for r in roots], np.int32)
    return (word_ids,
            np.asarray(cidx.reshape(-1), np.int32),     # 1-D: no SMEM lane padding
            np.asarray(didx.reshape(-1), np.int32),
            rslots, num_levels, lvl_max)


# ----------------------------------------------------------------------------
# Parameters: raw torch-layout params, then fused + 128-lane-padded kernel
# layout (weights transposed to [in, out], gate halves stacked, biases summed,
# weight matrices stored in bf16, biases / embeddings in f32).
# ----------------------------------------------------------------------------
def init_raw_params(key, in_dim, h_dim, num_dep, num_topic, num_class, vocab):
    ks = iter(jax.random.split(key, 40))

    def lin(out_d, in_d):
        w = jax.random.normal(next(ks), (out_d, in_d), jnp.float32) * 0.1
        b = jax.random.normal(next(ks), (out_d,), jnp.float32) * 0.1
        return w, b

    raw = {}
    raw["W_iux"], raw["b_iux"] = lin(2 * h_dim, in_dim)
    raw["W_iuh"], raw["b_iuh"] = lin(2 * h_dim, h_dim)
    raw["W_iue"], raw["b_iue"] = lin(2 * h_dim, h_dim)
    raw["W_fx"], raw["b_fx"] = lin(h_dim, in_dim)
    raw["W_fh"], raw["b_fh"] = lin(h_dim, h_dim)
    raw["W_fe"], raw["b_fe"] = lin(h_dim, h_dim)
    raw["demb"] = jax.random.normal(next(ks), (num_dep, h_dim), jnp.float32) * 0.1
    raw["w2v"] = jax.random.normal(next(ks), (vocab, in_dim), jnp.float32) * 0.1
    raw["W_ih"], raw["b_ih"] = lin(3 * h_dim, h_dim)      # GRU, torch order r,z,n
    raw["W_hh"], raw["b_hh"] = lin(3 * h_dim, h_dim)
    raw["W_t"], raw["b_t"] = lin(h_dim, num_topic)
    raw["W_sg"], raw["b_sg"] = lin(h_dim, h_dim)
    raw["U_sg"], raw["bu_sg"] = lin(h_dim, h_dim)
    raw["W_tg"], raw["b_tg"] = lin(h_dim, h_dim)
    raw["U_tg"], raw["bu_tg"] = lin(h_dim, h_dim)
    raw["W_c"], raw["b_c"] = lin(num_class, h_dim)
    return raw


def prepare_kernel_params(raw, in_dim, h_dim, num_dep, num_topic, num_class,
                          in_pad, h_pad, t_pad, c_pad):
    R = {k: np.asarray(v, dtype=np.float32) for k, v in raw.items()}
    h = h_dim

    def z(*s):
        return np.zeros(s, np.float32)

    # fused i/u: input [x | ch_sum | ce_sum] -> output [i | u] (padded halves)
    w_iu = z(in_pad + 2 * h_pad, 2 * h_pad)

    def put_iu(row0, W):
        src = W.shape[1]
        w_iu[row0:row0 + src, 0:h] = W[:h].T
        w_iu[row0:row0 + src, h_pad:h_pad + h] = W[h:].T

    put_iu(0, R["W_iux"])
    put_iu(in_pad, R["W_iuh"])
    put_iu(in_pad + h_pad, R["W_iue"])
    b_iu = z(1, 2 * h_pad)
    b_iu[0, 0:h] = R["b_iux"][:h] + R["b_iuh"][:h] + R["b_iue"][:h]
    b_iu[0, h_pad:h_pad + h] = R["b_iux"][h:] + R["b_iuh"][h:] + R["b_iue"][h:]

    w_fx = z(in_pad, h_pad)
    w_fx[:in_dim, :h] = R["W_fx"].T
    w_fhe = z(2 * h_pad, h_pad)
    w_fhe[0:h, 0:h] = R["W_fh"].T
    w_fhe[h_pad:h_pad + h, 0:h] = R["W_fe"].T
    b_f = z(1, h_pad)
    b_f[0, :h] = R["b_fx"] + R["b_fh"] + R["b_fe"]

    dep_rows = _round_up(num_dep + 1, SUBLANE)
    demb = z(dep_rows, h_pad)                  # rows >= num_dep are the zero pad rows
    demb[:num_dep, :h] = R["demb"]

    # GRU fused (gate order r, z, n)
    w_gi = z(h_pad, 3 * h_pad)
    b_gi = z(1, 3 * h_pad)
    w_gh = z(h_pad, 3 * h_pad)
    b_gh = z(1, 3 * h_pad)
    for g in range(3):
        w_gi[0:h, g * h_pad:g * h_pad + h] = R["W_ih"][g * h:(g + 1) * h].T
        b_gi[0, g * h_pad:g * h_pad + h] = R["b_ih"][g * h:(g + 1) * h]
        w_gh[0:h, g * h_pad:g * h_pad + h] = R["W_hh"][g * h:(g + 1) * h].T
        b_gh[0, g * h_pad:g * h_pad + h] = R["b_hh"][g * h:(g + 1) * h]

    w_t = z(t_pad, h_pad)
    w_t[:num_topic, :h] = R["W_t"].T
    b_t = z(1, h_pad)
    b_t[0, :h] = R["b_t"]

    # fused gates: [doc | topic_h] -> [gate_sem | gate_topic]
    w_gate = z(2 * h_pad, 2 * h_pad)
    w_gate[0:h, 0:h] = R["W_sg"].T
    w_gate[h_pad:h_pad + h, 0:h] = R["U_sg"].T
    w_gate[0:h, h_pad:h_pad + h] = R["W_tg"].T
    w_gate[h_pad:h_pad + h, h_pad:h_pad + h] = R["U_tg"].T
    b_gate = z(1, 2 * h_pad)
    b_gate[0, 0:h] = R["b_sg"] + R["bu_sg"]
    b_gate[0, h_pad:h_pad + h] = R["b_tg"] + R["bu_tg"]

    w_c = z(h_pad, c_pad)
    w_c[:h, :num_class] = R["W_c"].T
    b_c = z(1, c_pad)
    b_c[0, :num_class] = R["b_c"]

    bf16 = jnp.bfloat16
    kp = dict(
        demb=jnp.asarray(demb),
        w_iu=jnp.asarray(w_iu, bf16), b_iu=jnp.asarray(b_iu),
        w_fx=jnp.asarray(w_fx, bf16), w_fhe=jnp.asarray(w_fhe, bf16),
        b_f=jnp.asarray(b_f),
        w_gi=jnp.asarray(w_gi, bf16), b_gi=jnp.asarray(b_gi),
        w_gh=jnp.asarray(w_gh, bf16), b_gh=jnp.asarray(b_gh),
        w_t=jnp.asarray(w_t, bf16), b_t=jnp.asarray(b_t),
        w_gate=jnp.asarray(w_gate, bf16), b_gate=jnp.asarray(b_gate),
        w_c=jnp.asarray(w_c, bf16), b_c=jnp.asarray(b_c),
    )
    return kp


# ----------------------------------------------------------------------------
# Pure-JAX reference (mirrors the PyTorch module, unpadded, f32) for validation.
# ----------------------------------------------------------------------------
def _ref_node(x, child_h, child_e, R, h):
    ch_sum = jnp.sum(child_h, axis=0, keepdims=True)
    ce_sum = jnp.sum(child_e, axis=0, keepdims=True)
    iu = (x @ R["W_iux"].T + R["b_iux"]
          + ch_sum @ R["W_iuh"].T + R["b_iuh"]
          + ce_sum @ R["W_iue"].T + R["b_iue"])
    i = jax.nn.sigmoid(iu[:, :h])
    u = jnp.tanh(iu[:, h:])
    f = jax.nn.sigmoid(child_h @ R["W_fh"].T + R["b_fh"]
                       + (x @ R["W_fx"].T + R["b_fx"])
                       + child_e @ R["W_fe"].T + R["b_fe"])
    return jnp.tanh(i * u + jnp.sum(f * child_h, axis=0, keepdims=True))


def _ref_tree(tree, R, h):
    word_id, dep_id = tree[0]
    x = R["w2v"][word_id][None, :]
    children = [_ref_tree(tree[k + 1], R, h) for k in range(len(tree) - 1)]
    if not children:
        child_h = jnp.zeros((1, h), jnp.float32)
        deps = (0,)
    else:
        child_h = jnp.concatenate([c[0] for c in children], axis=0)
        deps = tuple(c[1] for c in children)
    child_e = R["demb"][jnp.array(deps, dtype=jnp.int32)]
    return _ref_node(x, child_h, child_e, R, h), dep_id


def _ref_forward(parser_data, topic, R, h, num_class):
    sents = [_ref_tree(t, R, h)[0] for t in parser_data]
    sent = jnp.concatenate(sents, axis=0)
    hh = jnp.zeros((1, h), jnp.float32)
    for t in range(sent.shape[0]):
        x = sent[t:t + 1]
        r = jax.nn.sigmoid(x @ R["W_ih"][:h].T + R["b_ih"][:h]
                           + hh @ R["W_hh"][:h].T + R["b_hh"][:h])
        z = jax.nn.sigmoid(x @ R["W_ih"][h:2 * h].T + R["b_ih"][h:2 * h]
                           + hh @ R["W_hh"][h:2 * h].T + R["b_hh"][h:2 * h])
        n = jnp.tanh(x @ R["W_ih"][2 * h:].T + R["b_ih"][2 * h:]
                     + r * (hh @ R["W_hh"][2 * h:].T + R["b_hh"][2 * h:]))
        hh = (1.0 - z) * n + z * hh
    doc = hh
    topic_h = jnp.tanh(topic @ R["W_t"].T + R["b_t"])
    g_sem = jax.nn.sigmoid(doc @ R["W_sg"].T + R["b_sg"]
                           + topic_h @ R["U_sg"].T + R["bu_sg"])
    g_top = jax.nn.sigmoid(doc @ R["W_tg"].T + R["b_tg"]
                           + topic_h @ R["U_tg"].T + R["bu_tg"])
    fea = jnp.tanh(doc * g_sem + topic_h * g_top)
    logits = fea @ R["W_c"].T + R["b_c"]
    return jax.nn.log_softmax(logits, axis=-1)


if __name__ == "__main__":
    IN_DIM, H_DIM = 32, 32
    NUM_DEP, NUM_TOPIC, NUM_CLASS, VOCAB = 8, 16, 4, 10
    MAX_CHILDREN = 4

    in_pad = _round_up(IN_DIM, LANE)
    h_pad = _round_up(H_DIM, LANE)
    t_pad = _round_up(NUM_TOPIC, LANE)
    c_pad = _round_up(NUM_CLASS, LANE)

    key = jax.random.PRNGKey(0)
    k_params, k_topic = jax.random.split(key)
    raw = init_raw_params(k_params, IN_DIM, H_DIM, NUM_DEP, NUM_TOPIC,
                          NUM_CLASS, VOCAB)
    kp = prepare_kernel_params(raw, IN_DIM, H_DIM, NUM_DEP, NUM_TOPIC,
                               NUM_CLASS, in_pad, h_pad, t_pad, c_pad)

    # Synthetic parser output: 3 sentences, each a dependency tree.
    tree1 = [(1, 2), [(3, 1)], [(4, 3), [(5, 6)]]]
    tree2 = [(2, 1), [(6, 4)], [(8, 7)]]
    tree3 = [(7, 5)]
    parser_data = [tree1, tree2, tree3]

    topic_vec = jax.random.normal(k_topic, (1, NUM_TOPIC), jnp.float32)
    topic_pad = jnp.zeros((1, t_pad), jnp.float32).at[:, :NUM_TOPIC].set(topic_vec)

    (word_ids, cidx, didx, rslots,
     num_levels, lvl_max) = build_schedule(parser_data, MAX_CHILDREN, NUM_DEP)

    # word vectors in level-major node order (padding rows stay zero)
    w2v = np.asarray(raw["w2v"], np.float32)
    xs_np = np.zeros((num_levels * lvl_max, in_pad), np.float32)
    valid = word_ids >= 0
    xs_np[valid, :IN_DIM] = w2v[word_ids[valid]]
    xs = jnp.asarray(xs_np)

    out = gated_drgt_forward(jnp.asarray(cidx), jnp.asarray(didx),
                             jnp.asarray(rslots), xs, topic_pad, kp,
                             num_class=NUM_CLASS, lvl_max=lvl_max)
    out = jax.block_until_ready(out)

    assert out.shape == (1, NUM_CLASS)
    # log_softmax sanity: probabilities sum to 1
    assert abs(float(jnp.sum(jnp.exp(out))) - 1.0) < 1e-3
    # numerical check against the pure-JAX f32 reference of the PyTorch module
    # (tolerance accounts for bf16 weights / bf16 matmul operands).
    ref = _ref_forward(parser_data, topic_vec, raw, H_DIM, NUM_CLASS)
    assert jnp.allclose(out, ref, atol=3e-2, rtol=3e-2), (out, ref)
    print("KERNEL_OK")
</pallas_src>

<mosaic_0001>
module attributes {stable_mosaic.version = 11 : i64} {
  func.func @_gated_drgt_kernel(%arg0: i32, %arg1: memref<96xi32, #tpu.memory_space<smem>>, %arg2: memref<96xi32, #tpu.memory_space<smem>>, %arg3: memref<3xi32, #tpu.memory_space<smem>>, %arg4: memref<8x128xf32, #tpu.memory_space<vmem>>, %arg5: memref<16x128xf32, #tpu.memory_space<vmem>>, %arg6: memref<384x256xbf16, #tpu.memory_space<vmem>>, %arg7: memref<1x256xf32, #tpu.memory_space<vmem>>, %arg8: memref<128x128xbf16, #tpu.memory_space<vmem>>, %arg9: memref<256x128xbf16, #tpu.memory_space<vmem>>, %arg10: memref<1x128xf32, #tpu.memory_space<vmem>>, %arg11: memref<1x128xf32, #tpu.memory_space<vmem>>, %arg12: memref<128x384xbf16, #tpu.memory_space<vmem>>, %arg13: memref<1x384xf32, #tpu.memory_space<vmem>>, %arg14: memref<128x384xbf16, #tpu.memory_space<vmem>>, %arg15: memref<1x384xf32, #tpu.memory_space<vmem>>, %arg16: memref<128x128xbf16, #tpu.memory_space<vmem>>, %arg17: memref<1x128xf32, #tpu.memory_space<vmem>>, %arg18: memref<256x256xbf16, #tpu.memory_space<vmem>>, %arg19: memref<1x256xf32, #tpu.memory_space<vmem>>, %arg20: memref<128x128xbf16, #tpu.memory_space<vmem>>, %arg21: memref<1x128xf32, #tpu.memory_space<vmem>>, %arg22: memref<1x128xf32, #tpu.memory_space<vmem>>, %arg23: memref<32x128xf32, #tpu.memory_space<vmem>>, %arg24: memref<32x128xf32, #tpu.memory_space<vmem>>, %arg25: memref<32x128xf32, #tpu.memory_space<vmem>>, %arg26: memref<8x128xf32, #tpu.memory_space<vmem>>, %arg27: memref<8x384xf32, #tpu.memory_space<vmem>>) attributes {dimension_semantics = [#tpu.dimension_semantics<arbitrary>], iteration_bounds = array<i64: 3>, scalar_prefetch = 3 : i64, scratch_operands = 5 : i64, tpu.core_type = #tpu.core_type<tc>, window_params = [{transform_indices = @transform_0, window_bounds = array<i64: 8, 128>}, {pipeline_mode = #tpu.pipeline_mode<synchronous>, transform_indices = @transform_1, window_bounds = array<i64: 16, 128>}, {pipeline_mode = #tpu.pipeline_mode<synchronous>, transform_indices = @transform_2, window_bounds = array<i64: 384, 256>}, {pipeline_mode = #tpu.pipeline_mode<synchronous>, transform_indices = @transform_3, window_bounds = array<i64: 1, 256>}, {pipeline_mode = #tpu.pipeline_mode<synchronous>, transform_indices = @transform_4, window_bounds = array<i64: 128, 128>}, {pipeline_mode = #tpu.pipeline_mode<synchronous>, transform_indices = @transform_5, window_bounds = array<i64: 256, 128>}, {pipeline_mode = #tpu.pipeline_mode<synchronous>, transform_indices = @transform_6, window_bounds = array<i64: 1, 128>}, {pipeline_mode = #tpu.pipeline_mode<synchronous>, transform_indices = @transform_7, window_bounds = array<i64: 1, 128>}, {pipeline_mode = #tpu.pipeline_mode<synchronous>, transform_indices = @transform_8, window_bounds = array<i64: 128, 384>}, {pipeline_mode = #tpu.pipeline_mode<synchronous>, transform_indices = @transform_9, window_bounds = array<i64: 1, 384>}, {pipeline_mode = #tpu.pipeline_mode<synchronous>, transform_indices = @transform_10, window_bounds = array<i64: 128, 384>}, {pipeline_mode = #tpu.pipeline_mode<synchronous>, transform_indices = @transform_11, window_bounds = array<i64: 1, 384>}, {pipeline_mode = #tpu.pipeline_mode<synchronous>, transform_indices = @transform_12, window_bounds = array<i64: 128, 128>}, {pipeline_mode = #tpu.pipeline_mode<synchronous>, transform_indices = @transform_13, window_bounds = array<i64: 1, 128>}, {pipeline_mode = #tpu.pipeline_mode<synchronous>, transform_indices = @transform_14, window_bounds = array<i64: 256, 256>}, {pipeline_mode = #tpu.pipeline_mode<synchronous>, transform_indices = @transform_15, window_bounds = array<i64: 1, 256>}, {pipeline_mode = #tpu.pipeline_mode<synchronous>, transform_indices = @transform_16, window_bounds = array<i64: 128, 128>}, {pipeline_mode = #tpu.pipeline_mode<synchronous>, transform_indices = @transform_17, window_bounds = array<i64: 1, 128>}, {pipeline_mode = #tpu.pipeline_mode<synchronous>, transform_indices = @transform_18, window_bounds = array<i64: 1, 128>}]} {
    %c0_i32 = arith.constant 0 : i32
    %0 = arith.cmpi eq, %arg0, %c0_i32 : i32
    %1 = arith.extui %0 : i1 to i32
    %c0_i32_0 = arith.constant 0 : i32
    %2 = arith.cmpi ne, %1, %c0_i32_0 : i32
    scf.if %2 {
      %cst_245 = arith.constant 0.000000e+00 : f32
      %485 = vector.broadcast %cst_245 : f32 to vector<8x128xf32>
      %c24_246 = arith.constant 24 : index
      %c0_247 = arith.constant 0 : index
      %486 = vector.load %arg23[%c24_246, %c0_247] : memref<32x128xf32, #tpu.memory_space<vmem>>, vector<8x128xf32>
      tpu.vector_store %arg23[%c24_246, %c0_247], %485 {strides = array<i32>} : memref<32x128xf32, #tpu.memory_space<vmem>>, vector<8x128xf32>,
    } else {
    }
    %c32_i32 = arith.constant 32 : i32
    %3 = arith.muli %arg0, %c32_i32 : i32
    %c0_i32_1 = arith.constant 0 : i32
    %4 = arith.addi %3, %c0_i32_1 : i32
    %c0_i32_2 = arith.constant 0 : i32
    %5 = arith.addi %4, %c0_i32_2 : i32
    %6 = arith.index_cast %5 : i32 to index
    %7 = memref.load %arg1[%6] : memref<96xi32, #tpu.memory_space<smem>>
    %8 = arith.index_cast %7 : i32 to index
    %c0 = arith.constant 0 : index
    %9 = vector.load %arg23[%8, %c0] : memref<32x128xf32, #tpu.memory_space<vmem>>, vector<1x128xf32>
    %c0_3 = arith.constant 0 : index
    %c0_4 = arith.constant 0 : index
    %10 = vector.load %arg24[%c0_3, %c0_4] : memref<32x128xf32, #tpu.memory_space<vmem>>, vector<1x128xf32>
    tpu.vector_store %arg24[%c0_3, %c0_4], %9 {strides = array<i32>} : memref<32x128xf32, #tpu.memory_space<vmem>>, vector<1x128xf32>,
    %11 = arith.index_cast %5 : i32 to index
    %12 = memref.load %arg2[%11] : memref<96xi32, #tpu.memory_space<smem>>
    %13 = arith.index_cast %12 : i32 to index
    %c0_5 = arith.constant 0 : index
    %14 = vector.load %arg5[%13, %c0_5] : memref<16x128xf32, #tpu.memory_space<vmem>>, vector<1x128xf32>
    %c0_6 = arith.constant 0 : index
    %c0_7 = arith.constant 0 : index
    %15 = vector.load %arg25[%c0_6, %c0_7] : memref<32x128xf32, #tpu.memory_space<vmem>>, vector<1x128xf32>
    tpu.vector_store %arg25[%c0_6, %c0_7], %14 {strides = array<i32>} : memref<32x128xf32, #tpu.memory_space<vmem>>, vector<1x128xf32>,
    %c0_i32_8 = arith.constant 0 : i32
    %16 = arith.addi %3, %c0_i32_8 : i32
    %c1_i32 = arith.constant 1 : i32
    %17 = arith.addi %16, %c1_i32 : i32
    %18 = arith.index_cast %17 : i32 to index
    %19 = memref.load %arg1[%18] : memref<96xi32, #tpu.memory_space<smem>>
    %20 = arith.index_cast %19 : i32 to index
    %c0_9 = arith.constant 0 : index
    %21 = vector.load %arg23[%20, %c0_9] : memref<32x128xf32, #tpu.memory_space<vmem>>, vector<1x128xf32>
    %c8 = arith.constant 8 : index
    %c0_10 = arith.constant 0 : index
    %22 = vector.load %arg24[%c8, %c0_10] : memref<32x128xf32, #tpu.memory_space<vmem>>, vector<1x128xf32>
    tpu.vector_store %arg24[%c8, %c0_10], %21 {strides = array<i32>} : memref<32x128xf32, #tpu.memory_space<vmem>>, vector<1x128xf32>,
    %23 = arith.index_cast %17 : i32 to index
    %24 = memref.load %arg2[%23] : memref<96xi32, #tpu.memory_space<smem>>
    %25 = arith.index_cast %24 : i32 to index
    %c0_11 = arith.constant 0 : index
    %26 = vector.load %arg5[%25, %c0_11] : memref<16x128xf32, #tpu.memory_space<vmem>>, vector<1x128xf32>
    %c8_12 = arith.constant 8 : index
    %c0_13 = arith.constant 0 : index
    %27 = vector.load %arg25[%c8_12, %c0_13] : memref<32x128xf32, #tpu.memory_space<vmem>>, vector<1x128xf32>
    tpu.vector_store %arg25[%c8_12, %c0_13], %26 {strides = array<i32>} : memref<32x128xf32, #tpu.memory_space<vmem>>, vector<1x128xf32>,
    %c0_i32_14 = arith.constant 0 : i32
    %28 = arith.addi %3, %c0_i32_14 : i32
    %c2_i32 = arith.constant 2 : i32
    %29 = arith.addi %28, %c2_i32 : i32
    %30 = arith.index_cast %29 : i32 to index
    %31 = memref.load %arg1[%30] : memref<96xi32, #tpu.memory_space<smem>>
    %32 = arith.index_cast %31 : i32 to index
    %c0_15 = arith.constant 0 : index
    %33 = vector.load %arg23[%32, %c0_15] : memref<32x128xf32, #tpu.memory_space<vmem>>, vector<1x128xf32>
    %c16 = arith.constant 16 : index
    %c0_16 = arith.constant 0 : index
    %34 = vector.load %arg24[%c16, %c0_16] : memref<32x128xf32, #tpu.memory_space<vmem>>, vector<1x128xf32>
    tpu.vector_store %arg24[%c16, %c0_16], %33 {strides = array<i32>} : memref<32x128xf32, #tpu.memory_space<vmem>>, vector<1x128xf32>,
    %35 = arith.index_cast %29 : i32 to index
    %36 = memref.load %arg2[%35] : memref<96xi32, #tpu.memory_space<smem>>
    %37 = arith.index_cast %36 : i32 to index
    %c0_17 = arith.constant 0 : index
    %38 = vector.load %arg5[%37, %c0_17] : memref<16x128xf32, #tpu.memory_space<vmem>>, vector<1x128xf32>
    %c16_18 = arith.constant 16 : index
    %c0_19 = arith.constant 0 : index
    %39 = vector.load %arg25[%c16_18, %c0_19] : memref<32x128xf32, #tpu.memory_space<vmem>>, vector<1x128xf32>
    tpu.vector_store %arg25[%c16_18, %c0_19], %38 {strides = array<i32>} : memref<32x128xf32, #tpu.memory_space<vmem>>, vector<1x128xf32>,
    %c0_i32_20 = arith.constant 0 : i32
    %40 = arith.addi %3, %c0_i32_20 : i32
    %c3_i32 = arith.constant 3 : i32
    %41 = arith.addi %40, %c3_i32 : i32
    %42 = arith.index_cast %41 : i32 to index
    %43 = memref.load %arg1[%42] : memref<96xi32, #tpu.memory_space<smem>>
    %44 = arith.index_cast %43 : i32 to index
    %c0_21 = arith.constant 0 : index
    %45 = vector.load %arg23[%44, %c0_21] : memref<32x128xf32, #tpu.memory_space<vmem>>, vector<1x128xf32>
    %c24 = arith.constant 24 : index
    %c0_22 = arith.constant 0 : index
    %46 = vector.load %arg24[%c24, %c0_22] : memref<32x128xf32, #tpu.memory_space<vmem>>, vector<1x128xf32>
    tpu.vector_store %arg24[%c24, %c0_22], %45 {strides = array<i32>} : memref<32x128xf32, #tpu.memory_space<vmem>>, vector<1x128xf32>,
    %47 = arith.index_cast %41 : i32 to index
    %48 = memref.load %arg2[%47] : memref<96xi32, #tpu.memory_space<smem>>
    %49 = arith.index_cast %48 : i32 to index
    %c0_23 = arith.constant 0 : index
    %50 = vector.load %arg5[%49, %c0_23] : memref<16x128xf32, #tpu.memory_space<vmem>>, vector<1x128xf32>
    %c24_24 = arith.constant 24 : index
    %c0_25 = arith.constant 0 : index
    %51 = vector.load %arg25[%c24_24, %c0_25] : memref<32x128xf32, #tpu.memory_space<vmem>>, vector<1x128xf32>
    tpu.vector_store %arg25[%c24_24, %c0_25], %50 {strides = array<i32>} : memref<32x128xf32, #tpu.memory_space<vmem>>, vector<1x128xf32>,
    %c4_i32 = arith.constant 4 : i32
    %52 = arith.addi %3, %c4_i32 : i32
    %c0_i32_26 = arith.constant 0 : i32
    %53 = arith.addi %52, %c0_i32_26 : i32
    %54 = arith.index_cast %53 : i32 to index
    %55 = memref.load %arg1[%54] : memref<96xi32, #tpu.memory_space<smem>>
    %56 = arith.index_cast %55 : i32 to index
    %c0_27 = arith.constant 0 : index
    %57 = vector.load %arg23[%56, %c0_27] : memref<32x128xf32, #tpu.memory_space<vmem>>, vector<1x128xf32>
    %c1 = arith.constant 1 : index
    %c0_28 = arith.constant 0 : index
    %58 = vector.load %arg24[%c1, %c0_28] : memref<32x128xf32, #tpu.memory_space<vmem>>, vector<1x128xf32>
    tpu.vector_store %arg24[%c1, %c0_28], %57 {strides = array<i32>} : memref<32x128xf32, #tpu.memory_space<vmem>>, vector<1x128xf32>,
    %59 = arith.index_cast %53 : i32 to index
    %60 = memref.load %arg2[%59] : memref<96xi32, #tpu.memory_space<smem>>
    %61 = arith.index_cast %60 : i32 to index
    %c0_29 = arith.constant 0 : index
    %62 = vector.load %arg5[%61, %c0_29] : memref<16x128xf32, #tpu.memory_space<vmem>>, vector<1x128xf32>
    %c1_30 = arith.constant 1 : index
    %c0_31 = arith.constant 0 : index
    %63 = vector.load %arg25[%c1_30, %c0_31] : memref<32x128xf32, #tpu.memory_space<vmem>>, vector<1x128xf32>
    tpu.vector_store %arg25[%c1_30, %c0_31], %62 {strides = array<i32>} : memref<32x128xf32, #tpu.memory_space<vmem>>, vector<1x128xf32>,
    %c4_i32_32 = arith.constant 4 : i32
    %64 = arith.addi %3, %c4_i32_32 : i32
    %c1_i32_33 = arith.constant 1 : i32
    %65 = arith.addi %64, %c1_i32_33 : i32
    %66 = arith.index_cast %65 : i32 to index
    %67 = memref.load %arg1[%66] : memref<96xi32, #tpu.memory_space<smem>>
    %68 = arith.index_cast %67 : i32 to index
    %c0_34 = arith.constant 0 : index
    %69 = vector.load %arg23[%68, %c0_34] : memref<32x128xf32, #tpu.memory_space<vmem>>, vector<1x128xf32>
    %c9 = arith.constant 9 : index
    %c0_35 = arith.constant 0 : index
    %70 = vector.load %arg24[%c9, %c0_35] : memref<32x128xf32, #tpu.memory_space<vmem>>, vector<1x128xf32>
    tpu.vector_store %arg24[%c9, %c0_35], %69 {strides = array<i32>} : memref<32x128xf32, #tpu.memory_space<vmem>>, vector<1x128xf32>,
    %71 = arith.index_cast %65 : i32 to index
    %72 = memref.load %arg2[%71] : memref<96xi32, #tpu.memory_space<smem>>
    %73 = arith.index_cast %72 : i32 to index
    %c0_36 = arith.constant 0 : index
    %74 = vector.load %arg5[%73, %c0_36] : memref<16x128xf32, #tpu.memory_space<vmem>>, vector<1x128xf32>
    %c9_37 = arith.constant 9 : index
    %c0_38 = arith.constant 0 : index
    %75 = vector.load %arg25[%c9_37, %c0_38] : memref<32x128xf32, #tpu.memory_space<vmem>>, vector<1x128xf32>
    tpu.vector_store %arg25[%c9_37, %c0_38], %74 {strides = array<i32>} : memref<32x128xf32, #tpu.memory_space<vmem>>, vector<1x128xf32>,
    %c4_i32_39 = arith.constant 4 : i32
    %76 = arith.addi %3, %c4_i32_39 : i32
    %c2_i32_40 = arith.constant 2 : i32
    %77 = arith.addi %76, %c2_i32_40 : i32
    %78 = arith.index_cast %77 : i32 to index
    %79 = memref.load %arg1[%78] : memref<96xi32, #tpu.memory_space<smem>>
    %80 = arith.index_cast %79 : i32 to index
    %c0_41 = arith.constant 0 : index
    %81 = vector.load %arg23[%80, %c0_41] : memref<32x128xf32, #tpu.memory_space<vmem>>, vector<1x128xf32>
    %c17 = arith.constant 17 : index
    %c0_42 = arith.constant 0 : index
    %82 = vector.load %arg24[%c17, %c0_42] : memref<32x128xf32, #tpu.memory_space<vmem>>, vector<1x128xf32>
    tpu.vector_store %arg24[%c17, %c0_42], %81 {strides = array<i32>} : memref<32x128xf32, #tpu.memory_space<vmem>>, vector<1x128xf32>,
    %83 = arith.index_cast %77 : i32 to index
    %84 = memref.load %arg2[%83] : memref<96xi32, #tpu.memory_space<smem>>
    %85 = arith.index_cast %84 : i32 to index
    %c0_43 = arith.constant 0 : index
    %86 = vector.load %arg5[%85, %c0_43] : memref<16x128xf32, #tpu.memory_space<vmem>>, vector<1x128xf32>
    %c17_44 = arith.constant 17 : index
    %c0_45 = arith.constant 0 : index
    %87 = vector.load %arg25[%c17_44, %c0_45] : memref<32x128xf32, #tpu.memory_space<vmem>>, vector<1x128xf32>
    tpu.vector_store %arg25[%c17_44, %c0_45], %86 {strides = array<i32>} : memref<32x128xf32, #tpu.memory_space<vmem>>, vector<1x128xf32>,
    %c4_i32_46 = arith.constant 4 : i32
    %88 = arith.addi %3, %c4_i32_46 : i32
    %c3_i32_47 = arith.constant 3 : i32
    %89 = arith.addi %88, %c3_i32_47 : i32
    %90 = arith.index_cast %89 : i32 to index
    %91 = memref.load %arg1[%90] : memref<96xi32, #tpu.memory_space<smem>>
    %92 = arith.index_cast %91 : i32 to index
    %c0_48 = arith.constant 0 : index
    %93 = vector.load %arg23[%92, %c0_48] : memref<32x128xf32, #tpu.memory_space<vmem>>, vector<1x128xf32>
    %c25 = arith.constant 25 : index
    %c0_49 = arith.constant 0 : index
    %94 = vector.load %arg24[%c25, %c0_49] : memref<32x128xf32, #tpu.memory_space<vmem>>, vector<1x128xf32>
    tpu.vector_store %arg24[%c25, %c0_49], %93 {strides = array<i32>} : memref<32x128xf32, #tpu.memory_space<vmem>>, vector<1x128xf32>,
    %95 = arith.index_cast %89 : i32 to index
    %96 = memref.load %arg2[%95] : memref<96xi32, #tpu.memory_space<smem>>
    %97 = arith.index_cast %96 : i32 to index
    %c0_50 = arith.constant 0 : index
    %98 = vector.load %arg5[%97, %c0_50] : memref<16x128xf32, #tpu.memory_space<vmem>>, vector<1x128xf32>
    %c25_51 = arith.constant 25 : index
    %c0_52 = arith.constant 0 : index
    %99 = vector.load %arg25[%c25_51, %c0_52] : memref<32x128xf32, #tpu.memory_space<vmem>>, vector<1x128xf32>
    tpu.vector_store %arg25[%c25_51, %c0_52], %98 {strides = array<i32>} : memref<32x128xf32, #tpu.memory_space<vmem>>, vector<1x128xf32>,
    %c8_i32 = arith.constant 8 : i32
    %100 = arith.addi %3, %c8_i32 : i32
    %c0_i32_53 = arith.constant 0 : i32
    %101 = arith.addi %100, %c0_i32_53 : i32
    %102 = arith.index_cast %101 : i32 to index
    %103 = memref.load %arg1[%102] : memref<96xi32, #tpu.memory_space<smem>>
    %104 = arith.index_cast %103 : i32 to index
    %c0_54 = arith.constant 0 : index
    %105 = vector.load %arg23[%104, %c0_54] : memref<32x128xf32, #tpu.memory_space<vmem>>, vector<1x128xf32>
    %c2 = arith.constant 2 : index
    %c0_55 = arith.constant 0 : index
    %106 = vector.load %arg24[%c2, %c0_55] : memref<32x128xf32, #tpu.memory_space<vmem>>, vector<1x128xf32>
    tpu.vector_store %arg24[%c2, %c0_55], %105 {strides = array<i32>} : memref<32x128xf32, #tpu.memory_space<vmem>>, vector<1x128xf32>,
    %107 = arith.index_cast %101 : i32 to index
    %108 = memref.load %arg2[%107] : memref<96xi32, #tpu.memory_space<smem>>
    %109 = arith.index_cast %108 : i32 to index
    %c0_56 = arith.constant 0 : index
    %110 = vector.load %arg5[%109, %c0_56] : memref<16x128xf32, #tpu.memory_space<vmem>>, vector<1x128xf32>
    %c2_57 = arith.constant 2 : index
    %c0_58 = arith.constant 0 : index
    %111 = vector.load %arg25[%c2_57, %c0_58] : memref<32x128xf32, #tpu.memory_space<vmem>>, vector<1x128xf32>
    tpu.vector_store %arg25[%c2_57, %c0_58], %110 {strides = array<i32>} : memref<32x128xf32, #tpu.memory_space<vmem>>, vector<1x128xf32>,
    %c8_i32_59 = arith.constant 8 : i32
    %112 = arith.addi %3, %c8_i32_59 : i32
    %c1_i32_60 = arith.constant 1 : i32
    %113 = arith.addi %112, %c1_i32_60 : i32
    %114 = arith.index_cast %113 : i32 to index
    %115 = memref.load %arg1[%114] : memref<96xi32, #tpu.memory_space<smem>>
    %116 = arith.index_cast %115 : i32 to index
    %c0_61 = arith.constant 0 : index
    %117 = vector.load %arg23[%116, %c0_61] : memref<32x128xf32, #tpu.memory_space<vmem>>, vector<1x128xf32>
    %c10 = arith.constant 10 : index
    %c0_62 = arith.constant 0 : index
    %118 = vector.load %arg24[%c10, %c0_62] : memref<32x128xf32, #tpu.memory_space<vmem>>, vector<1x128xf32>
    tpu.vector_store %arg24[%c10, %c0_62], %117 {strides = array<i32>} : memref<32x128xf32, #tpu.memory_space<vmem>>, vector<1x128xf32>,
    %119 = arith.index_cast %113 : i32 to index
    %120 = memref.load %arg2[%119] : memref<96xi32, #tpu.memory_space<smem>>
    %121 = arith.index_cast %120 : i32 to index
    %c0_63 = arith.constant 0 : index
    %122 = vector.load %arg5[%121, %c0_63] : memref<16x128xf32, #tpu.memory_space<vmem>>, vector<1x128xf32>
    %c10_64 = arith.constant 10 : index
    %c0_65 = arith.constant 0 : index
    %123 = vector.load %arg25[%c10_64, %c0_65] : memref<32x128xf32, #tpu.memory_space<vmem>>, vector<1x128xf32>
    tpu.vector_store %arg25[%c10_64, %c0_65], %122 {strides = array<i32>} : memref<32x128xf32, #tpu.memory_space<vmem>>, vector<1x128xf32>,
    %c8_i32_66 = arith.constant 8 : i32
    %124 = arith.addi %3, %c8_i32_66 : i32
    %c2_i32_67 = arith.constant 2 : i32
    %125 = arith.addi %124, %c2_i32_67 : i32
    %126 = arith.index_cast %125 : i32 to index
    %127 = memref.load %arg1[%126] : memref<96xi32, #tpu.memory_space<smem>>
    %128 = arith.index_cast %127 : i32 to index
    %c0_68 = arith.constant 0 : index
    %129 = vector.load %arg23[%128, %c0_68] : memref<32x128xf32, #tpu.memory_space<vmem>>, vector<1x128xf32>
    %c18 = arith.constant 18 : index
    %c0_69 = arith.constant 0 : index
    %130 = vector.load %arg24[%c18, %c0_69] : memref<32x128xf32, #tpu.memory_space<vmem>>, vector<1x128xf32>
    tpu.vector_store %arg24[%c18, %c0_69], %129 {strides = array<i32>} : memref<32x128xf32, #tpu.memory_space<vmem>>, vector<1x128xf32>,
    %131 = arith.index_cast %125 : i32 to index
    %132 = memref.load %arg2[%131] : memref<96xi32, #tpu.memory_space<smem>>
    %133 = arith.index_cast %132 : i32 to index
    %c0_70 = arith.constant 0 : index
    %134 = vector.load %arg5[%133, %c0_70] : memref<16x128xf32, #tpu.memory_space<vmem>>, vector<1x128xf32>
    %c18_71 = arith.constant 18 : index
    %c0_72 = arith.constant 0 : index
    %135 = vector.load %arg25[%c18_71, %c0_72] : memref<32x128xf32, #tpu.memory_space<vmem>>, vector<1x128xf32>
    tpu.vector_store %arg25[%c18_71, %c0_72], %134 {strides = array<i32>} : memref<32x128xf32, #tpu.memory_space<vmem>>, vector<1x128xf32>,
    %c8_i32_73 = arith.constant 8 : i32
    %136 = arith.addi %3, %c8_i32_73 : i32
    %c3_i32_74 = arith.constant 3 : i32
    %137 = arith.addi %136, %c3_i32_74 : i32
    %138 = arith.index_cast %137 : i32 to index
    %139 = memref.load %arg1[%138] : memref<96xi32, #tpu.memory_space<smem>>
    %140 = arith.index_cast %139 : i32 to index
    %c0_75 = arith.constant 0 : index
    %141 = vector.load %arg23[%140, %c0_75] : memref<32x128xf32, #tpu.memory_space<vmem>>, vector<1x128xf32>
    %c26 = arith.constant 26 : index
    %c0_76 = arith.constant 0 : index
    %142 = vector.load %arg24[%c26, %c0_76] : memref<32x128xf32, #tpu.memory_space<vmem>>, vector<1x128xf32>
    tpu.vector_store %arg24[%c26, %c0_76], %141 {strides = array<i32>} : memref<32x128xf32, #tpu.memory_space<vmem>>, vector<1x128xf32>,
    %143 = arith.index_cast %137 : i32 to index
    %144 = memref.load %arg2[%143] : memref<96xi32, #tpu.memory_space<smem>>
    %145 = arith.index_cast %144 : i32 to index
    %c0_77 = arith.constant 0 : index
    %146 = vector.load %arg5[%145, %c0_77] : memref<16x128xf32, #tpu.memory_space<vmem>>, vector<1x128xf32>
    %c26_78 = arith.constant 26 : index
    %c0_79 = arith.constant 0 : index
    %147 = vector.load %arg25[%c26_78, %c0_79] : memref<32x128xf32, #tpu.memory_space<vmem>>, vector<1x128xf32>
    tpu.vector_store %arg25[%c26_78, %c0_79], %146 {strides = array<i32>} : memref<32x128xf32, #tpu.memory_space<vmem>>, vector<1x128xf32>,
    %c12_i32 = arith.constant 12 : i32
    %148 = arith.addi %3, %c12_i32 : i32
    %c0_i32_80 = arith.constant 0 : i32
    %149 = arith.addi %148, %c0_i32_80 : i32
    %150 = arith.index_cast %149 : i32 to index
    %151 = memref.load %arg1[%150] : memref<96xi32, #tpu.memory_space<smem>>
    %152 = arith.index_cast %151 : i32 to index
    %c0_81 = arith.constant 0 : index
    %153 = vector.load %arg23[%152, %c0_81] : memref<32x128xf32, #tpu.memory_space<vmem>>, vector<1x128xf32>
    %c3 = arith.constant 3 : index
    %c0_82 = arith.constant 0 : index
    %154 = vector.load %arg24[%c3, %c0_82] : memref<32x128xf32, #tpu.memory_space<vmem>>, vector<1x128xf32>
    tpu.vector_store %arg24[%c3, %c0_82], %153 {strides = array<i32>} : memref<32x128xf32, #tpu.memory_space<vmem>>, vector<1x128xf32>,
    %155 = arith.index_cast %149 : i32 to index
    %156 = memref.load %arg2[%155] : memref<96xi32, #tpu.memory_space<smem>>
    %157 = arith.index_cast %156 : i32 to index
    %c0_83 = arith.constant 0 : index
    %158 = vector.load %arg5[%157, %c0_83] : memref<16x128xf32, #tpu.memory_space<vmem>>, vector<1x128xf32>
    %c3_84 = arith.constant 3 : index
    %c0_85 = arith.constant 0 : index
    %159 = vector.load %arg25[%c3_84, %c0_85] : memref<32x128xf32, #tpu.memory_space<vmem>>, vector<1x128xf32>
    tpu.vector_store %arg25[%c3_84, %c0_85], %158 {strides = array<i32>} : memref<32x128xf32, #tpu.memory_space<vmem>>, vector<1x128xf32>,
    %c12_i32_86 = arith.constant 12 : i32
    %160 = arith.addi %3, %c12_i32_86 : i32
    %c1_i32_87 = arith.constant 1 : i32
    %161 = arith.addi %160, %c1_i32_87 : i32
    %162 = arith.index_cast %161 : i32 to index
    %163 = memref.load %arg1[%162] : memref<96xi32, #tpu.memory_space<smem>>
    %164 = arith.index_cast %163 : i32 to index
    %c0_88 = arith.constant 0 : index
    %165 = vector.load %arg23[%164, %c0_88] : memref<32x128xf32, #tpu.memory_space<vmem>>, vector<1x128xf32>
    %c11 = arith.constant 11 : index
    %c0_89 = arith.constant 0 : index
    %166 = vector.load %arg24[%c11, %c0_89] : memref<32x128xf32, #tpu.memory_space<vmem>>, vector<1x128xf32>
    tpu.vector_store %arg24[%c11, %c0_89], %165 {strides = array<i32>} : memref<32x128xf32, #tpu.memory_space<vmem>>, vector<1x128xf32>,
    %167 = arith.index_cast %161 : i32 to index
    %168 = memref.load %arg2[%167] : memref<96xi32, #tpu.memory_space<smem>>
    %169 = arith.index_cast %168 : i32 to index
    %c0_90 = arith.constant 0 : index
    %170 = vector.load %arg5[%169, %c0_90] : memref<16x128xf32, #tpu.memory_space<vmem>>, vector<1x128xf32>
    %c11_91 = arith.constant 11 : index
    %c0_92 = arith.constant 0 : index
    %171 = vector.load %arg25[%c11_91, %c0_92] : memref<32x128xf32, #tpu.memory_space<vmem>>, vector<1x128xf32>
    tpu.vector_store %arg25[%c11_91, %c0_92], %170 {strides = array<i32>} : memref<32x128xf32, #tpu.memory_space<vmem>>, vector<1x128xf32>,
    %c12_i32_93 = arith.constant 12 : i32
    %172 = arith.addi %3, %c12_i32_93 : i32
    %c2_i32_94 = arith.constant 2 : i32
    %173 = arith.addi %172, %c2_i32_94 : i32
    %174 = arith.index_cast %173 : i32 to index
    %175 = memref.load %arg1[%174] : memref<96xi32, #tpu.memory_space<smem>>
    %176 = arith.index_cast %175 : i32 to index
    %c0_95 = arith.constant 0 : index
    %177 = vector.load %arg23[%176, %c0_95] : memref<32x128xf32, #tpu.memory_space<vmem>>, vector<1x128xf32>
    %c19 = arith.constant 19 : index
    %c0_96 = arith.constant 0 : index
    %178 = vector.load %arg24[%c19, %c0_96] : memref<32x128xf32, #tpu.memory_space<vmem>>, vector<1x128xf32>
    tpu.vector_store %arg24[%c19, %c0_96], %177 {strides = array<i32>} : memref<32x128xf32, #tpu.memory_space<vmem>>, vector<1x128xf32>,
    %179 = arith.index_cast %173 : i32 to index
    %180 = memref.load %arg2[%179] : memref<96xi32, #tpu.memory_space<smem>>
    %181 = arith.index_cast %180 : i32 to index
    %c0_97 = arith.constant 0 : index
    %182 = vector.load %arg5[%181, %c0_97] : memref<16x128xf32, #tpu.memory_space<vmem>>, vector<1x128xf32>
    %c19_98 = arith.constant 19 : index
    %c0_99 = arith.constant 0 : index
    %183 = vector.load %arg25[%c19_98, %c0_99] : memref<32x128xf32, #tpu.memory_space<vmem>>, vector<1x128xf32>
    tpu.vector_store %arg25[%c19_98, %c0_99], %182 {strides = array<i32>} : memref<32x128xf32, #tpu.memory_space<vmem>>, vector<1x128xf32>,
    %c12_i32_100 = arith.constant 12 : i32
    %184 = arith.addi %3, %c12_i32_100 : i32
    %c3_i32_101 = arith.constant 3 : i32
    %185 = arith.addi %184, %c3_i32_101 : i32
    %186 = arith.index_cast %185 : i32 to index
    %187 = memref.load %arg1[%186] : memref<96xi32, #tpu.memory_space<smem>>
    %188 = arith.index_cast %187 : i32 to index
    %c0_102 = arith.constant 0 : index
    %189 = vector.load %arg23[%188, %c0_102] : memref<32x128xf32, #tpu.memory_space<vmem>>, vector<1x128xf32>
    %c27 = arith.constant 27 : index
    %c0_103 = arith.constant 0 : index
    %190 = vector.load %arg24[%c27, %c0_103] : memref<32x128xf32, #tpu.memory_space<vmem>>, vector<1x128xf32>
    tpu.vector_store %arg24[%c27, %c0_103], %189 {strides = array<i32>} : memref<32x128xf32, #tpu.memory_space<vmem>>, vector<1x128xf32>,
    %191 = arith.index_cast %185 : i32 to index
    %192 = memref.load %arg2[%191] : memref<96xi32, #tpu.memory_space<smem>>
    %193 = arith.index_cast %192 : i32 to index
    %c0_104 = arith.constant 0 : index
    %194 = vector.load %arg5[%193, %c0_104] : memref<16x128xf32, #tpu.memory_space<vmem>>, vector<1x128xf32>
    %c27_105 = arith.constant 27 : index
    %c0_106 = arith.constant 0 : index
    %195 = vector.load %arg25[%c27_105, %c0_106] : memref<32x128xf32, #tpu.memory_space<vmem>>, vector<1x128xf32>
    tpu.vector_store %arg25[%c27_105, %c0_106], %194 {strides = array<i32>} : memref<32x128xf32, #tpu.memory_space<vmem>>, vector<1x128xf32>,
    %c16_i32 = arith.constant 16 : i32
    %196 = arith.addi %3, %c16_i32 : i32
    %c0_i32_107 = arith.constant 0 : i32
    %197 = arith.addi %196, %c0_i32_107 : i32
    %198 = arith.index_cast %197 : i32 to index
    %199 = memref.load %arg1[%198] : memref<96xi32, #tpu.memory_space<smem>>
    %200 = arith.index_cast %199 : i32 to index
    %c0_108 = arith.constant 0 : index
    %201 = vector.load %arg23[%200, %c0_108] : memref<32x128xf32, #tpu.memory_space<vmem>>, vector<1x128xf32>
    %c4 = arith.constant 4 : index
    %c0_109 = arith.constant 0 : index
    %202 = vector.load %arg24[%c4, %c0_109] : memref<32x128xf32, #tpu.memory_space<vmem>>, vector<1x128xf32>
    tpu.vector_store %arg24[%c4, %c0_109], %201 {strides = array<i32>} : memref<32x128xf32, #tpu.memory_space<vmem>>, vector<1x128xf32>,
    %203 = arith.index_cast %197 : i32 to index
    %204 = memref.load %arg2[%203] : memref<96xi32, #tpu.memory_space<smem>>
    %205 = arith.index_cast %204 : i32 to index
    %c0_110 = arith.constant 0 : index
    %206 = vector.load %arg5[%205, %c0_110] : memref<16x128xf32, #tpu.memory_space<vmem>>, vector<1x128xf32>
    %c4_111 = arith.constant 4 : index
    %c0_112 = arith.constant 0 : index
    %207 = vector.load %arg25[%c4_111, %c0_112] : memref<32x128xf32, #tpu.memory_space<vmem>>, vector<1x128xf32>
    tpu.vector_store %arg25[%c4_111, %c0_112], %206 {strides = array<i32>} : memref<32x128xf32, #tpu.memory_space<vmem>>, vector<1x128xf32>,
    %c16_i32_113 = arith.constant 16 : i32
    %208 = arith.addi %3, %c16_i32_113 : i32
    %c1_i32_114 = arith.constant 1 : i32
    %209 = arith.addi %208, %c1_i32_114 : i32
    %210 = arith.index_cast %209 : i32 to index
    %211 = memref.load %arg1[%210] : memref<96xi32, #tpu.memory_space<smem>>
    %212 = arith.index_cast %211 : i32 to index
    %c0_115 = arith.constant 0 : index
    %213 = vector.load %arg23[%212, %c0_115] : memref<32x128xf32, #tpu.memory_space<vmem>>, vector<1x128xf32>
    %c12 = arith.constant 12 : index
    %c0_116 = arith.constant 0 : index
    %214 = vector.load %arg24[%c12, %c0_116] : memref<32x128xf32, #tpu.memory_space<vmem>>, vector<1x128xf32>
    tpu.vector_store %arg24[%c12, %c0_116], %213 {strides = array<i32>} : memref<32x128xf32, #tpu.memory_space<vmem>>, vector<1x128xf32>,
    %215 = arith.index_cast %209 : i32 to index
    %216 = memref.load %arg2[%215] : memref<96xi32, #tpu.memory_space<smem>>
    %217 = arith.index_cast %216 : i32 to index
    %c0_117 = arith.constant 0 : index
    %218 = vector.load %arg5[%217, %c0_117] : memref<16x128xf32, #tpu.memory_space<vmem>>, vector<1x128xf32>
    %c12_118 = arith.constant 12 : index
    %c0_119 = arith.constant 0 : index
    %219 = vector.load %arg25[%c12_118, %c0_119] : memref<32x128xf32, #tpu.memory_space<vmem>>, vector<1x128xf32>
    tpu.vector_store %arg25[%c12_118, %c0_119], %218 {strides = array<i32>} : memref<32x128xf32, #tpu.memory_space<vmem>>, vector<1x128xf32>,
    %c16_i32_120 = arith.constant 16 : i32
    %220 = arith.addi %3, %c16_i32_120 : i32
    %c2_i32_121 = arith.constant 2 : i32
    %221 = arith.addi %220, %c2_i32_121 : i32
    %222 = arith.index_cast %221 : i32 to index
    %223 = memref.load %arg1[%222] : memref<96xi32, #tpu.memory_space<smem>>
    %224 = arith.index_cast %223 : i32 to index
    %c0_122 = arith.constant 0 : index
    %225 = vector.load %arg23[%224, %c0_122] : memref<32x128xf32, #tpu.memory_space<vmem>>, vector<1x128xf32>
    %c20 = arith.constant 20 : index
    %c0_123 = arith.constant 0 : index
    %226 = vector.load %arg24[%c20, %c0_123] : memref<32x128xf32, #tpu.memory_space<vmem>>, vector<1x128xf32>
    tpu.vector_store %arg24[%c20, %c0_123], %225 {strides = array<i32>} : memref<32x128xf32, #tpu.memory_space<vmem>>, vector<1x128xf32>,
    %227 = arith.index_cast %221 : i32 to index
    %228 = memref.load %arg2[%227] : memref<96xi32, #tpu.memory_space<smem>>
    %229 = arith.index_cast %228 : i32 to index
    %c0_124 = arith.constant 0 : index
    %230 = vector.load %arg5[%229, %c0_124] : memref<16x128xf32, #tpu.memory_space<vmem>>, vector<1x128xf32>
    %c20_125 = arith.constant 20 : index
    %c0_126 = arith.constant 0 : index
    %231 = vector.load %arg25[%c20_125, %c0_126] : memref<32x128xf32, #tpu.memory_space<vmem>>, vector<1x128xf32>
    tpu.vector_store %arg25[%c20_125, %c0_126], %230 {strides = array<i32>} : memref<32x128xf32, #tpu.memory_space<vmem>>, vector<1x128xf32>,
    %c16_i32_127 = arith.constant 16 : i32
    %232 = arith.addi %3, %c16_i32_127 : i32
    %c3_i32_128 = arith.constant 3 : i32
    %233 = arith.addi %232, %c3_i32_128 : i32
    %234 = arith.index_cast %233 : i32 to index
    %235 = memref.load %arg1[%234] : memref<96xi32, #tpu.memory_space<smem>>
    %236 = arith.index_cast %235 : i32 to index
    %c0_129 = arith.constant 0 : index
    %237 = vector.load %arg23[%236, %c0_129] : memref<32x128xf32, #tpu.memory_space<vmem>>, vector<1x128xf32>
    %c28 = arith.constant 28 : index
    %c0_130 = arith.constant 0 : index
    %238 = vector.load %arg24[%c28, %c0_130] : memref<32x128xf32, #tpu.memory_space<vmem>>, vector<1x128xf32>
    tpu.vector_store %arg24[%c28, %c0_130], %237 {strides = array<i32>} : memref<32x128xf32, #tpu.memory_space<vmem>>, vector<1x128xf32>,
    %239 = arith.index_cast %233 : i32 to index
    %240 = memref.load %arg2[%239] : memref<96xi32, #tpu.memory_space<smem>>
    %241 = arith.index_cast %240 : i32 to index
    %c0_131 = arith.constant 0 : index
    %242 = vector.load %arg5[%241, %c0_131] : memref<16x128xf32, #tpu.memory_space<vmem>>, vector<1x128xf32>
    %c28_132 = arith.constant 28 : index
    %c0_133 = arith.constant 0 : index
    %243 = vector.load %arg25[%c28_132, %c0_133] : memref<32x128xf32, #tpu.memory_space<vmem>>, vector<1x128xf32>
    tpu.vector_store %arg25[%c28_132, %c0_133], %242 {strides = array<i32>} : memref<32x128xf32, #tpu.memory_space<vmem>>, vector<1x128xf32>,
    %c20_i32 = arith.constant 20 : i32
    %244 = arith.addi %3, %c20_i32 : i32
    %c0_i32_134 = arith.constant 0 : i32
    %245 = arith.addi %244, %c0_i32_134 : i32
    %246 = arith.index_cast %245 : i32 to index
    %247 = memref.load %arg1[%246] : memref<96xi32, #tpu.memory_space<smem>>
    %248 = arith.index_cast %247 : i32 to index
    %c0_135 = arith.constant 0 : index
    %249 = vector.load %arg23[%248, %c0_135] : memref<32x128xf32, #tpu.memory_space<vmem>>, vector<1x128xf32>
    %c5 = arith.constant 5 : index
    %c0_136 = arith.constant 0 : index
    %250 = vector.load %arg24[%c5, %c0_136] : memref<32x128xf32, #tpu.memory_space<vmem>>, vector<1x128xf32>
    tpu.vector_store %arg24[%c5, %c0_136], %249 {strides = array<i32>} : memref<32x128xf32, #tpu.memory_space<vmem>>, vector<1x128xf32>,
    %251 = arith.index_cast %245 : i32 to index
    %252 = memref.load %arg2[%251] : memref<96xi32, #tpu.memory_space<smem>>
    %253 = arith.index_cast %252 : i32 to index
    %c0_137 = arith.constant 0 : index
    %254 = vector.load %arg5[%253, %c0_137] : memref<16x128xf32, #tpu.memory_space<vmem>>, vector<1x128xf32>
    %c5_138 = arith.constant 5 : index
    %c0_139 = arith.constant 0 : index
    %255 = vector.load %arg25[%c5_138, %c0_139] : memref<32x128xf32, #tpu.memory_space<vmem>>, vector<1x128xf32>
    tpu.vector_store %arg25[%c5_138, %c0_139], %254 {strides = array<i32>} : memref<32x128xf32, #tpu.memory_space<vmem>>, vector<1x128xf32>,
    %c20_i32_140 = arith.constant 20 : i32
    %256 = arith.addi %3, %c20_i32_140 : i32
    %c1_i32_141 = arith.constant 1 : i32
    %257 = arith.addi %256, %c1_i32_141 : i32
    %258 = arith.index_cast %257 : i32 to index
    %259 = memref.load %arg1[%258] : memref<96xi32, #tpu.memory_space<smem>>
    %260 = arith.index_cast %259 : i32 to index
    %c0_142 = arith.constant 0 : index
    %261 = vector.load %arg23[%260, %c0_142] : memref<32x128xf32, #tpu.memory_space<vmem>>, vector<1x128xf32>
    %c13 = arith.constant 13 : index
    %c0_143 = arith.constant 0 : index
    %262 = vector.load %arg24[%c13, %c0_143] : memref<32x128xf32, #tpu.memory_space<vmem>>, vector<1x128xf32>
    tpu.vector_store %arg24[%c13, %c0_143], %261 {strides = array<i32>} : memref<32x128xf32, #tpu.memory_space<vmem>>, vector<1x128xf32>,
    %263 = arith.index_cast %257 : i32 to index
    %264 = memref.load %arg2[%263] : memref<96xi32, #tpu.memory_space<smem>>
    %265 = arith.index_cast %264 : i32 to index
    %c0_144 = arith.constant 0 : index
    %266 = vector.load %arg5[%265, %c0_144] : memref<16x128xf32, #tpu.memory_space<vmem>>, vector<1x128xf32>
    %c13_145 = arith.constant 13 : index
    %c0_146 = arith.constant 0 : index
    %267 = vector.load %arg25[%c13_145, %c0_146] : memref<32x128xf32, #tpu.memory_space<vmem>>, vector<1x128xf32>
    tpu.vector_store %arg25[%c13_145, %c0_146], %266 {strides = array<i32>} : memref<32x128xf32, #tpu.memory_space<vmem>>, vector<1x128xf32>,
    %c20_i32_147 = arith.constant 20 : i32
    %268 = arith.addi %3, %c20_i32_147 : i32
    %c2_i32_148 = arith.constant 2 : i32
    %269 = arith.addi %268, %c2_i32_148 : i32
    %270 = arith.index_cast %269 : i32 to index
    %271 = memref.load %arg1[%270] : memref<96xi32, #tpu.memory_space<smem>>
    %272 = arith.index_cast %271 : i32 to index
    %c0_149 = arith.constant 0 : index
    %273 = vector.load %arg23[%272, %c0_149] : memref<32x128xf32, #tpu.memory_space<vmem>>, vector<1x128xf32>
    %c21 = arith.constant 21 : index
    %c0_150 = arith.constant 0 : index
    %274 = vector.load %arg24[%c21, %c0_150] : memref<32x128xf32, #tpu.memory_space<vmem>>, vector<1x128xf32>
    tpu.vector_store %arg24[%c21, %c0_150], %273 {strides = array<i32>} : memref<32x128xf32, #tpu.memory_space<vmem>>, vector<1x128xf32>,
    %275 = arith.index_cast %269 : i32 to index
    %276 = memref.load %arg2[%275] : memref<96xi32, #tpu.memory_space<smem>>
    %277 = arith.index_cast %276 : i32 to index
    %c0_151 = arith.constant 0 : index
    %278 = vector.load %arg5[%277, %c0_151] : memref<16x128xf32, #tpu.memory_space<vmem>>, vector<1x128xf32>
    %c21_152 = arith.constant 21 : index
    %c0_153 = arith.constant 0 : index
    %279 = vector.load %arg25[%c21_152, %c0_153] : memref<32x128xf32, #tpu.memory_space<vmem>>, vector<1x128xf32>
    tpu.vector_store %arg25[%c21_152, %c0_153], %278 {strides = array<i32>} : memref<32x128xf32, #tpu.memory_space<vmem>>, vector<1x128xf32>,
    %c20_i32_154 = arith.constant 20 : i32
    %280 = arith.addi %3, %c20_i32_154 : i32
    %c3_i32_155 = arith.constant 3 : i32
    %281 = arith.addi %280, %c3_i32_155 : i32
    %282 = arith.index_cast %281 : i32 to index
    %283 = memref.load %arg1[%282] : memref<96xi32, #tpu.memory_space<smem>>
    %284 = arith.index_cast %283 : i32 to index
    %c0_156 = arith.constant 0 : index
    %285 = vector.load %arg23[%284, %c0_156] : memref<32x128xf32, #tpu.memory_space<vmem>>, vector<1x128xf32>
    %c29 = arith.constant 29 : index
    %c0_157 = arith.constant 0 : index
    %286 = vector.load %arg24[%c29, %c0_157] : memref<32x128xf32, #tpu.memory_space<vmem>>, vector<1x128xf32>
    tpu.vector_store %arg24[%c29, %c0_157], %285 {strides = array<i32>} : memref<32x128xf32, #tpu.memory_space<vmem>>, vector<1x128xf32>,
    %287 = arith.index_cast %281 : i32 to index
    %288 = memref.load %arg2[%287] : memref<96xi32, #tpu.memory_space<smem>>
    %289 = arith.index_cast %288 : i32 to index
    %c0_158 = arith.constant 0 : index
    %290 = vector.load %arg5[%289, %c0_158] : memref<16x128xf32, #tpu.memory_space<vmem>>, vector<1x128xf32>
    %c29_159 = arith.constant 29 : index
    %c0_160 = arith.constant 0 : index
    %291 = vector.load %arg25[%c29_159, %c0_160] : memref<32x128xf32, #tpu.memory_space<vmem>>, vector<1x128xf32>
    tpu.vector_store %arg25[%c29_159, %c0_160], %290 {strides = array<i32>} : memref<32x128xf32, #tpu.memory_space<vmem>>, vector<1x128xf32>,
    %c24_i32 = arith.constant 24 : i32
    %292 = arith.addi %3, %c24_i32 : i32
    %c0_i32_161 = arith.constant 0 : i32
    %293 = arith.addi %292, %c0_i32_161 : i32
    %294 = arith.index_cast %293 : i32 to index
    %295 = memref.load %arg1[%294] : memref<96xi32, #tpu.memory_space<smem>>
    %296 = arith.index_cast %295 : i32 to index
    %c0_162 = arith.constant 0 : index
    %297 = vector.load %arg23[%296, %c0_162] : memref<32x128xf32, #tpu.memory_space<vmem>>, vector<1x128xf32>
    %c6 = arith.constant 6 : index
    %c0_163 = arith.constant 0 : index
    %298 = vector.load %arg24[%c6, %c0_163] : memref<32x128xf32, #tpu.memory_space<vmem>>, vector<1x128xf32>
    tpu.vector_store %arg24[%c6, %c0_163], %297 {strides = array<i32>} : memref<32x128xf32, #tpu.memory_space<vmem>>, vector<1x128xf32>,
    %299 = arith.index_cast %293 : i32 to index
    %300 = memref.load %arg2[%299] : memref<96xi32, #tpu.memory_space<smem>>
    %301 = arith.index_cast %300 : i32 to index
    %c0_164 = arith.constant 0 : index
    %302 = vector.load %arg5[%301, %c0_164] : memref<16x128xf32, #tpu.memory_space<vmem>>, vector<1x128xf32>
    %c6_165 = arith.constant 6 : index
    %c0_166 = arith.constant 0 : index
    %303 = vector.load %arg25[%c6_165, %c0_166] : memref<32x128xf32, #tpu.memory_space<vmem>>, vector<1x128xf32>
    tpu.vector_store %arg25[%c6_165, %c0_166], %302 {strides = array<i32>} : memref<32x128xf32, #tpu.memory_space<vmem>>, vector<1x128xf32>,
    %c24_i32_167 = arith.constant 24 : i32
    %304 = arith.addi %3, %c24_i32_167 : i32
    %c1_i32_168 = arith.constant 1 : i32
    %305 = arith.addi %304, %c1_i32_168 : i32
    %306 = arith.index_cast %305 : i32 to index
    %307 = memref.load %arg1[%306] : memref<96xi32, #tpu.memory_space<smem>>
    %308 = arith.index_cast %307 : i32 to index
    %c0_169 = arith.constant 0 : index
    %309 = vector.load %arg23[%308, %c0_169] : memref<32x128xf32, #tpu.memory_space<vmem>>, vector<1x128xf32>
    %c14 = arith.constant 14 : index
    %c0_170 = arith.constant 0 : index
    %310 = vector.load %arg24[%c14, %c0_170] : memref<32x128xf32, #tpu.memory_space<vmem>>, vector<1x128xf32>
    tpu.vector_store %arg24[%c14, %c0_170], %309 {strides = array<i32>} : memref<32x128xf32, #tpu.memory_space<vmem>>, vector<1x128xf32>,
    %311 = arith.index_cast %305 : i32 to index
    %312 = memref.load %arg2[%311] : memref<96xi32, #tpu.memory_space<smem>>
    %313 = arith.index_cast %312 : i32 to index
    %c0_171 = arith.constant 0 : index
    %314 = vector.load %arg5[%313, %c0_171] : memref<16x128xf32, #tpu.memory_space<vmem>>, vector<1x128xf32>
    %c14_172 = arith.constant 14 : index
    %c0_173 = arith.constant 0 : index
    %315 = vector.load %arg25[%c14_172, %c0_173] : memref<32x128xf32, #tpu.memory_space<vmem>>, vector<1x128xf32>
    tpu.vector_store %arg25[%c14_172, %c0_173], %314 {strides = array<i32>} : memref<32x128xf32, #tpu.memory_space<vmem>>, vector<1x128xf32>,
    %c24_i32_174 = arith.constant 24 : i32
    %316 = arith.addi %3, %c24_i32_174 : i32
    %c2_i32_175 = arith.constant 2 : i32
    %317 = arith.addi %316, %c2_i32_175 : i32
    %318 = arith.index_cast %317 : i32 to index
    %319 = memref.load %arg1[%318] : memref<96xi32, #tpu.memory_space<smem>>
    %320 = arith.index_cast %319 : i32 to index
    %c0_176 = arith.constant 0 : index
    %321 = vector.load %arg23[%320, %c0_176] : memref<32x128xf32, #tpu.memory_space<vmem>>, vector<1x128xf32>
    %c22 = arith.constant 22 : index
    %c0_177 = arith.constant 0 : index
    %322 = vector.load %arg24[%c22, %c0_177] : memref<32x128xf32, #tpu.memory_space<vmem>>, vector<1x128xf32>
    tpu.vector_store %arg24[%c22, %c0_177], %321 {strides = array<i32>} : memref<32x128xf32, #tpu.memory_space<vmem>>, vector<1x128xf32>,
    %323 = arith.index_cast %317 : i32 to index
    %324 = memref.load %arg2[%323] : memref<96xi32, #tpu.memory_space<smem>>
    %325 = arith.index_cast %324 : i32 to index
    %c0_178 = arith.constant 0 : index
    %326 = vector.load %arg5[%325, %c0_178] : memref<16x128xf32, #tpu.memory_space<vmem>>, vector<1x128xf32>
    %c22_179 = arith.constant 22 : index
    %c0_180 = arith.constant 0 : index
    %327 = vector.load %arg25[%c22_179, %c0_180] : memref<32x128xf32, #tpu.memory_space<vmem>>, vector<1x128xf32>
    tpu.vector_store %arg25[%c22_179, %c0_180], %326 {strides = array<i32>} : memref<32x128xf32, #tpu.memory_space<vmem>>, vector<1x128xf32>,
    %c24_i32_181 = arith.constant 24 : i32
    %328 = arith.addi %3, %c24_i32_181 : i32
    %c3_i32_182 = arith.constant 3 : i32
    %329 = arith.addi %328, %c3_i32_182 : i32
    %330 = arith.index_cast %329 : i32 to index
    %331 = memref.load %arg1[%330] : memref<96xi32, #tpu.memory_space<smem>>
    %332 = arith.index_cast %331 : i32 to index
    %c0_183 = arith.constant 0 : index
    %333 = vector.load %arg23[%332, %c0_183] : memref<32x128xf32, #tpu.memory_space<vmem>>, vector<1x128xf32>
    %c30 = arith.constant 30 : index
    %c0_184 = arith.constant 0 : index
    %334 = vector.load %arg24[%c30, %c0_184] : memref<32x128xf32, #tpu.memory_space<vmem>>, vector<1x128xf32>
    tpu.vector_store %arg24[%c30, %c0_184], %333 {strides = array<i32>} : memref<32x128xf32, #tpu.memory_space<vmem>>, vector<1x128xf32>,
    %335 = arith.index_cast %329 : i32 to index
    %336 = memref.load %arg2[%335] : memref<96xi32, #tpu.memory_space<smem>>
    %337 = arith.index_cast %336 : i32 to index
    %c0_185 = arith.constant 0 : index
    %338 = vector.load %arg5[%337, %c0_185] : memref<16x128xf32, #tpu.memory_space<vmem>>, vector<1x128xf32>
    %c30_186 = arith.constant 30 : index
    %c0_187 = arith.constant 0 : index
    %339 = vector.load %arg25[%c30_186, %c0_187] : memref<32x128xf32, #tpu.memory_space<vmem>>, vector<1x128xf32>
    tpu.vector_store %arg25[%c30_186, %c0_187], %338 {strides = array<i32>} : memref<32x128xf32, #tpu.memory_space<vmem>>, vector<1x128xf32>,
    %c28_i32 = arith.constant 28 : i32
    %340 = arith.addi %3, %c28_i32 : i32
    %c0_i32_188 = arith.constant 0 : i32
    %341 = arith.addi %340, %c0_i32_188 : i32
    %342 = arith.index_cast %341 : i32 to index
    %343 = memref.load %arg1[%342] : memref<96xi32, #tpu.memory_space<smem>>
    %344 = arith.index_cast %343 : i32 to index
    %c0_189 = arith.constant 0 : index
    %345 = vector.load %arg23[%344, %c0_189] : memref<32x128xf32, #tpu.memory_space<vmem>>, vector<1x128xf32>
    %c7 = arith.constant 7 : index
    %c0_190 = arith.constant 0 : index
    %346 = vector.load %arg24[%c7, %c0_190] : memref<32x128xf32, #tpu.memory_space<vmem>>, vector<1x128xf32>
    tpu.vector_store %arg24[%c7, %c0_190], %345 {strides = array<i32>} : memref<32x128xf32, #tpu.memory_space<vmem>>, vector<1x128xf32>,
    %347 = arith.index_cast %341 : i32 to index
    %348 = memref.load %arg2[%347] : memref<96xi32, #tpu.memory_space<smem>>
    %349 = arith.index_cast %348 : i32 to index
    %c0_191 = arith.constant 0 : index
    %350 = vector.load %arg5[%349, %c0_191] : memref<16x128xf32, #tpu.memory_space<vmem>>, vector<1x128xf32>
    %c7_192 = arith.constant 7 : index
    %c0_193 = arith.constant 0 : index
    %351 = vector.load %arg25[%c7_192, %c0_193] : memref<32x128xf32, #tpu.memory_space<vmem>>, vector<1x128xf32>
    tpu.vector_store %arg25[%c7_192, %c0_193], %350 {strides = array<i32>} : memref<32x128xf32, #tpu.memory_space<vmem>>, vector<1x128xf32>,
    %c28_i32_194 = arith.constant 28 : i32
    %352 = arith.addi %3, %c28_i32_194 : i32
    %c1_i32_195 = arith.constant 1 : i32
    %353 = arith.addi %352, %c1_i32_195 : i32
    %354 = arith.index_cast %353 : i32 to index
    %355 = memref.load %arg1[%354] : memref<96xi32, #tpu.memory_space<smem>>
    %356 = arith.index_cast %355 : i32 to index
    %c0_196 = arith.constant 0 : index
    %357 = vector.load %arg23[%356, %c0_196] : memref<32x128xf32, #tpu.memory_space<vmem>>, vector<1x128xf32>
    %c15 = arith.constant 15 : index
    %c0_197 = arith.constant 0 : index
    %358 = vector.load %arg24[%c15, %c0_197] : memref<32x128xf32, #tpu.memory_space<vmem>>, vector<1x128xf32>
    tpu.vector_store %arg24[%c15, %c0_197], %357 {strides = array<i32>} : memref<32x128xf32, #tpu.memory_space<vmem>>, vector<1x128xf32>,
    %359 = arith.index_cast %353 : i32 to index
    %360 = memref.load %arg2[%359] : memref<96xi32, #tpu.memory_space<smem>>
    %361 = arith.index_cast %360 : i32 to index
    %c0_198 = arith.constant 0 : index
    %362 = vector.load %arg5[%361, %c0_198] : memref<16x128xf32, #tpu.memory_space<vmem>>, vector<1x128xf32>
    %c15_199 = arith.constant 15 : index
    %c0_200 = arith.constant 0 : index
    %363 = vector.load %arg25[%c15_199, %c0_200] : memref<32x128xf32, #tpu.memory_space<vmem>>, vector<1x128xf32>
    tpu.vector_store %arg25[%c15_199, %c0_200], %362 {strides = array<i32>} : memref<32x128xf32, #tpu.memory_space<vmem>>, vector<1x128xf32>,
    %c28_i32_201 = arith.constant 28 : i32
    %364 = arith.addi %3, %c28_i32_201 : i32
    %c2_i32_202 = arith.constant 2 : i32
    %365 = arith.addi %364, %c2_i32_202 : i32
    %366 = arith.index_cast %365 : i32 to index
    %367 = memref.load %arg1[%366] : memref<96xi32, #tpu.memory_space<smem>>
    %368 = arith.index_cast %367 : i32 to index
    %c0_203 = arith.constant 0 : index
    %369 = vector.load %arg23[%368, %c0_203] : memref<32x128xf32, #tpu.memory_space<vmem>>, vector<1x128xf32>
    %c23 = arith.constant 23 : index
    %c0_204 = arith.constant 0 : index
    %370 = vector.load %arg24[%c23, %c0_204] : memref<32x128xf32, #tpu.memory_space<vmem>>, vector<1x128xf32>
    tpu.vector_store %arg24[%c23, %c0_204], %369 {strides = array<i32>} : memref<32x128xf32, #tpu.memory_space<vmem>>, vector<1x128xf32>,
    %371 = arith.index_cast %365 : i32 to index
    %372 = memref.load %arg2[%371] : memref<96xi32, #tpu.memory_space<smem>>
    %373 = arith.index_cast %372 : i32 to index
    %c0_205 = arith.constant 0 : index
    %374 = vector.load %arg5[%373, %c0_205] : memref<16x128xf32, #tpu.memory_space<vmem>>, vector<1x128xf32>
    %c23_206 = arith.constant 23 : index
    %c0_207 = arith.constant 0 : index
    %375 = vector.load %arg25[%c23_206, %c0_207] : memref<32x128xf32, #tpu.memory_space<vmem>>, vector<1x128xf32>
    tpu.vector_store %arg25[%c23_206, %c0_207], %374 {strides = array<i32>} : memref<32x128xf32, #tpu.memory_space<vmem>>, vector<1x128xf32>,
    %c28_i32_208 = arith.constant 28 : i32
    %376 = arith.addi %3, %c28_i32_208 : i32
    %c3_i32_209 = arith.constant 3 : i32
    %377 = arith.addi %376, %c3_i32_209 : i32
    %378 = arith.index_cast %377 : i32 to index
    %379 = memref.load %arg1[%378] : memref<96xi32, #tpu.memory_space<smem>>
    %380 = arith.index_cast %379 : i32 to index
    %c0_210 = arith.constant 0 : index
    %381 = vector.load %arg23[%380, %c0_210] : memref<32x128xf32, #tpu.memory_space<vmem>>, vector<1x128xf32>
    %c31 = arith.constant 31 : index
    %c0_211 = arith.constant 0 : index
    %382 = vector.load %arg24[%c31, %c0_211] : memref<32x128xf32, #tpu.memory_space<vmem>>, vector<1x128xf32>
    tpu.vector_store %arg24[%c31, %c0_211], %381 {strides = array<i32>} : memref<32x128xf32, #tpu.memory_space<vmem>>, vector<1x128xf32>,
    %383 = arith.index_cast %377 : i32 to index
    %384 = memref.load %arg2[%383] : memref<96xi32, #tpu.memory_space<smem>>
    %385 = arith.index_cast %384 : i32 to index
    %c0_212 = arith.constant 0 : index
    %386 = vector.load %arg5[%385, %c0_212] : memref<16x128xf32, #tpu.memory_space<vmem>>, vector<1x128xf32>
    %c31_213 = arith.constant 31 : index
    %c0_214 = arith.constant 0 : index
    %387 = vector.load %arg25[%c31_213, %c0_214] : memref<32x128xf32, #tpu.memory_space<vmem>>, vector<1x128xf32>
    tpu.vector_store %arg25[%c31_213, %c0_214], %386 {strides = array<i32>} : memref<32x128xf32, #tpu.memory_space<vmem>>, vector<1x128xf32>,
    %c0_215 = arith.constant 0 : index
    %c0_216 = arith.constant 0 : index
    %388 = vector.load %arg24[%c0_215, %c0_216] : memref<32x128xf32, #tpu.memory_space<vmem>>, vector<32x128xf32>
    %c0_217 = arith.constant 0 : index
    %c0_218 = arith.constant 0 : index
    %389 = vector.load %arg25[%c0_217, %c0_218] : memref<32x128xf32, #tpu.memory_space<vmem>>, vector<32x128xf32>
    %cst = arith.constant 0.000000e+00 : f32
    %390 = vector.broadcast %cst : f32 to vector<8x128xf32>
    %cst_219 = arith.constant 0.000000e+00 : f32
    %391 = vector.broadcast %cst_219 : f32 to vector<8x128xf32>
    %392 = vector.extract_strided_slice %388 {offsets = [0, 0], sizes = [8, 128], strides = [1, 1]} : vector<32x128xf32> to vector<8x128xf32>
    %393 = arith.addf %390, %392 : vector<8x128xf32>
    %394 = vector.extract_strided_slice %389 {offsets = [0, 0], sizes = [8, 128], strides = [1, 1]} : vector<32x128xf32> to vector<8x128xf32>
    %395 = arith.addf %391, %394 : vector<8x128xf32>
    %396 = vector.extract_strided_slice %388 {offsets = [8, 0], sizes = [8, 128], strides = [1, 1]} : vector<32x128xf32> to vector<8x128xf32>
    %397 = arith.addf %393, %396 : vector<8x128xf32>
    %398 = vector.extract_strided_slice %389 {offsets = [8, 0], sizes = [8, 128], strides = [1, 1]} : vector<32x128xf32> to vector<8x128xf32>
    %399 = arith.addf %395, %398 : vector<8x128xf32>
    %400 = vector.extract_strided_slice %388 {offsets = [16, 0], sizes = [8, 128], strides = [1, 1]} : vector<32x128xf32> to vector<8x128xf32>
    %401 = arith.addf %397, %400 : vector<8x128xf32>
    %402 = vector.extract_strided_slice %389 {offsets = [16, 0], sizes = [8, 128], strides = [1, 1]} : vector<32x128xf32> to vector<8x128xf32>
    %403 = arith.addf %399, %402 : vector<8x128xf32>
    %404 = vector.extract_strided_slice %388 {offsets = [24, 0], sizes = [8, 128], strides = [1, 1]} : vector<32x128xf32> to vector<8x128xf32>
    %405 = arith.addf %401, %404 : vector<8x128xf32>
    %406 = vector.extract_strided_slice %389 {offsets = [24, 0], sizes = [8, 128], strides = [1, 1]} : vector<32x128xf32> to vector<8x128xf32>
    %407 = arith.addf %403, %406 : vector<8x128xf32>
    %c0_220 = arith.constant 0 : index
    %c0_221 = arith.constant 0 : index
    %408 = vector.load %arg4[%c0_220, %c0_221] : memref<8x128xf32, #tpu.memory_space<vmem>>, vector<8x128xf32>
    %409 = tpu.concatenate %408, %405, %407 in 1 : vector<8x128xf32>, vector<8x128xf32>, vector<8x128xf32> -> vector<8x384xf32>
    %410 = arith.truncf %409 : vector<8x384xf32> to vector<8x384xbf16>
    %c0_222 = arith.constant 0 : index
    %c0_223 = arith.constant 0 : index
    %411 = vector.load %arg6[%c0_222, %c0_223] : memref<384x256xbf16, #tpu.memory_space<vmem>>, vector<384x256xbf16>
    %cst_224 = arith.constant dense<0.000000e+00> : vector<8x256xf32>
    %412 = tpu.matmul %410, %411, %cst_224 {dimension_numbers = #tpu.dot_dimension_numbers<[1], [0], [0], [1], [0, 0, 1, 1], [], []>} : vector<8x384xbf16>, vector<384x256xbf16>, vector<8x256xf32> -> vector<8x256xf32>
    %c0_225 = arith.constant 0 : index
    %c0_226 = arith.constant 0 : index
    %413 = vector.load %arg7[%c0_225, %c0_226] : memref<1x256xf32, #tpu.memory_space<vmem>>, vector<1x256xf32>
    %414 = vector.broadcast %413 : vector<1x256xf32> to vector<8x256xf32>
    %415 = arith.addf %412, %414 : vector<8x256xf32>
    %416 = vector.extract_strided_slice %415 {offsets = [0, 0], sizes = [8, 128], strides = [1, 1]} : vector<8x256xf32> to vector<8x128xf32>
    %417 = arith.negf %416 : vector<8x128xf32>
    %418 = math.exp %417 : vector<8x128xf32>
    %cst_227 = arith.constant 1.000000e+00 : f32
    %419 = vector.broadcast %cst_227 : f32 to vector<8x128xf32>
    %420 = arith.addf %419, %418 : vector<8x128xf32>
    %421 = arith.divf %419, %420 : vector<8x128xf32>
    %422 = vector.extract_strided_slice %415 {offsets = [0, 128], sizes = [8, 128], strides = [1, 1]} : vector<8x256xf32> to vector<8x128xf32>
    %423 = math.tanh %422 : vector<8x128xf32>
    %424 = arith.truncf %408 : vector<8x128xf32> to vector<8x128xbf16>
    %c0_228 = arith.constant 0 : index
    %c0_229 = arith.constant 0 : index
    %425 = vector.load %arg8[%c0_228, %c0_229] : memref<128x128xbf16, #tpu.memory_space<vmem>>, vector<128x128xbf16>
    %cst_230 = arith.constant dense<0.000000e+00> : vector<8x128xf32>
    %426 = tpu.matmul %424, %425, %cst_230 {dimension_numbers = #tpu.dot_dimension_numbers<[1], [0], [0], [1], [0, 0, 1, 1], [], []>} : vector<8x128xbf16>, vector<128x128xbf16>, vector<8x128xf32> -> vector<8x128xf32>
    %c0_231 = arith.constant 0 : index
    %c0_232 = arith.constant 0 : index
    %427 = vector.load %arg10[%c0_231, %c0_232] : memref<1x128xf32, #tpu.memory_space<vmem>>, vector<1x128xf32>
    %428 = vector.broadcast %427 : vector<1x128xf32> to vector<8x128xf32>
    %429 = arith.addf %426, %428 : vector<8x128xf32>
    %430 = tpu.concatenate %388, %389 in 1 : vector<32x128xf32>, vector<32x128xf32> -> vector<32x256xf32>
    %431 = arith.truncf %430 : vector<32x256xf32> to vector<32x256xbf16>
    %c0_233 = arith.constant 0 : index
    %c0_234 = arith.constant 0 : index
    %432 = vector.load %arg9[%c0_233, %c0_234] : memref<256x128xbf16, #tpu.memory_space<vmem>>, vector<256x128xbf16>
    %cst_235 = arith.constant dense<0.000000e+00> : vector<32x128xf32>
    %433 = tpu.matmul %431, %432, %cst_235 {dimension_numbers = #tpu.dot_dimension_numbers<[1], [0], [0], [1], [0, 0, 1, 1], [], []>} : vector<32x256xbf16>, vector<256x128xbf16>, vector<32x128xf32> -> vector<32x128xf32>
    %cst_236 = arith.constant 0.000000e+00 : f32
    %434 = vector.broadcast %cst_236 : f32 to vector<8x128xf32>
    %435 = vector.extract_strided_slice %433 {offsets = [0, 0], sizes = [8, 128], strides = [1, 1]} : vector<32x128xf32> to vector<8x128xf32>
    %436 = arith.addf %435, %429 : vector<8x128xf32>
    %437 = arith.negf %436 : vector<8x128xf32>
    %438 = math.exp %437 : vector<8x128xf32>
    %cst_237 = arith.constant 1.000000e+00 : f32
    %439 = vector.broadcast %cst_237 : f32 to vector<8x128xf32>
    %440 = arith.addf %439, %438 : vector<8x128xf32>
    %441 = arith.divf %439, %440 : vector<8x128xf32>
    %442 = vector.extract_strided_slice %388 {offsets = [0, 0], sizes = [8, 128], strides = [1, 1]} : vector<32x128xf32> to vector<8x128xf32>
    %443 = arith.mulf %441, %442 : vector<8x128xf32>
    %444 = arith.addf %434, %443 : vector<8x128xf32>
    %445 = vector.extract_strided_slice %433 {offsets = [8, 0], sizes = [8, 128], strides = [1, 1]} : vector<32x128xf32> to vector<8x128xf32>
    %446 = arith.addf %445, %429 : vector<8x128xf32>
    %447 = arith.negf %446 : vector<8x128xf32>
    %448 = math.exp %447 : vector<8x128xf32>
    %cst_238 = arith.constant 1.000000e+00 : f32
    %449 = vector.broadcast %cst_238 : f32 to vector<8x128xf32>
    %450 = arith.addf %449, %448 : vector<8x128xf32>
    %451 = arith.divf %449, %450 : vector<8x128xf32>
    %452 = vector.extract_strided_slice %388 {offsets = [8, 0], sizes = [8, 128], strides = [1, 1]} : vector<32x128xf32> to vector<8x128xf32>
    %453 = arith.mulf %451, %452 : vector<8x128xf32>
    %454 = arith.addf %444, %453 : vector<8x128xf32>
    %455 = vector.extract_strided_slice %433 {offsets = [16, 0], sizes = [8, 128], strides = [1, 1]} : vector<32x128xf32> to vector<8x128xf32>
    %456 = arith.addf %455, %429 : vector<8x128xf32>
    %457 = arith.negf %456 : vector<8x128xf32>
    %458 = math.exp %457 : vector<8x128xf32>
    %cst_239 = arith.constant 1.000000e+00 : f32
    %459 = vector.broadcast %cst_239 : f32 to vector<8x128xf32>
    %460 = arith.addf %459, %458 : vector<8x128xf32>
    %461 = arith.divf %459, %460 : vector<8x128xf32>
    %462 = vector.extract_strided_slice %388 {offsets = [16, 0], sizes = [8, 128], strides = [1, 1]} : vector<32x128xf32> to vector<8x128xf32>
    %463 = arith.mulf %461, %462 : vector<8x128xf32>
    %464 = arith.addf %454, %463 : vector<8x128xf32>
    %465 = vector.extract_strided_slice %433 {offsets = [24, 0], sizes = [8, 128], strides = [1, 1]} : vector<32x128xf32> to vector<8x128xf32>
    %466 = arith.addf %465, %429 : vector<8x128xf32>
    %467 = arith.negf %466 : vector<8x128xf32>
    %468 = math.exp %467 : vector<8x128xf32>
    %cst_240 = arith.constant 1.000000e+00 : f32
    %469 = vector.broadcast %cst_240 : f32 to vector<8x128xf32>
    %470 = arith.addf %469, %468 : vector<8x128xf32>
    %471 = arith.divf %469, %470 : vector<8x128xf32>
    %472 = vector.extract_strided_slice %388 {offsets = [24, 0], sizes = [8, 128], strides = [1, 1]} : vector<32x128xf32> to vector<8x128xf32>
    %473 = arith.mulf %471, %472 : vector<8x128xf32>
    %474 = arith.addf %464, %473 : vector<8x128xf32>
    %475 = arith.mulf %421, %423 : vector<8x128xf32>
    %476 = arith.addf %475, %474 : vector<8x128xf32>
    %477 = math.tanh %476 : vector<8x128xf32>
    %c8_i32_241 = arith.constant 8 : i32
    %478 = arith.muli %arg0, %c8_i32_241 : i32
    %479 = tpu.assume_multiple %478, 8 : i32
    %480 = arith.index_cast %479 : i32 to index
    %c0_242 = arith.constant 0 : index
    %481 = vector.load %arg23[%480, %c0_242] : memref<32x128xf32, #tpu.memory_space<vmem>>, vector<8x128xf32>
    tpu.vector_store %arg23[%480, %c0_242], %477 {strides = array<i32>} : memref<32x128xf32, #tpu.memory_space<vmem>>, vector<8x128xf32>,
    %c2_i32_243 = arith.constant 2 : i32
    %482 = arith.cmpi eq, %arg0, %c2_i32_243 : i32
    %483 = arith.extui %482 : i1 to i32
    %c0_i32_244 = arith.constant 0 : i32
    %484 = arith.cmpi ne, %483, %c0_i32_244 : i32
    scf.if %484 {
      %cst_245 = arith.constant 0.000000e+00 : f32
      %485 = vector.broadcast %cst_245 : f32 to vector<8x128xf32>
      %c0_246 = arith.constant 0 : index
      %c0_247 = arith.constant 0 : index
      %486 = vector.load %arg26[%c0_246, %c0_247] : memref<8x128xf32, #tpu.memory_space<vmem>>, vector<8x128xf32>
      tpu.vector_store %arg26[%c0_246, %c0_247], %485 {strides = array<i32>} : memref<8x128xf32, #tpu.memory_space<vmem>>, vector<8x128xf32>,
      %c0_248 = arith.constant 0 : index
      %487 = memref.load %arg3[%c0_248] : memref<3xi32, #tpu.memory_space<smem>>
      %488 = arith.index_cast %487 : i32 to index
      %c0_249 = arith.constant 0 : index
      %489 = vector.load %arg23[%488, %c0_249] : memref<32x128xf32, #tpu.memory_space<vmem>>, vector<1x128xf32>
      %c0_250 = arith.constant 0 : index
      %c0_251 = arith.constant 0 : index
      %490 = vector.load %arg26[%c0_250, %c0_251] : memref<8x128xf32, #tpu.memory_space<vmem>>, vector<1x128xf32>
      tpu.vector_store %arg26[%c0_250, %c0_251], %489 {strides = array<i32>} : memref<8x128xf32, #tpu.memory_space<vmem>>, vector<1x128xf32>,
      %c1_252 = arith.constant 1 : index
      %491 = memref.load %arg3[%c1_252] : memref<3xi32, #tpu.memory_space<smem>>
      %492 = arith.index_cast %491 : i32 to index
      %c0_253 = arith.constant 0 : index
      %493 = vector.load %arg23[%492, %c0_253] : memref<32x128xf32, #tpu.memory_space<vmem>>, vector<1x128xf32>
      %c1_254 = arith.constant 1 : index
      %c0_255 = arith.constant 0 : index
      %494 = vector.load %arg26[%c1_254, %c0_255] : memref<8x128xf32, #tpu.memory_space<vmem>>, vector<1x128xf32>
      tpu.vector_store %arg26[%c1_254, %c0_255], %493 {strides = array<i32>} : memref<8x128xf32, #tpu.memory_space<vmem>>, vector<1x128xf32>,
      %c2_256 = arith.constant 2 : index
      %495 = memref.load %arg3[%c2_256] : memref<3xi32, #tpu.memory_space<smem>>
      %496 = arith.index_cast %495 : i32 to index
      %c0_257 = arith.constant 0 : index
      %497 = vector.load %arg23[%496, %c0_257] : memref<32x128xf32, #tpu.memory_space<vmem>>, vector<1x128xf32>
      %c2_258 = arith.constant 2 : index
      %c0_259 = arith.constant 0 : index
      %498 = vector.load %arg26[%c2_258, %c0_259] : memref<8x128xf32, #tpu.memory_space<vmem>>, vector<1x128xf32>
      tpu.vector_store %arg26[%c2_258, %c0_259], %497 {strides = array<i32>} : memref<8x128xf32, #tpu.memory_space<vmem>>, vector<1x128xf32>,
      %c0_260 = arith.constant 0 : index
      %c0_261 = arith.constant 0 : index
      %499 = vector.load %arg26[%c0_260, %c0_261] : memref<8x128xf32, #tpu.memory_space<vmem>>, vector<8x128xf32>
      %500 = arith.truncf %499 : vector<8x128xf32> to vector<8x128xbf16>
      %c0_262 = arith.constant 0 : index
      %c0_263 = arith.constant 0 : index
      %501 = vector.load %arg12[%c0_262, %c0_263] : memref<128x384xbf16, #tpu.memory_space<vmem>>, vector<128x384xbf16>
      %cst_264 = arith.constant dense<0.000000e+00> : vector<8x384xf32>
      %502 = tpu.matmul %500, %501, %cst_264 {dimension_numbers = #tpu.dot_dimension_numbers<[1], [0], [0], [1], [0, 0, 1, 1], [], []>} : vector<8x128xbf16>, vector<128x384xbf16>, vector<8x384xf32> -> vector<8x384xf32>
      %c0_265 = arith.constant 0 : index
      %c0_266 = arith.constant 0 : index
      %503 = vector.load %arg13[%c0_265, %c0_266] : memref<1x384xf32, #tpu.memory_space<vmem>>, vector<1x384xf32>
      %504 = vector.broadcast %503 : vector<1x384xf32> to vector<8x384xf32>
      %505 = arith.addf %502, %504 : vector<8x384xf32>
      %c0_267 = arith.constant 0 : index
      %c0_268 = arith.constant 0 : index
      %506 = vector.load %arg27[%c0_267, %c0_268] : memref<8x384xf32, #tpu.memory_space<vmem>>, vector<8x384xf32>
      tpu.vector_store %arg27[%c0_267, %c0_268], %505 {strides = array<i32>} : memref<8x384xf32, #tpu.memory_space<vmem>>, vector<8x384xf32>,
      %cst_269 = arith.constant 0.000000e+00 : f32
      %507 = vector.broadcast %cst_269 : f32 to vector<1x128xf32>
      %c0_i32_270 = arith.constant 0 : i32
      %508 = arith.index_cast %c0_i32_270 : i32 to index
      %c0_271 = arith.constant 0 : index
      %509 = vector.load %arg27[%508, %c0_271] : memref<8x384xf32, #tpu.memory_space<vmem>>, vector<1x384xf32>
      %510 = arith.truncf %507 : vector<1x128xf32> to vector<1x128xbf16>
      %c0_272 = arith.constant 0 : index
      %c0_273 = arith.constant 0 : index
      %511 = vector.load %arg14[%c0_272, %c0_273] : memref<128x384xbf16, #tpu.memory_space<vmem>>, vector<128x384xbf16>
      %cst_274 = arith.constant dense<0.000000e+00> : vector<1x384xf32>
      %512 = tpu.matmul %510, %511, %cst_274 {dimension_numbers = #tpu.dot_dimension_numbers<[1], [0], [0], [1], [0, 0, 1, 1], [], []>} : vector<1x128xbf16>, vector<128x384xbf16>, vector<1x384xf32> -> vector<1x384xf32>
      %c0_275 = arith.constant 0 : index
      %c0_276 = arith.constant 0 : index
      %513 = vector.load %arg15[%c0_275, %c0_276] : memref<1x384xf32, #tpu.memory_space<vmem>>, vector<1x384xf32>
      %514 = arith.addf %512, %513 : vector<1x384xf32>
      %515 = vector.extract_strided_slice %509 {offsets = [0, 0], sizes = [1, 128], strides = [1, 1]} : vector<1x384xf32> to vector<1x128xf32>
      %516 = vector.extract_strided_slice %514 {offsets = [0, 0], sizes = [1, 128], strides = [1, 1]} : vector<1x384xf32> to vector<1x128xf32>
      %517 = arith.addf %515, %516 : vector<1x128xf32>
      %518 = arith.negf %517 : vector<1x128xf32>
      %519 = math.exp %518 : vector<1x128xf32>
      %cst_277 = arith.constant 1.000000e+00 : f32
      %520 = vector.broadcast %cst_277 : f32 to vector<1x128xf32>
      %521 = arith.addf %520, %519 : vector<1x128xf32>
      %522 = arith.divf %520, %521 : vector<1x128xf32>
      %523 = vector.extract_strided_slice %509 {offsets = [0, 128], sizes = [1, 128], strides = [1, 1]} : vector<1x384xf32> to vector<1x128xf32>
      %524 = vector.extract_strided_slice %514 {offsets = [0, 128], sizes = [1, 128], strides = [1, 1]} : vector<1x384xf32> to vector<1x128xf32>
      %525 = arith.addf %523, %524 : vector<1x128xf32>
      %526 = arith.negf %525 : vector<1x128xf32>
      %527 = math.exp %526 : vector<1x128xf32>
      %cst_278 = arith.constant 1.000000e+00 : f32
      %528 = vector.broadcast %cst_278 : f32 to vector<1x128xf32>
      %529 = arith.addf %528, %527 : vector<1x128xf32>
      %530 = arith.divf %528, %529 : vector<1x128xf32>
      %531 = vector.extract_strided_slice %509 {offsets = [0, 256], sizes = [1, 128], strides = [1, 1]} : vector<1x384xf32> to vector<1x128xf32>
      %532 = vector.extract_strided_slice %514 {offsets = [0, 256], sizes = [1, 128], strides = [1, 1]} : vector<1x384xf32> to vector<1x128xf32>
      %533 = arith.mulf %522, %532 : vector<1x128xf32>
      %534 = arith.addf %531, %533 : vector<1x128xf32>
      %535 = math.tanh %534 : vector<1x128xf32>
      %cst_279 = arith.constant 1.000000e+00 : f32
      %536 = vector.broadcast %cst_279 : f32 to vector<1x128xf32>
      %537 = arith.subf %536, %530 : vector<1x128xf32>
      %538 = arith.mulf %537, %535 : vector<1x128xf32>
      %539 = arith.mulf %530, %507 : vector<1x128xf32>
      %540 = arith.addf %538, %539 : vector<1x128xf32>
      %c1_i32_280 = arith.constant 1 : i32
      %541 = arith.index_cast %c1_i32_280 : i32 to index
      %c0_281 = arith.constant 0 : index
      %542 = vector.load %arg27[%541, %c0_281] : memref<8x384xf32, #tpu.memory_space<vmem>>, vector<1x384xf32>
      %543 = arith.truncf %540 : vector<1x128xf32> to vector<1x128xbf16>
      %c0_282 = arith.constant 0 : index
      %c0_283 = arith.constant 0 : index
      %544 = vector.load %arg14[%c0_282, %c0_283] : memref<128x384xbf16, #tpu.memory_space<vmem>>, vector<128x384xbf16>
      %cst_284 = arith.constant dense<0.000000e+00> : vector<1x384xf32>
      %545 = tpu.matmul %543, %544, %cst_284 {dimension_numbers = #tpu.dot_dimension_numbers<[1], [0], [0], [1], [0, 0, 1, 1], [], []>} : vector<1x128xbf16>, vector<128x384xbf16>, vector<1x384xf32> -> vector<1x384xf32>
      %c0_285 = arith.constant 0 : index
      %c0_286 = arith.constant 0 : index
      %546 = vector.load %arg15[%c0_285, %c0_286] : memref<1x384xf32, #tpu.memory_space<vmem>>, vector<1x384xf32>
      %547 = arith.addf %545, %546 : vector<1x384xf32>
      %548 = vector.extract_strided_slice %542 {offsets = [0, 0], sizes = [1, 128], strides = [1, 1]} : vector<1x384xf32> to vector<1x128xf32>
      %549 = vector.extract_strided_slice %547 {offsets = [0, 0], sizes = [1, 128], strides = [1, 1]} : vector<1x384xf32> to vector<1x128xf32>
      %550 = arith.addf %548, %549 : vector<1x128xf32>
      %551 = arith.negf %550 : vector<1x128xf32>
      %552 = math.exp %551 : vector<1x128xf32>
      %cst_287 = arith.constant 1.000000e+00 : f32
      %553 = vector.broadcast %cst_287 : f32 to vector<1x128xf32>
      %554 = arith.addf %553, %552 : vector<1x128xf32>
      %555 = arith.divf %553, %554 : vector<1x128xf32>
      %556 = vector.extract_strided_slice %542 {offsets = [0, 128], sizes = [1, 128], strides = [1, 1]} : vector<1x384xf32> to vector<1x128xf32>
      %557 = vector.extract_strided_slice %547 {offsets = [0, 128], sizes = [1, 128], strides = [1, 1]} : vector<1x384xf32> to vector<1x128xf32>
      %558 = arith.addf %556, %557 : vector<1x128xf32>
      %559 = arith.negf %558 : vector<1x128xf32>
      %560 = math.exp %559 : vector<1x128xf32>
      %cst_288 = arith.constant 1.000000e+00 : f32
      %561 = vector.broadcast %cst_288 : f32 to vector<1x128xf32>
      %562 = arith.addf %561, %560 : vector<1x128xf32>
      %563 = arith.divf %561, %562 : vector<1x128xf32>
      %564 = vector.extract_strided_slice %542 {offsets = [0, 256], sizes = [1, 128], strides = [1, 1]} : vector<1x384xf32> to vector<1x128xf32>
      %565 = vector.extract_strided_slice %547 {offsets = [0, 256], sizes = [1, 128], strides = [1, 1]} : vector<1x384xf32> to vector<1x128xf32>
      %566 = arith.mulf %555, %565 : vector<1x128xf32>
      %567 = arith.addf %564, %566 : vector<1x128xf32>
      %568 = math.tanh %567 : vector<1x128xf32>
      %cst_289 = arith.constant 1.000000e+00 : f32
      %569 = vector.broadcast %cst_289 : f32 to vector<1x128xf32>
      %570 = arith.subf %569, %563 : vector<1x128xf32>
      %571 = arith.mulf %570, %568 : vector<1x128xf32>
      %572 = arith.mulf %563, %540 : vector<1x128xf32>
      %573 = arith.addf %571, %572 : vector<1x128xf32>
      %c2_i32_290 = arith.constant 2 : i32
      %574 = arith.index_cast %c2_i32_290 : i32 to index
      %c0_291 = arith.constant 0 : index
      %575 = vector.load %arg27[%574, %c0_291] : memref<8x384xf32, #tpu.memory_space<vmem>>, vector<1x384xf32>
      %576 = arith.truncf %573 : vector<1x128xf32> to vector<1x128xbf16>
      %c0_292 = arith.constant 0 : index
      %c0_293 = arith.constant 0 : index
      %577 = vector.load %arg14[%c0_292, %c0_293] : memref<128x384xbf16, #tpu.memory_space<vmem>>, vector<128x384xbf16>
      %cst_294 = arith.constant dense<0.000000e+00> : vector<1x384xf32>
      %578 = tpu.matmul %576, %577, %cst_294 {dimension_numbers = #tpu.dot_dimension_numbers<[1], [0], [0], [1], [0, 0, 1, 1], [], []>} : vector<1x128xbf16>, vector<128x384xbf16>, vector<1x384xf32> -> vector<1x384xf32>
      %c0_295 = arith.constant 0 : index
      %c0_296 = arith.constant 0 : index
      %579 = vector.load %arg15[%c0_295, %c0_296] : memref<1x384xf32, #tpu.memory_space<vmem>>, vector<1x384xf32>
      %580 = arith.addf %578, %579 : vector<1x384xf32>
      %581 = vector.extract_strided_slice %575 {offsets = [0, 0], sizes = [1, 128], strides = [1, 1]} : vector<1x384xf32> to vector<1x128xf32>
      %582 = vector.extract_strided_slice %580 {offsets = [0, 0], sizes = [1, 128], strides = [1, 1]} : vector<1x384xf32> to vector<1x128xf32>
      %583 = arith.addf %581, %582 : vector<1x128xf32>
      %584 = arith.negf %583 : vector<1x128xf32>
      %585 = math.exp %584 : vector<1x128xf32>
      %cst_297 = arith.constant 1.000000e+00 : f32
      %586 = vector.broadcast %cst_297 : f32 to vector<1x128xf32>
      %587 = arith.addf %586, %585 : vector<1x128xf32>
      %588 = arith.divf %586, %587 : vector<1x128xf32>
      %589 = vector.extract_strided_slice %575 {offsets = [0, 128], sizes = [1, 128], strides = [1, 1]} : vector<1x384xf32> to vector<1x128xf32>
      %590 = vector.extract_strided_slice %580 {offsets = [0, 128], sizes = [1, 128], strides = [1, 1]} : vector<1x384xf32> to vector<1x128xf32>
      %591 = arith.addf %589, %590 : vector<1x128xf32>
      %592 = arith.negf %591 : vector<1x128xf32>
      %593 = math.exp %592 : vector<1x128xf32>
      %cst_298 = arith.constant 1.000000e+00 : f32
      %594 = vector.broadcast %cst_298 : f32 to vector<1x128xf32>
      %595 = arith.addf %594, %593 : vector<1x128xf32>
      %596 = arith.divf %594, %595 : vector<1x128xf32>
      %597 = vector.extract_strided_slice %575 {offsets = [0, 256], sizes = [1, 128], strides = [1, 1]} : vector<1x384xf32> to vector<1x128xf32>
      %598 = vector.extract_strided_slice %580 {offsets = [0, 256], sizes = [1, 128], strides = [1, 1]} : vector<1x384xf32> to vector<1x128xf32>
      %599 = arith.mulf %588, %598 : vector<1x128xf32>
      %600 = arith.addf %597, %599 : vector<1x128xf32>
      %601 = math.tanh %600 : vector<1x128xf32>
      %cst_299 = arith.constant 1.000000e+00 : f32
      %602 = vector.broadcast %cst_299 : f32 to vector<1x128xf32>
      %603 = arith.subf %602, %596 : vector<1x128xf32>
      %604 = arith.mulf %603, %601 : vector<1x128xf32>
      %605 = arith.mulf %596, %573 : vector<1x128xf32>
      %606 = arith.addf %604, %605 : vector<1x128xf32>
      %c3_i32_300 = arith.constant 3 : i32
      %c0_301 = arith.constant 0 : index
      %c0_302 = arith.constant 0 : index
      %607 = vector.load %arg11[%c0_301, %c0_302] : memref<1x128xf32, #tpu.memory_space<vmem>>, vector<1x128xf32>
      %608 = arith.truncf %607 : vector<1x128xf32> to vector<1x128xbf16>
      %c0_303 = arith.constant 0 : index
      %c0_304 = arith.constant 0 : index
      %609 = vector.load %arg16[%c0_303, %c0_304] : memref<128x128xbf16, #tpu.memory_space<vmem>>, vector<128x128xbf16>
      %cst_305 = arith.constant dense<0.000000e+00> : vector<1x128xf32>
      %610 = tpu.matmul %608, %609, %cst_305 {dimension_numbers = #tpu.dot_dimension_numbers<[1], [0], [0], [1], [0, 0, 1, 1], [], []>} : vector<1x128xbf16>, vector<128x128xbf16>, vector<1x128xf32> -> vector<1x128xf32>
      %c0_306 = arith.constant 0 : index
      %c0_307 = arith.constant 0 : index
      %611 = vector.load %arg17[%c0_306, %c0_307] : memref<1x128xf32, #tpu.memory_space<vmem>>, vector<1x128xf32>
      %612 = arith.addf %610, %611 : vector<1x128xf32>
      %613 = math.tanh %612 : vector<1x128xf32>
      %614 = tpu.concatenate %606, %613 in 1 : vector<1x128xf32>, vector<1x128xf32> -> vector<1x256xf32>
      %615 = arith.truncf %614 : vector<1x256xf32> to vector<1x256xbf16>
      %c0_308 = arith.constant 0 : index
      %c0_309 = arith.constant 0 : index
      %616 = vector.load %arg18[%c0_308, %c0_309] : memref<256x256xbf16, #tpu.memory_space<vmem>>, vector<256x256xbf16>
      %cst_310 = arith.constant dense<0.000000e+00> : vector<1x256xf32>
      %617 = tpu.matmul %615, %616, %cst_310 {dimension_numbers = #tpu.dot_dimension_numbers<[1], [0], [0], [1], [0, 0, 1, 1], [], []>} : vector<1x256xbf16>, vector<256x256xbf16>, vector<1x256xf32> -> vector<1x256xf32>
      %c0_311 = arith.constant 0 : index
      %c0_312 = arith.constant 0 : index
      %618 = vector.load %arg19[%c0_311, %c0_312] : memref<1x256xf32, #tpu.memory_space<vmem>>, vector<1x256xf32>
      %619 = arith.addf %617, %618 : vector<1x256xf32>
      %620 = arith.negf %619 : vector<1x256xf32>
      %621 = math.exp %620 : vector<1x256xf32>
      %cst_313 = arith.constant 1.000000e+00 : f32
      %622 = vector.broadcast %cst_313 : f32 to vector<1x256xf32>
      %623 = arith.addf %622, %621 : vector<1x256xf32>
      %624 = arith.divf %622, %623 : vector<1x256xf32>
      %625 = vector.extract_strided_slice %624 {offsets = [0, 0], sizes = [1, 128], strides = [1, 1]} : vector<1x256xf32> to vector<1x128xf32>
      %626 = arith.mulf %606, %625 : vector<1x128xf32>
      %627 = vector.extract_strided_slice %624 {offsets = [0, 128], sizes = [1, 128], strides = [1, 1]} : vector<1x256xf32> to vector<1x128xf32>
      %628 = arith.mulf %613, %627 : vector<1x128xf32>
      %629 = arith.addf %626, %628 : vector<1x128xf32>
      %630 = math.tanh %629 : vector<1x128xf32>
      %631 = arith.truncf %630 : vector<1x128xf32> to vector<1x128xbf16>
      %c0_314 = arith.constant 0 : index
      %c0_315 = arith.constant 0 : index
      %632 = vector.load %arg20[%c0_314, %c0_315] : memref<128x128xbf16, #tpu.memory_space<vmem>>, vector<128x128xbf16>
      %cst_316 = arith.constant dense<0.000000e+00> : vector<1x128xf32>
      %633 = tpu.matmul %631, %632, %cst_316 {dimension_numbers = #tpu.dot_dimension_numbers<[1], [0], [0], [1], [0, 0, 1, 1], [], []>} : vector<1x128xbf16>, vector<128x128xbf16>, vector<1x128xf32> -> vector<1x128xf32>
      %c0_317 = arith.constant 0 : index
      %c0_318 = arith.constant 0 : index
      %634 = vector.load %arg21[%c0_317, %c0_318] : memref<1x128xf32, #tpu.memory_space<vmem>>, vector<1x128xf32>
      %635 = arith.addf %633, %634 : vector<1x128xf32>
      %636 = tpu.iota {dimensions = array<i32: 1>} : vector<1x128xi32>
      %c4_i32_319 = arith.constant 4 : i32
      %637 = vector.broadcast %c4_i32_319 : i32 to vector<1x128xi32>
      %638 = arith.cmpi slt, %636, %637 : vector<1x128xi32>
      %cst_320 = arith.constant -1.000000e+30 : f32
      %639 = vector.broadcast %cst_320 : f32 to vector<1x128xf32>
      %640 = arith.select %638, %635, %639 : vector<1x128xi1>, vector<1x128xf32>
      %cst_321 = arith.constant dense<0xFF800000> : vector<1xf32>
      %641 = vector.multi_reduction <maximumf>, %640, %cst_321 [1] : vector<1x128xf32> to vector<1xf32>
      %642 = vector.shape_cast %641 : vector<1xf32> to vector<1x1xf32>
      %643 = vector.broadcast %642 : vector<1x1xf32> to vector<1x128xf32>
      %644 = arith.subf %640, %643 : vector<1x128xf32>
      %645 = math.exp %644 : vector<1x128xf32>
      %cst_322 = arith.constant dense<0.000000e+00> : vector<1xf32>
      %646 = vector.multi_reduction <add>, %645, %cst_322 [1] : vector<1x128xf32> to vector<1xf32>
      %647 = vector.shape_cast %646 : vector<1xf32> to vector<1x1xf32>
      %648 = math.log %647 : vector<1x1xf32>
      %649 = vector.broadcast %648 : vector<1x1xf32> to vector<1x128xf32>
      %650 = arith.subf %644, %649 : vector<1x128xf32>
      %c0_323 = arith.constant 0 : index
      %c0_324 = arith.constant 0 : index
      %651 = vector.load %arg22[%c0_323, %c0_324] : memref<1x128xf32, #tpu.memory_space<vmem>>, vector<1x128xf32>
      tpu.vector_store %arg22[%c0_323, %c0_324], %650 {strides = array<i32>} : memref<1x128xf32, #tpu.memory_space<vmem>>, vector<1x128xf32>,
    } else {
    }
    return
  }
  func.func @transform_0(%arg0: i32, %arg1: memref<96xi32, #tpu.memory_space<smem>>, %arg2: memref<96xi32, #tpu.memory_space<smem>>, %arg3: memref<3xi32, #tpu.memory_space<smem>>) -> (i32, i32) {
    %c0_i32 = arith.constant 0 : i32
    %c0_i32_0 = arith.constant 0 : i32
    return %arg0, %c0_i32 : i32, i32
  }
  func.func @transform_1(%arg0: i32, %arg1: memref<96xi32, #tpu.memory_space<smem>>, %arg2: memref<96xi32, #tpu.memory_space<smem>>, %arg3: memref<3xi32, #tpu.memory_space<smem>>) -> (i32, i32) {
    %c0_i32 = arith.constant 0 : i32
    %c0_i32_0 = arith.constant 0 : i32
    %c0_i32_1 = arith.constant 0 : i32
    return %c0_i32, %c0_i32_0 : i32, i32
  }
  func.func @transform_2(%arg0: i32, %arg1: memref<96xi32, #tpu.memory_space<smem>>, %arg2: memref<96xi32, #tpu.memory_space<smem>>, %arg3: memref<3xi32, #tpu.memory_space<smem>>) -> (i32, i32) {
    %c0_i32 = arith.constant 0 : i32
    %c0_i32_0 = arith.constant 0 : i32
    %c0_i32_1 = arith.constant 0 : i32
    return %c0_i32, %c0_i32_0 : i32, i32
  }
  func.func @transform_3(%arg0: i32, %arg1: memref<96xi32, #tpu.memory_space<smem>>, %arg2: memref<96xi32, #tpu.memory_space<smem>>, %arg3: memref<3xi32, #tpu.memory_space<smem>>) -> (i32, i32) {
    %c0_i32 = arith.constant 0 : i32
    %c0_i32_0 = arith.constant 0 : i32
    %c0_i32_1 = arith.constant 0 : i32
    return %c0_i32, %c0_i32_0 : i32, i32
  }
  func.func @transform_4(%arg0: i32, %arg1: memref<96xi32, #tpu.memory_space<smem>>, %arg2: memref<96xi32, #tpu.memory_space<smem>>, %arg3: memref<3xi32, #tpu.memory_space<smem>>) -> (i32, i32) {
    %c0_i32 = arith.constant 0 : i32
    %c0_i32_0 = arith.constant 0 : i32
    %c0_i32_1 = arith.constant 0 : i32
    return %c0_i32, %c0_i32_0 : i32, i32
  }
  func.func @transform_5(%arg0: i32, %arg1: memref<96xi32, #tpu.memory_space<smem>>, %arg2: memref<96xi32, #tpu.memory_space<smem>>, %arg3: memref<3xi32, #tpu.memory_space<smem>>) -> (i32, i32) {
    %c0_i32 = arith.constant 0 : i32
    %c0_i32_0 = arith.constant 0 : i32
    %c0_i32_1 = arith.constant 0 : i32
    return %c0_i32, %c0_i32_0 : i32, i32
  }
  func.func @transform_6(%arg0: i32, %arg1: memref<96xi32, #tpu.memory_space<smem>>, %arg2: memref<96xi32, #tpu.memory_space<smem>>, %arg3: memref<3xi32, #tpu.memory_space<smem>>) -> (i32, i32) {
    %c0_i32 = arith.constant 0 : i32
    %c0_i32_0 = arith.constant 0 : i32
    %c0_i32_1 = arith.constant 0 : i32
    return %c0_i32, %c0_i32_0 : i32, i32
  }
  func.func @transform_7(%arg0: i32, %arg1: memref<96xi32, #tpu.memory_space<smem>>, %arg2: memref<96xi32, #tpu.memory_space<smem>>, %arg3: memref<3xi32, #tpu.memory_space<smem>>) -> (i32, i32) {
    %c0_i32 = arith.constant 0 : i32
    %c0_i32_0 = arith.constant 0 : i32
    %c0_i32_1 = arith.constant 0 : i32
    return %c0_i32, %c0_i32_0 : i32, i32
  }
  func.func @transform_8(%arg0: i32, %arg1: memref<96xi32, #tpu.memory_space<smem>>, %arg2: memref<96xi32, #tpu.memory_space<smem>>, %arg3: memref<3xi32, #tpu.memory_space<smem>>) -> (i32, i32) {
    %c0_i32 = arith.constant 0 : i32
    %c0_i32_0 = arith.constant 0 : i32
    %c0_i32_1 = arith.constant 0 : i32
    return %c0_i32, %c0_i32_0 : i32, i32
  }
  func.func @transform_9(%arg0: i32, %arg1: memref<96xi32, #tpu.memory_space<smem>>, %arg2: memref<96xi32, #tpu.memory_space<smem>>, %arg3: memref<3xi32, #tpu.memory_space<smem>>) -> (i32, i32) {
    %c0_i32 = arith.constant 0 : i32
    %c0_i32_0 = arith.constant 0 : i32
    %c0_i32_1 = arith.constant 0 : i32
    return %c0_i32, %c0_i32_0 : i32, i32
  }
  func.func @transform_10(%arg0: i32, %arg1: memref<96xi32, #tpu.memory_space<smem>>, %arg2: memref<96xi32, #tpu.memory_space<smem>>, %arg3: memref<3xi32, #tpu.memory_space<smem>>) -> (i32, i32) {
    %c0_i32 = arith.constant 0 : i32
    %c0_i32_0 = arith.constant 0 : i32
    %c0_i32_1 = arith.constant 0 : i32
    return %c0_i32, %c0_i32_0 : i32, i32
  }
  func.func @transform_11(%arg0: i32, %arg1: memref<96xi32, #tpu.memory_space<smem>>, %arg2: memref<96xi32, #tpu.memory_space<smem>>, %arg3: memref<3xi32, #tpu.memory_space<smem>>) -> (i32, i32) {
    %c0_i32 = arith.constant 0 : i32
    %c0_i32_0 = arith.constant 0 : i32
    %c0_i32_1 = arith.constant 0 : i32
    return %c0_i32, %c0_i32_0 : i32, i32
  }
  func.func @transform_12(%arg0: i32, %arg1: memref<96xi32, #tpu.memory_space<smem>>, %arg2: memref<96xi32, #tpu.memory_space<smem>>, %arg3: memref<3xi32, #tpu.memory_space<smem>>) -> (i32, i32) {
    %c0_i32 = arith.constant 0 : i32
    %c0_i32_0 = arith.constant 0 : i32
    %c0_i32_1 = arith.constant 0 : i32
    return %c0_i32, %c0_i32_0 : i32, i32
  }
  func.func @transform_13(%arg0: i32, %arg1: memref<96xi32, #tpu.memory_space<smem>>, %arg2: memref<96xi32, #tpu.memory_space<smem>>, %arg3: memref<3xi32, #tpu.memory_space<smem>>) -> (i32, i32) {
    %c0_i32 = arith.constant 0 : i32
    %c0_i32_0 = arith.constant 0 : i32
    %c0_i32_1 = arith.constant 0 : i32
    return %c0_i32, %c0_i32_0 : i32, i32
  }
  func.func @transform_14(%arg0: i32, %arg1: memref<96xi32, #tpu.memory_space<smem>>, %arg2: memref<96xi32, #tpu.memory_space<smem>>, %arg3: memref<3xi32, #tpu.memory_space<smem>>) -> (i32, i32) {
    %c0_i32 = arith.constant 0 : i32
    %c0_i32_0 = arith.constant 0 : i32
    %c0_i32_1 = arith.constant 0 : i32
    return %c0_i32, %c0_i32_0 : i32, i32
  }
  func.func @transform_15(%arg0: i32, %arg1: memref<96xi32, #tpu.memory_space<smem>>, %arg2: memref<96xi32, #tpu.memory_space<smem>>, %arg3: memref<3xi32, #tpu.memory_space<smem>>) -> (i32, i32) {
    %c0_i32 = arith.constant 0 : i32
    %c0_i32_0 = arith.constant 0 : i32
    %c0_i32_1 = arith.constant 0 : i32
    return %c0_i32, %c0_i32_0 : i32, i32
  }
  func.func @transform_16(%arg0: i32, %arg1: memref<96xi32, #tpu.memory_space<smem>>, %arg2: memref<96xi32, #tpu.memory_space<smem>>, %arg3: memref<3xi32, #tpu.memory_space<smem>>) -> (i32, i32) {
    %c0_i32 = arith.constant 0 : i32
    %c0_i32_0 = arith.constant 0 : i32
    %c0_i32_1 = arith.constant 0 : i32
    return %c0_i32, %c0_i32_0 : i32, i32
  }
  func.func @transform_17(%arg0: i32, %arg1: memref<96xi32, #tpu.memory_space<smem>>, %arg2: memref<96xi32, #tpu.memory_space<smem>>, %arg3: memref<3xi32, #tpu.memory_space<smem>>) -> (i32, i32) {
    %c0_i32 = arith.constant 0 : i32
    %c0_i32_0 = arith.constant 0 : i32
    %c0_i32_1 = arith.constant 0 : i32
    return %c0_i32, %c0_i32_0 : i32, i32
  }
  func.func @transform_18(%arg0: i32, %arg1: memref<96xi32, #tpu.memory_space<smem>>, %arg2: memref<96xi32, #tpu.memory_space<smem>>, %arg3: memref<3xi32, #tpu.memory_space<smem>>) -> (i32, i32) {
    %c0_i32 = arith.constant 0 : i32
    %c0_i32_0 = arith.constant 0 : i32
    %c0_i32_1 = arith.constant 0 : i32
    return %c0_i32, %c0_i32_0 : i32, i32
  }
}

</mosaic_0001>

<llo_original>
// kernel: gated_drgt_forward.1
$region0: #{gated_drgt_forward.1}
  #allocation0 [shape = 'u32[]', space=smem, size = 0x4, offset = 0x4, fixed_abs, tag = 'smem constant byte address 0x4 - core index']
  #allocation1 [shape = 'u32[144,128]{1,0:T(1,128)}', space=vmem, size = 0x12000, scoped, tag = 'internal scratch']
  #allocation2 [shape = 'f32[32,128]{1,0:T(8,128)}', space=vmem, size = 0x4000, scoped, tag = 'scratch operand']
  #allocation3 [shape = 'f32[32,128]{1,0:T(8,128)}', space=vmem, size = 0x4000, scoped, tag = 'scratch operand']
  #allocation4 [shape = 'f32[32,128]{1,0:T(8,128)}', space=vmem, size = 0x4000, scoped, tag = 'scratch operand']
  #allocation5 [shape = 'f32[8,128]{1,0:T(8,128)}', space=vmem, size = 0x1000, scoped, tag = 'scratch operand']
  #allocation6 [shape = 'f32[8,384]{1,0:T(8,128)}', space=vmem, size = 0x3000, scoped, tag = 'scratch operand']
  #allocation7 [shape = 's32[1]{0}', space=sflag, size = 0x4, scoped, tag = 'scoped memory for gated_drgt_forward.1']
  #allocation8 [shape = 'u8[512]{0}', space=smem, size = 0x200, scoped, tag = 'prefetched SMEM operand 0']
  #allocation9 [shape = 'u8[512]{0}', space=smem, size = 0x200, scoped, tag = 'prefetched SMEM operand 1']
  #allocation10 [shape = 'u8[512]{0}', space=smem, size = 0x200, scoped, tag = 'prefetched SMEM operand 2']
  %s0 = inlined_call_operand.hbm [shape: s32[96], index: 0, kind: input, shape index: {}]
  %s1 = inlined_call_operand.hbm [shape: s32[96], index: 1, kind: input, shape index: {}]
  %s2 = inlined_call_operand.hbm [shape: s32[3], index: 2, kind: input, shape index: {}]
  %s3 = inlined_call_operand.hbm [shape: f32[24,128], index: 3, kind: input, shape index: {}]
  %s4 = inlined_call_operand.hbm [shape: f32[16,128], index: 4, kind: input, shape index: {}]
  %s5 = inlined_call_operand.hbm [shape: bf16[384,256], index: 5, kind: input, shape index: {}]
  %s6 = inlined_call_operand.hbm [shape: f32[1,256], index: 6, kind: input, shape index: {}]
  %s7 = inlined_call_operand.hbm [shape: bf16[128,128], index: 7, kind: input, shape index: {}]
  %s8 = inlined_call_operand.hbm [shape: bf16[256,128], index: 8, kind: input, shape index: {}]
  %s9 = inlined_call_operand.hbm [shape: f32[1,128], index: 9, kind: input, shape index: {}]
  %s10 = inlined_call_operand.hbm [shape: f32[1,128], index: 10, kind: input, shape index: {}]
  %s11 = inlined_call_operand.hbm [shape: bf16[128,384], index: 11, kind: input, shape index: {}]
  %s12 = inlined_call_operand.hbm [shape: f32[1,384], index: 12, kind: input, shape index: {}]
  %s13 = inlined_call_operand.hbm [shape: bf16[128,384], index: 13, kind: input, shape index: {}]
  %s14 = inlined_call_operand.hbm [shape: f32[1,384], index: 14, kind: input, shape index: {}]
  %s15 = inlined_call_operand.hbm [shape: bf16[128,128], index: 15, kind: input, shape index: {}]
  %s16 = inlined_call_operand.hbm [shape: f32[1,128], index: 16, kind: input, shape index: {}]
  %s17 = inlined_call_operand.hbm [shape: bf16[256,256], index: 17, kind: input, shape index: {}]
  %s18 = inlined_call_operand.hbm [shape: f32[1,256], index: 18, kind: input, shape index: {}]
  %s19 = inlined_call_operand.hbm [shape: bf16[128,128], index: 19, kind: input, shape index: {}]
  %s20 = inlined_call_operand.hbm [shape: f32[1,128], index: 20, kind: input, shape index: {}]
  %s21 = inlined_call_operand.hbm [shape: f32[1,128], index: 21, kind: output, shape index: {}]
  %s22 = sld [smem:[#allocation0]]
  $region185: #{gated_drgt_forward.1} parent=0
    _
  %s24 = ssub.s32 1, %s22
  %s25 = scalar_select 0, %s24, %s22
  %27 = dma.hbm_to_smem %s0, 16, [#allocation8], [#allocation7]
  %29 = dma.hbm_to_smem %s1, 16, [#allocation9], [#allocation7]
  %31 = dma.hbm_to_smem %s2, 16, [#allocation10], [#allocation7]
  %32 = dma.done [#allocation7], 48
  %33 = sfence
  $region1: #{gated_drgt_forward.1} parent=0
    #allocation11 [shape = 'u8[8192]{0}', space=vmem, size = 0x2000, scoped, tag = 'input window, operand 3']
    #allocation12 [shape = 's32[2]{0}', space=sflag, size = 0x8, scoped, tag = 'scoped memory for gated_drgt_forward.1']
    #allocation13 [shape = 's32[2]{0}', space=sflag, size = 0x8, scoped, tag = 'scoped memory for gated_drgt_forward.1']
    #allocation14 [shape = 'u8[8192]{0}', space=vmem, size = 0x2000, scoped, tag = 'input window, operand 4, single buffered']
    #allocation15 [shape = 's32[1]{0}', space=sflag, size = 0x4, scoped, tag = 'scoped memory for gated_drgt_forward.1']
    #allocation16 [shape = 'u8[196608]{0}', space=vmem, size = 0x30000, scoped, tag = 'input window, operand 5, single buffered']
    #allocation17 [shape = 'u8[1024]{0}', space=vmem, size = 0x400, scoped, tag = 'input window, operand 6, single buffered']
    #allocation18 [shape = 's32[1]{0}', space=sflag, size = 0x4, scoped, tag = 'scoped memory for gated_drgt_forward.1']
    #allocation19 [shape = 'u8[32768]{0}', space=vmem, size = 0x8000, scoped, tag = 'input window, operand 7, single buffered']
    #allocation20 [shape = 'u8[65536]{0}', space=vmem, size = 0x10000, scoped, tag = 'input window, operand 8, single buffered']
    #allocation21 [shape = 's32[1]{0}', space=sflag, size = 0x4, scoped, tag = 'scoped memory for gated_drgt_forward.1']
    #allocation22 [shape = 'u8[512]{0}', space=vmem, size = 0x400, scoped, tag = 'input window, operand 9, single buffered']
    #allocation23 [shape = 'u8[512]{0}', space=vmem, size = 0x400, scoped, tag = 'input window, operand 10, single buffered']
    #allocation24 [shape = 's32[1]{0}', space=sflag, size = 0x4, scoped, tag = 'scoped memory for gated_drgt_forward.1']
    #allocation25 [shape = 'u8[98304]{0}', space=vmem, size = 0x18000, scoped, tag = 'input window, operand 11, single buffered']
    #allocation26 [shape = 'u8[1536]{0}', space=vmem, size = 0x800, scoped, tag = 'input window, operand 12, single buffered']
    #allocation27 [shape = 's32[1]{0}', space=sflag, size = 0x4, scoped, tag = 'scoped memory for gated_drgt_forward.1']
    #allocation28 [shape = 'u8[98304]{0}', space=vmem, size = 0x18000, scoped, tag = 'input window, operand 13, single buffered']
    #allocation29 [shape = 'u8[1536]{0}', space=vmem, size = 0x800, scoped, tag = 'input window, operand 14, single buffered']
    #allocation30 [shape = 's32[1]{0}', space=sflag, size = 0x4, scoped, tag = 'scoped memory for gated_drgt_forward.1']
    #allocation31 [shape = 'u8[32768]{0}', space=vmem, size = 0x8000, scoped, tag = 'input window, operand 15, single buffered']
    #allocation32 [shape = 'u8[512]{0}', space=vmem, size = 0x400, scoped, tag = 'input window, operand 16, single buffered']
    #allocation33 [shape = 's32[1]{0}', space=sflag, size = 0x4, scoped, tag = 'scoped memory for gated_drgt_forward.1']
    #allocation34 [shape = 'u8[131072]{0}', space=vmem, size = 0x20000, scoped, tag = 'input window, operand 17, single buffered']
    #allocation35 [shape = 'u8[1024]{0}', space=vmem, size = 0x400, scoped, tag = 'input window, operand 18, single buffered']
    #allocation36 [shape = 's32[1]{0}', space=sflag, size = 0x4, scoped, tag = 'scoped memory for gated_drgt_forward.1']
    #allocation37 [shape = 'u8[32768]{0}', space=vmem, size = 0x8000, scoped, tag = 'input window, operand 19, single buffered']
    #allocation38 [shape = 'u8[512]{0}', space=vmem, size = 0x400, scoped, tag = 'input window, operand 20, single buffered']
    #allocation39 [shape = 's32[1]{0}', space=sflag, size = 0x4, scoped, tag = 'scoped memory for gated_drgt_forward.1']
    #allocation40 [shape = 'u8[512]{0}', space=vmem, size = 0x400, scoped, tag = 'output window, operand 0, single buffered']
    %34 = vsyncpa [#allocation12], 0
    %s35 = scalar_lea.sflag [#allocation12], 1
    %36 = vsyncpa %s35, 0
    %37 = vsyncpa [#allocation15], 0
    %38 = vsyncpa [#allocation18], 0
    %39 = vsyncpa [#allocation21], 0
    %40 = vsyncpa [#allocation24], 0
    %41 = vsyncpa [#allocation27], 0
    %42 = vsyncpa [#allocation30], 0
    %43 = vsyncpa [#allocation33], 0
    %44 = vsyncpa [#allocation36], 0
    %45 = vsyncpa [#allocation39], 0
    %46 = vsyncpa [#allocation13], 0
    loop: start=0, step=1, limit=5
    $region2: #{gated_drgt_forward.1} parent=1 // loop_pre_header
      _
    $region3: #{gated_drgt_forward.1} parent=1 // loop_header
      %s48 = sphi 0, %s52
      %p49 = scmp.ge.s32.totalorder %s48, 5
      %s58 = sphi 0, %s60
      %s61 = sphi 0, %s58
      %s62 = sphi 0, %s61
      %s78 = sphi 0, %s62
      %s82 = sphi 0, %s82
      %s84 = sphi 0, %s82
      %s85 = sphi 0, %s84
      %s99 = sphi 0, %s85
      %s103 = sphi 0, %s103
      %s105 = sphi 0, %s103
      %s106 = sphi 0, %s105
      %s120 = sphi 0, %s106
      %s124 = sphi 0, %s124
      %s126 = sphi 0, %s124
      %s127 = sphi 0, %s126
      %s141 = sphi 0, %s127
      %s145 = sphi 0, %s145
      %s147 = sphi 0, %s145
      %s148 = sphi 0, %s147
      %s162 = sphi 0, %s148
      %s166 = sphi 0, %s166
      %s168 = sphi 0, %s166
      %s169 = sphi 0, %s168
      %s183 = sphi 0, %s169
      %s187 = sphi 0, %s187
      %s189 = sphi 0, %s187
      %s190 = sphi 0, %s189
      %s204 = sphi 0, %s190
      %s208 = sphi 0, %s208
      %s210 = sphi 0, %s208
      %s211 = sphi 0, %s210
      %s225 = sphi 0, %s211
      %s229 = sphi 0, %s229
      %s231 = sphi 0, %s229
      %s232 = sphi 0, %s231
      %s246 = sphi 0, %s232
      %s250 = sphi 0, %s250
      %s252 = sphi 0, %s250
      %s253 = sphi 0, %s252
      %s267 = sphi 0, %s253
      %s271 = sphi 0, %s271
      %s273 = sphi 0, %s271
      %s274 = sphi 0, %s273
      %s288 = sphi 0, %s274
      %s292 = sphi 0, %s292
      %s294 = sphi 0, %s292
      %s295 = sphi 0, %s294
      %s309 = sphi 0, %s295
      %s313 = sphi 0, %s313
      %s315 = sphi 0, %s313
      %s316 = sphi 0, %s315
      %s330 = sphi 0, %s316
      %s334 = sphi 0, %s334
      %s336 = sphi 0, %s334
      %s337 = sphi 0, %s336
      %s351 = sphi 0, %s337
      %s355 = sphi 0, %s355
      %s357 = sphi 0, %s355
      %s358 = sphi 0, %s357
      %s372 = sphi 0, %s358
      %s376 = sphi 0, %s376
      %s378 = sphi 0, %s376
      %s379 = sphi 0, %s378
      %s393 = sphi 0, %s379
      %s397 = sphi 0, %s397
      %s399 = sphi 0, %s397
      %s400 = sphi 0, %s399
      %s414 = sphi 0, %s400
      %s418 = sphi 0, %s418
      %s420 = sphi 0, %s418
      %s421 = sphi 0, %s420
      %s435 = sphi 0, %s421
      %s439 = sphi 0, %s439
      %s441 = sphi 0, %s439
      %s442 = sphi 0, %s441
      %s456 = sphi 0, %s442
    $region4: #{gated_drgt_forward.1} parent=1 // loop_header_branch
      %51 = sbr.rel (%p49) target = $region8
    $region5: #{gated_drgt_forward.1} parent=1 // loop_body
      %s53 = ssub.s32 %s48, 1
      %s54 = ssub.s32 %s48, 2
      %s55 = sadd.s32 %s48, 1
      %s56 = ssub.s32 %s48, %s55
      %p57 = scmp.eq.s32.totalorder %s56, 0
      %s59 = sadd.s32 %s58, 1
      %s60 = scalar_select %p57, %s58, %s59
      %p63 = pneg %p57
      %p64 = scmp.eq.s32.totalorder %s48, 2
      %p65 = por %p63, %p64
      %p66 = scmp.ne.s32.totalorder %s58, %s61
      %p67 = scmp.eq.s32.totalorder %s48, 0
      %p68 = por %p66, %p67
      %p69 = scmp.ne.s32.totalorder %s58, %s61
      %p70 = scmp.eq.s32.totalorder %s53, 2
      %p71 = por %p69, %p70
      %p72 = scmp.ne.s32.totalorder %s61, %s62
      %p73 = scmp.eq.s32.totalorder %s53, 0
      %p74 = por %p72, %p73
      %p75 = scmp.ne.s32.totalorder %s61, %s62
      %p76 = scmp.eq.s32.totalorder %s54, 2
      %p77 = por %p75, %p76
      %p79 = scmp.ne.s32.totalorder %s62, %s78
      %p80 = scmp.eq.s32.totalorder %s54, 0
      %p81 = por %p79, %p80
      %s83 = sadd.s32 %s82, 1
      %p86 = scmp.eq.s32.totalorder %s48, 2
      %p87 = scmp.ne.s32.totalorder %s82, %s84
      %p88 = scmp.eq.s32.totalorder %s48, 0
      %p89 = por %p87, %p88
      %p90 = scmp.ne.s32.totalorder %s82, %s84
      %p91 = scmp.eq.s32.totalorder %s53, 2
      %p92 = por %p90, %p91
      %p93 = scmp.ne.s32.totalorder %s84, %s85
      %p94 = scmp.eq.s32.totalorder %s53, 0
      %p95 = por %p93, %p94
      %p96 = scmp.ne.s32.totalorder %s84, %s85
      %p97 = scmp.eq.s32.totalorder %s54, 2
      %p98 = por %p96, %p97
      %p100 = scmp.ne.s32.totalorder %s85, %s99
      %p101 = scmp.eq.s32.totalorder %s54, 0
      %p102 = por %p100, %p101
      %s104 = sadd.s32 %s103, 1
      %p107 = scmp.eq.s32.totalorder %s48, 2
      %p108 = scmp.ne.s32.totalorder %s103, %s105
      %p109 = scmp.eq.s32.totalorder %s48, 0
      %p110 = por %p108, %p109
      %p111 = scmp.ne.s32.totalorder %s103, %s105
      %p112 = scmp.eq.s32.totalorder %s53, 2
      %p113 = por %p111, %p112
      %p114 = scmp.ne.s32.totalorder %s105, %s106
      %p115 = scmp.eq.s32.totalorder %s53, 0
      %p116 = por %p114, %p115
      %p117 = scmp.ne.s32.totalorder %s105, %s106
      %p118 = scmp.eq.s32.totalorder %s54, 2
      %p119 = por %p117, %p118
      %p121 = scmp.ne.s32.totalorder %s106, %s120
      %p122 = scmp.eq.s32.totalorder %s54, 0
      %p123 = por %p121, %p122
      %s125 = sadd.s32 %s124, 1
      %p128 = scmp.eq.s32.totalorder %s48, 2
      %p129 = scmp.ne.s32.totalorder %s124, %s126
      %p130 = scmp.eq.s32.totalorder %s48, 0
      %p131 = por %p129, %p130
      %p132 = scmp.ne.s32.totalorder %s124, %s126
      %p133 = scmp.eq.s32.totalorder %s53, 2
      %p134 = por %p132, %p133
      %p135 = scmp.ne.s32.totalorder %s126, %s127
      %p136 = scmp.eq.s32.totalorder %s53, 0
      %p137 = por %p135, %p136
      %p138 = scmp.ne.s32.totalorder %s126, %s127
      %p139 = scmp.eq.s32.totalorder %s54, 2
      %p140 = por %p138, %p139
      %p142 = scmp.ne.s32.totalorder %s127, %s141
      %p143 = scmp.eq.s32.totalorder %s54, 0
      %p144 = por %p142, %p143
      %s146 = sadd.s32 %s145, 1
      %p149 = scmp.eq.s32.totalorder %s48, 2
      %p150 = scmp.ne.s32.totalorder %s145, %s147
      %p151 = scmp.eq.s32.totalorder %s48, 0
      %p152 = por %p150, %p151
      %p153 = scmp.ne.s32.totalorder %s145, %s147
      %p154 = scmp.eq.s32.totalorder %s53, 2
      %p155 = por %p153, %p154
      %p156 = scmp.ne.s32.totalorder %s147, %s148
      %p157 = scmp.eq.s32.totalorder %s53, 0
      %p158 = por %p156, %p157
      %p159 = scmp.ne.s32.totalorder %s147, %s148
      %p160 = scmp.eq.s32.totalorder %s54, 2
      %p161 = por %p159, %p160
      %p163 = scmp.ne.s32.totalorder %s148, %s162
      %p164 = scmp.eq.s32.totalorder %s54, 0
      %p165 = por %p163, %p164
      %s167 = sadd.s32 %s166, 1
      %p170 = scmp.eq.s32.totalorder %s48, 2
      %p171 = scmp.ne.s32.totalorder %s166, %s168
      %p172 = scmp.eq.s32.totalorder %s48, 0
      %p173 = por %p171, %p172
      %p174 = scmp.ne.s32.totalorder %s166, %s168
      %p175 = scmp.eq.s32.totalorder %s53, 2
      %p176 = por %p174, %p175
      %p177 = scmp.ne.s32.totalorder %s168, %s169
      %p178 = scmp.eq.s32.totalorder %s53, 0
      %p179 = por %p177, %p178
      %p180 = scmp.ne.s32.totalorder %s168, %s169
      %p181 = scmp.eq.s32.totalorder %s54, 2
      %p182 = por %p180, %p181
      %p184 = scmp.ne.s32.totalorder %s169, %s183
      %p185 = scmp.eq.s32.totalorder %s54, 0
      %p186 = por %p184, %p185
      %s188 = sadd.s32 %s187, 1
      %p191 = scmp.eq.s32.totalorder %s48, 2
      %p192 = scmp.ne.s32.totalorder %s187, %s189
      %p193 = scmp.eq.s32.totalorder %s48, 0
      %p194 = por %p192, %p193
      %p195 = scmp.ne.s32.totalorder %s187, %s189
      %p196 = scmp.eq.s32.totalorder %s53, 2
      %p197 = por %p195, %p196
      %p198 = scmp.ne.s32.totalorder %s189, %s190
      %p199 = scmp.eq.s32.totalorder %s53, 0
      %p200 = por %p198, %p199
      %p201 = scmp.ne.s32.totalorder %s189, %s190
      %p202 = scmp.eq.s32.totalorder %s54, 2
      %p203 = por %p201, %p202
      %p205 = scmp.ne.s32.totalorder %s190, %s204
      %p206 = scmp.eq.s32.totalorder %s54, 0
      %p207 = por %p205, %p206
      %s209 = sadd.s32 %s208, 1
      %p212 = scmp.eq.s32.totalorder %s48, 2
      %p213 = scmp.ne.s32.totalorder %s208, %s210
      %p214 = scmp.eq.s32.totalorder %s48, 0
      %p215 = por %p213, %p214
      %p216 = scmp.ne.s32.totalorder %s208, %s210
      %p217 = scmp.eq.s32.totalorder %s53, 2
      %p218 = por %p216, %p217
      %p219 = scmp.ne.s32.totalorder %s210, %s211
      %p220 = scmp.eq.s32.totalorder %s53, 0
      %p221 = por %p219, %p220
      %p222 = scmp.ne.s32.totalorder %s210, %s211
      %p223 = scmp.eq.s32.totalorder %s54, 2
      %p224 = por %p222, %p223
      %p226 = scmp.ne.s32.totalorder %s211, %s225
      %p227 = scmp.eq.s32.totalorder %s54, 0
      %p228 = por %p226, %p227
      %s230 = sadd.s32 %s229, 1
      %p233 = scmp.eq.s32.totalorder %s48, 2
      %p234 = scmp.ne.s32.totalorder %s229, %s231
      %p235 = scmp.eq.s32.totalorder %s48, 0
      %p236 = por %p234, %p235
      %p237 = scmp.ne.s32.totalorder %s229, %s231
      %p238 = scmp.eq.s32.totalorder %s53, 2
      %p239 = por %p237, %p238
      %p240 = scmp.ne.s32.totalorder %s231, %s232
      %p241 = scmp.eq.s32.totalorder %s53, 0
      %p242 = por %p240, %p241
      %p243 = scmp.ne.s32.totalorder %s231, %s232
      %p244 = scmp.eq.s32.totalorder %s54, 2
      %p245 = por %p243, %p244
      %p247 = scmp.ne.s32.totalorder %s232, %s246
      %p248 = scmp.eq.s32.totalorder %s54, 0
      %p249 = por %p247, %p248
      %s251 = sadd.s32 %s250, 1
      %p254 = scmp.eq.s32.totalorder %s48, 2
      %p255 = scmp.ne.s32.totalorder %s250, %s252
      %p256 = scmp.eq.s32.totalorder %s48, 0
      %p257 = por %p255, %p256
      %p258 = scmp.ne.s32.totalorder %s250, %s252
      %p259 = scmp.eq.s32.totalorder %s53, 2
      %p260 = por %p258, %p259
      %p261 = scmp.ne.s32.totalorder %s252, %s253
      %p262 = scmp.eq.s32.totalorder %s53, 0
      %p263 = por %p261, %p262
      %p264 = scmp.ne.s32.totalorder %s252, %s253
      %p265 = scmp.eq.s32.totalorder %s54, 2
      %p266 = por %p264, %p265
      %p268 = scmp.ne.s32.totalorder %s253, %s267
      %p269 = scmp.eq.s32.totalorder %s54, 0
      %p270 = por %p268, %p269
      %s272 = sadd.s32 %s271, 1
      %p275 = scmp.eq.s32.totalorder %s48, 2
      %p276 = scmp.ne.s32.totalorder %s271, %s273
      %p277 = scmp.eq.s32.totalorder %s48, 0
      %p278 = por %p276, %p277
      %p279 = scmp.ne.s32.totalorder %s271, %s273
      %p280 = scmp.eq.s32.totalorder %s53, 2
      %p281 = por %p279, %p280
      %p282 = scmp.ne.s32.totalorder %s273, %s274
      %p283 = scmp.eq.s32.totalorder %s53, 0
      %p284 = por %p282, %p283
      %p285 = scmp.ne.s32.totalorder %s273, %s274
      %p286 = scmp.eq.s32.totalorder %s54, 2
      %p287 = por %p285, %p286
      %p289 = scmp.ne.s32.totalorder %s274, %s288
      %p290 = scmp.eq.s32.totalorder %s54, 0
      %p291 = por %p289, %p290
      %s293 = sadd.s32 %s292, 1
      %p296 = scmp.eq.s32.totalorder %s48, 2
      %p297 = scmp.ne.s32.totalorder %s292, %s294
      %p298 = scmp.eq.s32.totalorder %s48, 0
      %p299 = por %p297, %p298
      %p300 = scmp.ne.s32.totalorder %s292, %s294
      %p301 = scmp.eq.s32.totalorder %s53, 2
      %p302 = por %p300, %p301
      %p303 = scmp.ne.s32.totalorder %s294, %s295
      %p304 = scmp.eq.s32.totalorder %s53, 0
      %p305 = por %p303, %p304
      %p306 = scmp.ne.s32.totalorder %s294, %s295
      %p307 = scmp.eq.s32.totalorder %s54, 2
      %p308 = por %p306, %p307
      %p310 = scmp.ne.s32.totalorder %s295, %s309
      %p311 = scmp.eq.s32.totalorder %s54, 0
      %p312 = por %p310, %p311
      %s314 = sadd.s32 %s313, 1
      %p317 = scmp.eq.s32.totalorder %s48, 2
      %p318 = scmp.ne.s32.totalorder %s313, %s315
      %p319 = scmp.eq.s32.totalorder %s48, 0
      %p320 = por %p318, %p319
      %p321 = scmp.ne.s32.totalorder %s313, %s315
      %p322 = scmp.eq.s32.totalorder %s53, 2
      %p323 = por %p321, %p322
      %p324 = scmp.ne.s32.totalorder %s315, %s316
      %p325 = scmp.eq.s32.totalorder %s53, 0
      %p326 = por %p324, %p325
      %p327 = scmp.ne.s32.totalorder %s315, %s316
      %p328 = scmp.eq.s32.totalorder %s54, 2
      %p329 = por %p327, %p328
      %p331 = scmp.ne.s32.totalorder %s316, %s330
      %p332 = scmp.eq.s32.totalorder %s54, 0
      %p333 = por %p331, %p332
      %s335 = sadd.s32 %s334, 1
      %p338 = scmp.eq.s32.totalorder %s48, 2
      %p339 = scmp.ne.s32.totalorder %s334, %s336
      %p340 = scmp.eq.s32.totalorder %s48, 0
      %p341 = por %p339, %p340
      %p342 = scmp.ne.s32.totalorder %s334, %s336
      %p343 = scmp.eq.s32.totalorder %s53, 2
      %p344 = por %p342, %p343
      %p345 = scmp.ne.s32.totalorder %s336, %s337
      %p346 = scmp.eq.s32.totalorder %s53, 0
      %p347 = por %p345, %p346
      %p348 = scmp.ne.s32.totalorder %s336, %s337
      %p349 = scmp.eq.s32.totalorder %s54, 2
      %p350 = por %p348, %p349
      %p352 = scmp.ne.s32.totalorder %s337, %s351
      %p353 = scmp.eq.s32.totalorder %s54, 0
      %p354 = por %p352, %p353
      %s356 = sadd.s32 %s355, 1
      %p359 = scmp.eq.s32.totalorder %s48, 2
      %p360 = scmp.ne.s32.totalorder %s355, %s357
      %p361 = scmp.eq.s32.totalorder %s48, 0
      %p362 = por %p360, %p361
      %p363 = scmp.ne.s32.totalorder %s355, %s357
      %p364 = scmp.eq.s32.totalorder %s53, 2
      %p365 = por %p363, %p364
      %p366 = scmp.ne.s32.totalorder %s357, %s358
      %p367 = scmp.eq.s32.totalorder %s53, 0
      %p368 = por %p366, %p367
      %p369 = scmp.ne.s32.totalorder %s357, %s358
      %p370 = scmp.eq.s32.totalorder %s54, 2
      %p371 = por %p369, %p370
      %p373 = scmp.ne.s32.totalorder %s358, %s372
      %p374 = scmp.eq.s32.totalorder %s54, 0
      %p375 = por %p373, %p374
      %s377 = sadd.s32 %s376, 1
      %p380 = scmp.eq.s32.totalorder %s48, 2
      %p381 = scmp.ne.s32.totalorder %s376, %s378
      %p382 = scmp.eq.s32.totalorder %s48, 0
      %p383 = por %p381, %p382
      %p384 = scmp.ne.s32.totalorder %s376, %s378
      %p385 = scmp.eq.s32.totalorder %s53, 2
      %p386 = por %p384, %p385
      %p387 = scmp.ne.s32.totalorder %s378, %s379
      %p388 = scmp.eq.s32.totalorder %s53, 0
      %p389 = por %p387, %p388
      %p390 = scmp.ne.s32.totalorder %s378, %s379
      %p391 = scmp.eq.s32.totalorder %s54, 2
      %p392 = por %p390, %p391
      %p394 = scmp.ne.s32.totalorder %s379, %s393
      %p395 = scmp.eq.s32.totalorder %s54, 0
      %p396 = por %p394, %p395
      %s398 = sadd.s32 %s397, 1
      %p401 = scmp.eq.s32.totalorder %s48, 2
      %p402 = scmp.ne.s32.totalorder %s397, %s399
      %p403 = scmp.eq.s32.totalorder %s48, 0
      %p404 = por %p402, %p403
      %p405 = scmp.ne.s32.totalorder %s397, %s399
      %p406 = scmp.eq.s32.totalorder %s53, 2
      %p407 = por %p405, %p406
      %p408 = scmp.ne.s32.totalorder %s399, %s400
      %p409 = scmp.eq.s32.totalorder %s53, 0
      %p410 = por %p408, %p409
      %p411 = scmp.ne.s32.totalorder %s399, %s400
      %p412 = scmp.eq.s32.totalorder %s54, 2
      %p413 = por %p411, %p412
      %p415 = scmp.ne.s32.totalorder %s400, %s414
      %p416 = scmp.eq.s32.totalorder %s54, 0
      %p417 = por %p415, %p416
      %s419 = sadd.s32 %s418, 1
      %p422 = scmp.eq.s32.totalorder %s48, 2
      %p423 = scmp.ne.s32.totalorder %s418, %s420
      %p424 = scmp.eq.s32.totalorder %s48, 0
      %p425 = por %p423, %p424
      %p426 = scmp.ne.s32.totalorder %s418, %s420
      %p427 = scmp.eq.s32.totalorder %s53, 2
      %p428 = por %p426, %p427
      %p429 = scmp.ne.s32.totalorder %s420, %s421
      %p430 = scmp.eq.s32.totalorder %s53, 0
      %p431 = por %p429, %p430
      %p432 = scmp.ne.s32.totalorder %s420, %s421
      %p433 = scmp.eq.s32.totalorder %s54, 2
      %p434 = por %p432, %p433
      %p436 = scmp.ne.s32.totalorder %s421, %s435
      %p437 = scmp.eq.s32.totalorder %s54, 0
      %p438 = por %p436, %p437
      %s440 = sadd.s32 %s439, 1
      %p443 = scmp.eq.s32.totalorder %s48, 2
      %p444 = scmp.ne.s32.totalorder %s439, %s441
      %p445 = scmp.eq.s32.totalorder %s48, 0
      %p446 = por %p444, %p445
      %p447 = scmp.ne.s32.totalorder %s439, %s441
      %p448 = scmp.eq.s32.totalorder %s53, 2
      %p449 = por %p447, %p448
      %p450 = scmp.ne.s32.totalorder %s441, %s442
      %p451 = scmp.eq.s32.totalorder %s53, 0
      %p452 = por %p450, %p451
      %p453 = scmp.ne.s32.totalorder %s441, %s442
      %p454 = scmp.eq.s32.totalorder %s54, 2
      %p455 = por %p453, %p454
      %p457 = scmp.ne.s32.totalorder %s442, %s456
      %p458 = scmp.eq.s32.totalorder %s54, 0
      %p459 = por %p457, %p458
      %p460 = scmp.le.s32.totalorder 1, %s48
      %p461 = scmp.lt.s32.totalorder %s48, 4
      %p462 = pnand %p460, %p461
      %p463 = pneg %p462
      // Predicated region
      $region9: #{gated_drgt_forward.1} parent=5 // pred_check
        _
      $region10: #{gated_drgt_forward.1} parent=5 // pred_check_branch
        %465 = sbr.rel (%p462) target = $region12
      $region11: #{gated_drgt_forward.1} parent=5 // pred_region
        %s466 = ssub.s32 %s48, 1
        // Predicated region
        $region13: #{gated_drgt_forward.1} parent=11 // pred_check
          %p467 = pneg %p95
        $region14: #{gated_drgt_forward.1} parent=11 // pred_check_branch
          %469 = sbr.rel (%p467) target = $region16
        $region15: #{gated_drgt_forward.1} parent=11 // pred_region
          %s471 = ssub.s32 256, 256
          %472 = vsyncadd [#allocation15], %s471
          %s473 = sshll.u32 [#allocation14], 4
          %s474 = int_to_ptr.vmem [resolvable:$true] %s473
          %479 = dma.hbm_to_vmem [thread:$0]  %s4, 256, %s474, [#allocation15], 128, 128, 8
        $region16: #{gated_drgt_forward.1} parent=11 // pred_fallthru
          _
        // Predicated region
        $region17: #{gated_drgt_forward.1} parent=11 // pred_check
          %p480 = pneg %p116
        $region18: #{gated_drgt_forward.1} parent=11 // pred_check_branch
          %482 = sbr.rel (%p480) target = $region20
        $region19: #{gated_drgt_forward.1} parent=11 // pred_region
          %s484 = ssub.s32 6144, 6144
          %485 = vsyncadd [#allocation15], %s484
          %s486 = sshll.u32 [#allocation16], 4
          %s487 = int_to_ptr.vmem [resolvable:$true] %s486
          %492 = dma.hbm_to_vmem [thread:$0]  %s5, 6144, %s487, [#allocation15], 128, 128, 8
        $region20: #{gated_drgt_forward.1} parent=11 // pred_fallthru
          _
        // Predicated region
        $region21: #{gated_drgt_forward.1} parent=11 // pred_check
          %p493 = pneg %p137
        $region22: #{gated_drgt_forward.1} parent=11 // pred_check_branch
          %495 = sbr.rel (%p493) target = $region24
        $region23: #{gated_drgt_forward.1} parent=11 // pred_region
          %s497 = ssub.s32 32, 32
          %498 = vsyncadd [#allocation18], %s497
          %s500 = sshll.u32 [#allocation17], 4
          %s501 = int_to_ptr.vmem [resolvable:$true] %s500
          %503 = dma.hbm_to_vmem [thread:$0]  %s6, 32, %s501, [#allocation18]
        $region24: #{gated_drgt_forward.1} parent=11 // pred_fallthru
          _
        // Predicated region
        $region25: #{gated_drgt_forward.1} parent=11 // pred_check
          %p504 = pneg %p158
        $region26: #{gated_drgt_forward.1} parent=11 // pred_check_branch
          %506 = sbr.rel (%p504) target = $region28
        $region27: #{gated_drgt_forward.1} parent=11 // pred_region
          %s508 = ssub.s32 1024, 1024
          %509 = vsyncadd [#allocation18], %s508
          %s510 = sshll.u32 [#allocation19], 4
          %s511 = int_to_ptr.vmem [resolvable:$true] %s510
          %516 = dma.hbm_to_vmem [thread:$0]  %s7, 1024, %s511, [#allocation18], 64, 64, 4
        $region28: #{gated_drgt_forward.1} parent=11 // pred_fallthru
          _
        // Predicated region
        $region29: #{gated_drgt_forward.1} parent=11 // pred_check
          %p517 = pneg %p179
        $region30: #{gated_drgt_forward.1} parent=11 // pred_check_branch
          %519 = sbr.rel (%p517) target = $region32
        $region31: #{gated_drgt_forward.1} parent=11 // pred_region
          %s521 = ssub.s32 2048, 2048
          %522 = vsyncadd [#allocation21], %s521
          %s523 = sshll.u32 [#allocation20], 4
          %s524 = int_to_ptr.vmem [resolvable:$true] %s523
          %529 = dma.hbm_to_vmem [thread:$0]  %s8, 2048, %s524, [#allocation21], 64, 64, 4
        $region32: #{gated_drgt_forward.1} parent=11 // pred_fallthru
          _
        // Predicated region
        $region33: #{gated_drgt_forward.1} parent=11 // pred_check
          %p530 = pneg %p200
        $region34: #{gated_drgt_forward.1} parent=11 // pred_check_branch
          %532 = sbr.rel (%p530) target = $region36
        $region35: #{gated_drgt_forward.1} parent=11 // pred_region
          %s534 = ssub.s32 16, 16
          %535 = vsyncadd [#allocation21], %s534
          %s537 = sshll.u32 [#allocation22], 4
          %s538 = int_to_ptr.vmem [resolvable:$true] %s537
          %540 = dma.hbm_to_vmem [thread:$0]  %s9, 16, %s538, [#allocation21]
        $region36: #{gated_drgt_forward.1} parent=11 // pred_fallthru
          _
        // Predicated region
        $region37: #{gated_drgt_forward.1} parent=11 // pred_check
          %p541 = pneg %p221
        $region38: #{gated_drgt_forward.1} parent=11 // pred_check_branch
          %543 = sbr.rel (%p541) target = $region40
        $region39: #{gated_drgt_forward.1} parent=11 // pred_region
          %s545 = ssub.s32 16, 16
          %546 = vsyncadd [#allocation24], %s545
          %s548 = sshll.u32 [#allocation23], 4
          %s549 = int_to_ptr.vmem [resolvable:$true] %s548
          %551 = dma.hbm_to_vmem [thread:$0]  %s10, 16, %s549, [#allocation24]
        $region40: #{gated_drgt_forward.1} parent=11 // pred_fallthru
          _
        // Predicated region
        $region41: #{gated_drgt_forward.1} parent=11 // pred_check
          %p552 = pneg %p242
        $region42: #{gated_drgt_forward.1} parent=11 // pred_check_branch
          %554 = sbr.rel (%p552) target = $region44
        $region43: #{gated_drgt_forward.1} parent=11 // pred_region
          %s556 = ssub.s32 3072, 3072
          %557 = vsyncadd [#allocation24], %s556
          %s558 = sshll.u32 [#allocation25], 4
          %s559 = int_to_ptr.vmem [resolvable:$true] %s558
          %564 = dma.hbm_to_vmem [thread:$0]  %s11, 3072, %s559, [#allocation24], 192, 192, 12
        $region44: #{gated_drgt_forward.1} parent=11 // pred_fallthru
          _
        // Predicated region
        $region45: #{gated_drgt_forward.1} parent=11 // pred_check
          %p565 = pneg %p263
        $region46: #{gated_drgt_forward.1} parent=11 // pred_check_branch
          %567 = sbr.rel (%p565) target = $region48
        $region47: #{gated_drgt_forward.1} parent=11 // pred_region
          %s569 = ssub.s32 48, 48
          %570 = vsyncadd [#allocation27], %s569
          %s572 = sshll.u32 [#allocation26], 4
          %s573 = int_to_ptr.vmem [resolvable:$true] %s572
          %575 = dma.hbm_to_vmem [thread:$0]  %s12, 48, %s573, [#allocation27]
        $region48: #{gated_drgt_forward.1} parent=11 // pred_fallthru
          _
        // Predicated region
        $region49: #{gated_drgt_forward.1} parent=11 // pred_check
          %p576 = pneg %p284
        $region50: #{gated_drgt_forward.1} parent=11 // pred_check_branch
          %578 = sbr.rel (%p576) target = $region52
        $region51: #{gated_drgt_forward.1} parent=11 // pred_region
          %s580 = ssub.s32 3072, 3072
          %581 = vsyncadd [#allocation27], %s580
          %s582 = sshll.u32 [#allocation28], 4
          %s583 = int_to_ptr.vmem [resolvable:$true] %s582
          %588 = dma.hbm_to_vmem [thread:$0]  %s13, 3072, %s583, [#allocation27], 192, 192, 12
        $region52: #{gated_drgt_forward.1} parent=11 // pred_fallthru
          _
        // Predicated region
        $region53: #{gated_drgt_forward.1} parent=11 // pred_check
          %p589 = pneg %p305
        $region54: #{gated_drgt_forward.1} parent=11 // pred_check_branch
          %591 = sbr.rel (%p589) target = $region56
        $region55: #{gated_drgt_forward.1} parent=11 // pred_region
          %s593 = ssub.s32 48, 48
          %594 = vsyncadd [#allocation30], %s593
          %s596 = sshll.u32 [#allocation29], 4
          %s597 = int_to_ptr.vmem [resolvable:$true] %s596
          %599 = dma.hbm_to_vmem [thread:$0]  %s14, 48, %s597, [#allocation30]
        $region56: #{gated_drgt_forward.1} parent=11 // pred_fallthru
          _
        // Predicated region
        $region57: #{gated_drgt_forward.1} parent=11 // pred_check
          %p600 = pneg %p326
        $region58: #{gated_drgt_forward.1} parent=11 // pred_check_branch
          %602 = sbr.rel (%p600) target = $region60
        $region59: #{gated_drgt_forward.1} parent=11 // pred_region
          %s604 = ssub.s32 1024, 1024
          %605 = vsyncadd [#allocation30], %s604
          %s606 = sshll.u32 [#allocation31], 4
          %s607 = int_to_ptr.vmem [resolvable:$true] %s606
          %612 = dma.hbm_to_vmem [thread:$0]  %s15, 1024, %s607, [#allocation30], 64, 64, 4
        $region60: #{gated_drgt_forward.1} parent=11 // pred_fallthru
          _
        // Predicated region
        $region61: #{gated_drgt_forward.1} parent=11 // pred_check
          %p613 = pneg %p347
        $region62: #{gated_drgt_forward.1} parent=11 // pred_check_branch
          %615 = sbr.rel (%p613) target = $region64
        $region63: #{gated_drgt_forward.1} parent=11 // pred_region
          %s617 = ssub.s32 16, 16
          %618 = vsyncadd [#allocation33], %s617
          %s620 = sshll.u32 [#allocation32], 4
          %s621 = int_to_ptr.vmem [resolvable:$true] %s620
          %623 = dma.hbm_to_vmem [thread:$0]  %s16, 16, %s621, [#allocation33]
        $region64: #{gated_drgt_forward.1} parent=11 // pred_fallthru
          _
        // Predicated region
        $region65: #{gated_drgt_forward.1} parent=11 // pred_check
          %p624 = pneg %p368
        $region66: #{gated_drgt_forward.1} parent=11 // pred_check_branch
          %626 = sbr.rel (%p624) target = $region68
        $region67: #{gated_drgt_forward.1} parent=11 // pred_region
          %s628 = ssub.s32 4096, 4096
          %629 = vsyncadd [#allocation33], %s628
          %s630 = sshll.u32 [#allocation34], 4
          %s631 = int_to_ptr.vmem [resolvable:$true] %s630
          %636 = dma.hbm_to_vmem [thread:$0]  %s17, 4096, %s631, [#allocation33], 128, 128, 8
        $region68: #{gated_drgt_forward.1} parent=11 // pred_fallthru
          _
        // Predicated region
        $region69: #{gated_drgt_forward.1} parent=11 // pred_check
          %p637 = pneg %p389
        $region70: #{gated_drgt_forward.1} parent=11 // pred_check_branch
          %639 = sbr.rel (%p637) target = $region72
        $region71: #{gated_drgt_forward.1} parent=11 // pred_region
          %s641 = ssub.s32 32, 32
          %642 = vsyncadd [#allocation36], %s641
          %s644 = sshll.u32 [#allocation35], 4
          %s645 = int_to_ptr.vmem [resolvable:$true] %s644
          %647 = dma.hbm_to_vmem [thread:$0]  %s18, 32, %s645, [#allocation36]
        $region72: #{gated_drgt_forward.1} parent=11 // pred_fallthru
          _
        // Predicated region
        $region73: #{gated_drgt_forward.1} parent=11 // pred_check
          %p648 = pneg %p410
        $region74: #{gated_drgt_forward.1} parent=11 // pred_check_branch
          %650 = sbr.rel (%p648) target = $region76
        $region75: #{gated_drgt_forward.1} parent=11 // pred_region
          %s652 = ssub.s32 1024, 1024
          %653 = vsyncadd [#allocation36], %s652
          %s654 = sshll.u32 [#allocation37], 4
          %s655 = int_to_ptr.vmem [resolvable:$true] %s654
          %660 = dma.hbm_to_vmem [thread:$0]  %s19, 1024, %s655, [#allocation36], 64, 64, 4
        $region76: #{gated_drgt_forward.1} parent=11 // pred_fallthru
          _
        // Predicated region
        $region77: #{gated_drgt_forward.1} parent=11 // pred_check
          %p661 = pneg %p431
        $region78: #{gated_drgt_forward.1} parent=11 // pred_check_branch
          %663 = sbr.rel (%p661) target = $region80
        $region79: #{gated_drgt_forward.1} parent=11 // pred_region
          %s665 = ssub.s32 16, 16
          %666 = vsyncadd [#allocation39], %s665
          %s668 = sshll.u32 [#allocation38], 4
          %s669 = int_to_ptr.vmem [resolvable:$true] %s668
          %671 = dma.hbm_to_vmem [thread:$0]  %s20, 16, %s669, [#allocation39]
        $region80: #{gated_drgt_forward.1} parent=11 // pred_fallthru
          _
      $region12: #{gated_drgt_forward.1} parent=5 // pred_fallthru
        _
      %p672 = scmp.lt.s32.totalorder %s48, 3
      // Predicated region
      $region81: #{gated_drgt_forward.1} parent=5 // pred_check
        %p673 = pneg %p672
      $region82: #{gated_drgt_forward.1} parent=5 // pred_check_branch
        %675 = sbr.rel (%p673) target = $region84
      $region83: #{gated_drgt_forward.1} parent=5 // pred_region
        // Predicated region
        $region85: #{gated_drgt_forward.1} parent=83 // pred_check
          %p676 = pneg %p68
        $region86: #{gated_drgt_forward.1} parent=83 // pred_check_branch
          %678 = sbr.rel (%p676) target = $region88
        $region87: #{gated_drgt_forward.1} parent=83 // pred_region
          %s679 = sand.u32 %s58, 1
          %s680 = scalar_lea.sflag [#allocation12], %s679
          %s681 = sand.u32 %s58, 1
          %s682 = smul.addr %s681, 8
          %s683 = scalar_lea.vmem [#allocation11], %s682
          %s685 = ssub.s32 128, 128
          %686 = vsyncadd %s680, %s685
          %s687 = smul.addr %s48, 128
          %s688 = scalar_lea.hbm %s3, %s687
          %s690 = sshll.u32 %s683, 4
          %s691 = int_to_ptr.vmem [resolvable:$true] %s690
          %693 = dma.hbm_to_vmem [thread:$0]  %s688, 128, %s691, %s680
        $region88: #{gated_drgt_forward.1} parent=83 // pred_fallthru
          _
      $region84: #{gated_drgt_forward.1} parent=5 // pred_fallthru
        _
      %p694 = scmp.le.s32.totalorder 1, %s48
      %p695 = scmp.lt.s32.totalorder %s48, 4
      %p696 = pnand %p694, %p695
      %p697 = pneg %p696
      // Predicated region
      $region89: #{gated_drgt_forward.1} parent=5 // pred_check
        _
      $region90: #{gated_drgt_forward.1} parent=5 // pred_check_branch
        %699 = sbr.rel (%p696) target = $region92
      $region91: #{gated_drgt_forward.1} parent=5 // pred_region
        %s700 = ssub.s32 %s48, 1
        %s701 = sand.u32 %s61, 1
        %s702 = scalar_lea.sflag [#allocation12], %s701
        %s703 = sand.u32 %s61, 1
        %s704 = smul.addr %s703, 8
        %s705 = scalar_lea.vmem [#allocation11], %s704
        // Predicated region
        $region93: #{gated_drgt_forward.1} parent=91 // pred_check
          %p706 = pneg %p74
        $region94: #{gated_drgt_forward.1} parent=91 // pred_check_branch
          %708 = sbr.rel (%p706) target = $region96
        $region95: #{gated_drgt_forward.1} parent=91 // pred_region
          %709 = dma.done %s702, 128
        $region96: #{gated_drgt_forward.1} parent=91 // pred_fallthru
          _
        // Predicated region
        $region97: #{gated_drgt_forward.1} parent=91 // pred_check
          %p710 = pneg %p95
        $region98: #{gated_drgt_forward.1} parent=91 // pred_check_branch
          %712 = sbr.rel (%p710) target = $region100
        $region99: #{gated_drgt_forward.1} parent=91 // pred_region
          %713 = dma.done [#allocation15], 256
        $region100: #{gated_drgt_forward.1} parent=91 // pred_fallthru
          _
        // Predicated region
        $region101: #{gated_drgt_forward.1} parent=91 // pred_check
          %p714 = pneg %p116
        $region102: #{gated_drgt_forward.1} parent=91 // pred_check_branch
          %716 = sbr.rel (%p714) target = $region104
        $region103: #{gated_drgt_forward.1} parent=91 // pred_region
          %717 = dma.done [#allocation15], 6144
        $region104: #{gated_drgt_forward.1} parent=91 // pred_fallthru
          _
        // Predicated region
        $region105: #{gated_drgt_forward.1} parent=91 // pred_check
          %p718 = pneg %p137
        $region106: #{gated_drgt_forward.1} parent=91 // pred_check_branch
          %720 = sbr.rel (%p718) target = $region108
        $region107: #{gated_drgt_forward.1} parent=91 // pred_region
          %721 = dma.done [#allocation18], 32
        $region108: #{gated_drgt_forward.1} parent=91 // pred_fallthru
          _
        // Predicated region
        $region109: #{gated_drgt_forward.1} parent=91 // pred_check
          %p722 = pneg %p158
        $region110: #{gated_drgt_forward.1} parent=91 // pred_check_branch
          %724 = sbr.rel (%p722) target = $region112
        $region111: #{gated_drgt_forward.1} parent=91 // pred_region
          %725 = dma.done [#allocation18], 1024
        $region112: #{gated_drgt_forward.1} parent=91 // pred_fallthru
          _
        // Predicated region
        $region113: #{gated_drgt_forward.1} parent=91 // pred_check
          %p726 = pneg %p179
        $region114: #{gated_drgt_forward.1} parent=91 // pred_check_branch
          %728 = sbr.rel (%p726) target = $region116
        $region115: #{gated_drgt_forward.1} parent=91 // pred_region
          %729 = dma.done [#allocation21], 2048
        $region116: #{gated_drgt_forward.1} parent=91 // pred_fallthru
          _
        // Predicated region
        $region117: #{gated_drgt_forward.1} parent=91 // pred_check
          %p730 = pneg %p200
        $region118: #{gated_drgt_forward.1} parent=91 // pred_check_branch
          %732 = sbr.rel (%p730) target = $region120
        $region119: #{gated_drgt_forward.1} parent=91 // pred_region
          %733 = dma.done [#allocation21], 16
        $region120: #{gated_drgt_forward.1} parent=91 // pred_fallthru
          _
        // Predicated region
        $region121: #{gated_drgt_forward.1} parent=91 // pred_check
          %p734 = pneg %p221
        $region122: #{gated_drgt_forward.1} parent=91 // pred_check_branch
          %736 = sbr.rel (%p734) target = $region124
        $region123: #{gated_drgt_forward.1} parent=91 // pred_region
          %737 = dma.done [#allocation24], 16
        $region124: #{gated_drgt_forward.1} parent=91 // pred_fallthru
          _
        // Predicated region
        $region125: #{gated_drgt_forward.1} parent=91 // pred_check
          %p738 = pneg %p242
        $region126: #{gated_drgt_forward.1} parent=91 // pred_check_branch
          %740 = sbr.rel (%p738) target = $region128
        $region127: #{gated_drgt_forward.1} parent=91 // pred_region
          %741 = dma.done [#allocation24], 3072
        $region128: #{gated_drgt_forward.1} parent=91 // pred_fallthru
          _
        // Predicated region
        $region129: #{gated_drgt_forward.1} parent=91 // pred_check
          %p742 = pneg %p263
        $region130: #{gated_drgt_forward.1} parent=91 // pred_check_branch
          %744 = sbr.rel (%p742) target = $region132
        $region131: #{gated_drgt_forward.1} parent=91 // pred_region
          %745 = dma.done [#allocation27], 48
        $region132: #{gated_drgt_forward.1} parent=91 // pred_fallthru
          _
        // Predicated region
        $region133: #{gated_drgt_forward.1} parent=91 // pred_check
          %p746 = pneg %p284
        $region134: #{gated_drgt_forward.1} parent=91 // pred_check_branch
          %748 = sbr.rel (%p746) target = $region136
        $region135: #{gated_drgt_forward.1} parent=91 // pred_region
          %749 = dma.done [#allocation27], 3072
        $region136: #{gated_drgt_forward.1} parent=91 // pred_fallthru
          _
        // Predicated region
        $region137: #{gated_drgt_forward.1} parent=91 // pred_check
          %p750 = pneg %p305
        $region138: #{gated_drgt_forward.1} parent=91 // pred_check_branch
          %752 = sbr.rel (%p750) target = $region140
        $region139: #{gated_drgt_forward.1} parent=91 // pred_region
          %753 = dma.done [#allocation30], 48
        $region140: #{gated_drgt_forward.1} parent=91 // pred_fallthru
          _
        // Predicated region
        $region141: #{gated_drgt_forward.1} parent=91 // pred_check
          %p754 = pneg %p326
        $region142: #{gated_drgt_forward.1} parent=91 // pred_check_branch
          %756 = sbr.rel (%p754) target = $region144
        $region143: #{gated_drgt_forward.1} parent=91 // pred_region
          %757 = dma.done [#allocation30], 1024
        $region144: #{gated_drgt_forward.1} parent=91 // pred_fallthru
          _
        // Predicated region
        $region145: #{gated_drgt_forward.1} parent=91 // pred_check
          %p758 = pneg %p347
        $region146: #{gated_drgt_forward.1} parent=91 // pred_check_branch
          %760 = sbr.rel (%p758) target = $region148
        $region147: #{gated_drgt_forward.1} parent=91 // pred_region
          %761 = dma.done [#allocation33], 16
        $region148: #{gated_drgt_forward.1} parent=91 // pred_fallthru
          _
        // Predicated region
        $region149: #{gated_drgt_forward.1} parent=91 // pred_check
          %p762 = pneg %p368
        $region150: #{gated_drgt_forward.1} parent=91 // pred_check_branch
          %764 = sbr.rel (%p762) target = $region152
        $region151: #{gated_drgt_forward.1} parent=91 // pred_region
          %765 = dma.done [#allocation33], 4096
        $region152: #{gated_drgt_forward.1} parent=91 // pred_fallthru
          _
        // Predicated region
        $region153: #{gated_drgt_forward.1} parent=91 // pred_check
          %p766 = pneg %p389
        $region154: #{gated_drgt_forward.1} parent=91 // pred_check_branch
          %768 = sbr.rel (%p766) target = $region156
        $region155: #{gated_drgt_forward.1} parent=91 // pred_region
          %769 = dma.done [#allocation36], 32
        $region156: #{gated_drgt_forward.1} parent=91 // pred_fallthru
          _
        // Predicated region
        $region157: #{gated_drgt_forward.1} parent=91 // pred_check
          %p770 = pneg %p410
        $region158: #{gated_drgt_forward.1} parent=91 // pred_check_branch
          %772 = sbr.rel (%p770) target = $region160
        $region159: #{gated_drgt_forward.1} parent=91 // pred_region
          %773 = dma.done [#allocation36], 1024
        $region160: #{gated_drgt_forward.1} parent=91 // pred_fallthru
          _
        // Predicated region
        $region161: #{gated_drgt_forward.1} parent=91 // pred_check
          %p774 = pneg %p431
        $region162: #{gated_drgt_forward.1} parent=91 // pred_check_branch
          %776 = sbr.rel (%p774) target = $region164
        $region163: #{gated_drgt_forward.1} parent=91 // pred_region
          %777 = dma.done [#allocation39], 16
        $region164: #{gated_drgt_forward.1} parent=91 // pred_fallthru
          _
        %s778 = sand.u32 %s61, 1
        %s779 = scalar_lea.sflag [#allocation12], %s778
        %s780 = sand.u32 %s61, 1
        %s781 = smul.addr %s780, 8
        %s782 = scalar_lea.vmem [#allocation11], %s781
        %p783 = pneg %p74
        %p784 = pneg %p71
        %p785 = pneg %p95
        %p786 = pneg %p92
        %p787 = pneg %p116
        %p788 = pneg %p113
        %p789 = pneg %p137
        %p790 = pneg %p134
        %p791 = pneg %p158
        %p792 = pneg %p155
        %p793 = pneg %p179
        %p794 = pneg %p176
        %p795 = pneg %p200
        %p796 = pneg %p197
        %p797 = pneg %p221
        %p798 = pneg %p218
        %p799 = pneg %p242
        %p800 = pneg %p239
        %p801 = pneg %p263
        %p802 = pneg %p260
        %p803 = pneg %p284
        %p804 = pneg %p281
        %p805 = pneg %p305
        %p806 = pneg %p302
        %p807 = pneg %p326
        %p808 = pneg %p323
        %p809 = pneg %p347
        %p810 = pneg %p344
        %p811 = pneg %p368
        %p812 = pneg %p365
        %p813 = pneg %p389
        %p814 = pneg %p386
        %p815 = pneg %p410
        %p816 = pneg %p407
        %p817 = pneg %p431
        %p818 = pneg %p428
        %p819 = pneg %p452
        %p820 = pneg %p449
        %p822 = scmp.eq.s32.totalorder %s53, 0
        // Predicated region
        $region165: #{gated_drgt_forward.1} parent=91 // pred_check
          %p823 = pneg %p822
        $region166: #{gated_drgt_forward.1} parent=91 // pred_check_branch
          %825 = sbr.rel (%p823) target = $region168
        $region167: #{gated_drgt_forward.1} parent=91 // pred_region
          %826 = vst [vmem:[#allocation2 + $0x18] sm:$0xff] 0.0
        $region168: #{gated_drgt_forward.1} parent=91 // pred_fallthru
          _
        %s827 = smul.u32 %s53, 32
        %s828 = sld [smem:[#allocation8 + %s827]]
        %s829 = scalar_lea.vmem [#allocation2], %s828
        %v830 = vld [vmem:[%s829] sm:$0x1]
        %831 = vst [vmem:[#allocation3] sm:$0x1] %v830
        %s832 = sld [smem:[#allocation9 + %s827]]
        %s833 = scalar_lea.vmem [#allocation14], %s832
        %v834 = vld [vmem:[%s833] sm:$0x1]
        %835 = vst [vmem:[#allocation4] sm:$0x1] %v834
        %s836 = sadd.s32 %s827, 1
        %s837 = sld [smem:[#allocation8 + %s836]]
        %s838 = scalar_lea.vmem [#allocation2], %s837
        %v839 = vld [vmem:[%s838] sm:$0x1]
        %840 = vst [vmem:[#allocation3 + $0x8] sm:$0x1] %v839
        %s841 = sld [smem:[#allocation9 + %s836]]
        %s842 = scalar_lea.vmem [#allocation14], %s841
        %v843 = vld [vmem:[%s842] sm:$0x1]
        %844 = vst [vmem:[#allocation4 + $0x8] sm:$0x1] %v843
        %s845 = sadd.s32 %s827, 2
        %s846 = sld [smem:[#allocation8 + %s845]]
        %s847 = scalar_lea.vmem [#allocation2], %s846
        %v848 = vld [vmem:[%s847] sm:$0x1]
        %849 = vst [vmem:[#allocation3 + $0x10] sm:$0x1] %v848
        %s850 = sld [smem:[#allocation9 + %s845]]
        %s851 = scalar_lea.vmem [#allocation14], %s850
        %v852 = vld [vmem:[%s851] sm:$0x1]
        %853 = vst [vmem:[#allocation4 + $0x10] sm:$0x1] %v852
        %s854 = sadd.s32 %s827, 3
        %s855 = sld [smem:[#allocation8 + %s854]]
        %s856 = scalar_lea.vmem [#allocation2], %s855
        %v857 = vld [vmem:[%s856] sm:$0x1]
        %858 = vst [vmem:[#allocation3 + $0x18] sm:$0x1] %v857
        %s859 = sld [smem:[#allocation9 + %s854]]
        %s860 = scalar_lea.vmem [#allocation14], %s859
        %v861 = vld [vmem:[%s860] sm:$0x1]
        %862 = vst [vmem:[#allocation4 + $0x18] sm:$0x1] %v861
        %s863 = sadd.s32 %s827, 4
        %s864 = sld [smem:[#allocation8 + %s863]]
        %s865 = scalar_lea.vmem [#allocation2], %s864
        %v866 = vld [vmem:[%s865] sm:$0x1]
        %867 = vst [vmem:[#allocation3 + $0x1] sm:$0x1] %v866
        %s868 = sld [smem:[#allocation9 + %s863]]
        %s869 = scalar_lea.vmem [#allocation14], %s868
        %v870 = vld [vmem:[%s869] sm:$0x1]
        %871 = vst [vmem:[#allocation4 + $0x1] sm:$0x1] %v870
        %s872 = sadd.s32 %s827, 5
        %s873 = sld [smem:[#allocation8 + %s872]]
        %s874 = scalar_lea.vmem [#allocation2], %s873
        %v875 = vld [vmem:[%s874] sm:$0x1]
        %876 = vst [vmem:[#allocation3 + $0x9] sm:$0x1] %v875
        %s877 = sld [smem:[#allocation9 + %s872]]
        %s878 = scalar_lea.vmem [#allocation14], %s877
        %v879 = vld [vmem:[%s878] sm:$0x1]
        %880 = vst [vmem:[#allocation4 + $0x9] sm:$0x1] %v879
        %s881 = sadd.s32 %s827, 6
        %s882 = sld [smem:[#allocation8 + %s881]]
        %s883 = scalar_lea.vmem [#allocation2], %s882
        %v884 = vld [vmem:[%s883] sm:$0x1]
        %885 = vst [vmem:[#allocation3 + $0x11] sm:$0x1] %v884
        %s886 = sld [smem:[#allocation9 + %s881]]
        %s887 = scalar_lea.vmem [#allocation14], %s886
        %v888 = vld [vmem:[%s887] sm:$0x1]
        %889 = vst [vmem:[#allocation4 + $0x11] sm:$0x1] %v888
        %s890 = sadd.s32 %s827, 7
        %s891 = sld [smem:[#allocation8 + %s890]]
        %s892 = scalar_lea.vmem [#allocation2], %s891
        %v893 = vld [vmem:[%s892] sm:$0x1]
        %894 = vst [vmem:[#allocation3 + $0x19] sm:$0x1] %v893
        %s895 = sld [smem:[#allocation9 + %s890]]
        %s896 = scalar_lea.vmem [#allocation14], %s895
        %v897 = vld [vmem:[%s896] sm:$0x1]
        %898 = vst [vmem:[#allocation4 + $0x19] sm:$0x1] %v897
        %s899 = sadd.s32 %s827, 8
        %s900 = sld [smem:[#allocation8 + %s899]]
        %s901 = scalar_lea.vmem [#allocation2], %s900
        %v902 = vld [vmem:[%s901] sm:$0x1]
        %903 = vst [vmem:[#allocation3 + $0x2] sm:$0x1] %v902
        %s904 = sld [smem:[#allocation9 + %s899]]
        %s905 = scalar_lea.vmem [#allocation14], %s904
        %v906 = vld [vmem:[%s905] sm:$0x1]
        %907 = vst [vmem:[#allocation4 + $0x2] sm:$0x1] %v906
        %s908 = sadd.s32 %s827, 9
        %s909 = sld [smem:[#allocation8 + %s908]]
        %s910 = scalar_lea.vmem [#allocation2], %s909
        %v911 = vld [vmem:[%s910] sm:$0x1]
        %912 = vst [vmem:[#allocation3 + $0xa] sm:$0x1] %v911
        %s913 = sld [smem:[#allocation9 + %s908]]
        %s914 = scalar_lea.vmem [#allocation14], %s913
        %v915 = vld [vmem:[%s914] sm:$0x1]
        %916 = vst [vmem:[#allocation4 + $0xa] sm:$0x1] %v915
        %s917 = sadd.s32 %s827, 10
        %s918 = sld [smem:[#allocation8 + %s917]]
        %s919 = scalar_lea.vmem [#allocation2], %s918
        %v920 = vld [vmem:[%s919] sm:$0x1]
        %921 = vst [vmem:[#allocation3 + $0x12] sm:$0x1] %v920
        %s922 = sld [smem:[#allocation9 + %s917]]
        %s923 = scalar_lea.vmem [#allocation14], %s922
        %v924 = vld [vmem:[%s923] sm:$0x1]
        %925 = vst [vmem:[#allocation4 + $0x12] sm:$0x1] %v924
        %s926 = sadd.s32 %s827, 11
        %s927 = sld [smem:[#allocation8 + %s926]]
        %s928 = scalar_lea.vmem [#allocation2], %s927
        %v929 = vld [vmem:[%s928] sm:$0x1]
        %930 = vst [vmem:[#allocation3 + $0x1a] sm:$0x1] %v929
        %s931 = sld [smem:[#allocation9 + %s926]]
        %s932 = scalar_lea.vmem [#allocation14], %s931
        %v933 = vld [vmem:[%s932] sm:$0x1]
        %934 = vst [vmem:[#allocation4 + $0x1a] sm:$0x1] %v933
        %s935 = sadd.s32 %s827, 12
        %s936 = sld [smem:[#allocation8 + %s935]]
        %s937 = scalar_lea.vmem [#allocation2], %s936
        %v938 = vld [vmem:[%s937] sm:$0x1]
        %939 = vst [vmem:[#allocation3 + $0x3] sm:$0x1] %v938
        %s940 = sld [smem:[#allocation9 + %s935]]
        %s941 = scalar_lea.vmem [#allocation14], %s940
        %v942 = vld [vmem:[%s941] sm:$0x1]
        %943 = vst [vmem:[#allocation4 + $0x3] sm:$0x1] %v942
        %s944 = sadd.s32 %s827, 13
        %s945 = sld [smem:[#allocation8 + %s944]]
        %s946 = scalar_lea.vmem [#allocation2], %s945
        %v947 = vld [vmem:[%s946] sm:$0x1]
        %948 = vst [vmem:[#allocation3 + $0xb] sm:$0x1] %v947
        %s949 = sld [smem:[#allocation9 + %s944]]
        %s950 = scalar_lea.vmem [#allocation14], %s949
        %v951 = vld [vmem:[%s950] sm:$0x1]
        %952 = vst [vmem:[#allocation4 + $0xb] sm:$0x1] %v951
        %s953 = sadd.s32 %s827, 14
        %s954 = sld [smem:[#allocation8 + %s953]]
        %s955 = scalar_lea.vmem [#allocation2], %s954
        %v956 = vld [vmem:[%s955] sm:$0x1]
        %957 = vst [vmem:[#allocation3 + $0x13] sm:$0x1] %v956
        %s958 = sld [smem:[#allocation9 + %s953]]
        %s959 = scalar_lea.vmem [#allocation14], %s958
        %v960 = vld [vmem:[%s959] sm:$0x1]
        %961 = vst [vmem:[#allocation4 + $0x13] sm:$0x1] %v960
        %s962 = sadd.s32 %s827, 15
        %s963 = sld [smem:[#allocation8 + %s962]]
        %s964 = scalar_lea.vmem [#allocation2], %s963
        %v965 = vld [vmem:[%s964] sm:$0x1]
        %966 = vst [vmem:[#allocation3 + $0x1b] sm:$0x1] %v965
        %s967 = sld [smem:[#allocation9 + %s962]]
        %s968 = scalar_lea.vmem [#allocation14], %s967
        %v969 = vld [vmem:[%s968] sm:$0x1]
        %970 = vst [vmem:[#allocation4 + $0x1b] sm:$0x1] %v969
        %s971 = sadd.s32 %s827, 16
        %s972 = sld [smem:[#allocation8 + %s971]]
        %s973 = scalar_lea.vmem [#allocation2], %s972
        %v974 = vld [vmem:[%s973] sm:$0x1]
        %975 = vst [vmem:[#allocation3 + $0x4] sm:$0x1] %v974
        %s976 = sld [smem:[#allocation9 + %s971]]
        %s977 = scalar_lea.vmem [#allocation14], %s976
        %v978 = vld [vmem:[%s977] sm:$0x1]
        %979 = vst [vmem:[#allocation4 + $0x4] sm:$0x1] %v978
        %s980 = sadd.s32 %s827, 17
        %s981 = sld [smem:[#allocation8 + %s980]]
        %s982 = scalar_lea.vmem [#allocation2], %s981
        %v983 = vld [vmem:[%s982] sm:$0x1]
        %984 = vst [vmem:[#allocation3 + $0xc] sm:$0x1] %v983
        %s985 = sld [smem:[#allocation9 + %s980]]
        %s986 = scalar_lea.vmem [#allocation14], %s985
        %v987 = vld [vmem:[%s986] sm:$0x1]
        %988 = vst [vmem:[#allocation4 + $0xc] sm:$0x1] %v987
        %s989 = sadd.s32 %s827, 18
        %s990 = sld [smem:[#allocation8 + %s989]]
        %s991 = scalar_lea.vmem [#allocation2], %s990
        %v992 = vld [vmem:[%s991] sm:$0x1]
        %993 = vst [vmem:[#allocation3 + $0x14] sm:$0x1] %v992
        %s994 = sld [smem:[#allocation9 + %s989]]
        %s995 = scalar_lea.vmem [#allocation14], %s994
        %v996 = vld [vmem:[%s995] sm:$0x1]
        %997 = vst [vmem:[#allocation4 + $0x14] sm:$0x1] %v996
        %s998 = sadd.s32 %s827, 19
        %s999 = sld [smem:[#allocation8 + %s998]]
        %s1000 = scalar_lea.vmem [#allocation2], %s999
        %v1001 = vld [vmem:[%s1000] sm:$0x1]
        %1002 = vst [vmem:[#allocation3 + $0x1c] sm:$0x1] %v1001
        %s1003 = sld [smem:[#allocation9 + %s998]]
        %s1004 = scalar_lea.vmem [#allocation14], %s1003
        %v1005 = vld [vmem:[%s1004] sm:$0x1]
        %1006 = vst [vmem:[#allocation4 + $0x1c] sm:$0x1] %v1005
        %s1007 = sadd.s32 %s827, 20
        %s1008 = sld [smem:[#allocation8 + %s1007]]
        %s1009 = scalar_lea.vmem [#allocation2], %s1008
        %v1010 = vld [vmem:[%s1009] sm:$0x1]
        %1011 = vst [vmem:[#allocation3 + $0x5] sm:$0x1] %v1010
        %s1012 = sld [smem:[#allocation9 + %s1007]]
        %s1013 = scalar_lea.vmem [#allocation14], %s1012
        %v1014 = vld [vmem:[%s1013] sm:$0x1]
        %1015 = vst [vmem:[#allocation4 + $0x5] sm:$0x1] %v1014
        %s1016 = sadd.s32 %s827, 21
        %s1017 = sld [smem:[#allocation8 + %s1016]]
        %s1018 = scalar_lea.vmem [#allocation2], %s1017
        %v1019 = vld [vmem:[%s1018] sm:$0x1]
        %1020 = vst [vmem:[#allocation3 + $0xd] sm:$0x1] %v1019
        %s1021 = sld [smem:[#allocation9 + %s1016]]
        %s1022 = scalar_lea.vmem [#allocation14], %s1021
        %v1023 = vld [vmem:[%s1022] sm:$0x1]
        %1024 = vst [vmem:[#allocation4 + $0xd] sm:$0x1] %v1023
        %s1025 = sadd.s32 %s827, 22
        %s1026 = sld [smem:[#allocation8 + %s1025]]
        %s1027 = scalar_lea.vmem [#allocation2], %s1026
        %v1028 = vld [vmem:[%s1027] sm:$0x1]
        %1029 = vst [vmem:[#allocation3 + $0x15] sm:$0x1] %v1028
        %s1030 = sld [smem:[#allocation9 + %s1025]]
        %s1031 = scalar_lea.vmem [#allocation14], %s1030
        %v1032 = vld [vmem:[%s1031] sm:$0x1]
        %1033 = vst [vmem:[#allocation4 + $0x15] sm:$0x1] %v1032
        %s1034 = sadd.s32 %s827, 23
        %s1035 = sld [smem:[#allocation8 + %s1034]]
        %s1036 = scalar_lea.vmem [#allocation2], %s1035
        %v1037 = vld [vmem:[%s1036] sm:$0x1]
        %1038 = vst [vmem:[#allocation3 + $0x1d] sm:$0x1] %v1037
        %s1039 = sld [smem:[#allocation9 + %s1034]]
        %s1040 = scalar_lea.vmem [#allocation14], %s1039
        %v1041 = vld [vmem:[%s1040] sm:$0x1]
        %1042 = vst [vmem:[#allocation4 + $0x1d] sm:$0x1] %v1041
        %s1043 = sadd.s32 %s827, 24
        %s1044 = sld [smem:[#allocation8 + %s1043]]
        %s1045 = scalar_lea.vmem [#allocation2], %s1044
        %v1046 = vld [vmem:[%s1045] sm:$0x1]
        %1047 = vst [vmem:[#allocation3 + $0x6] sm:$0x1] %v1046
        %s1048 = sld [smem:[#allocation9 + %s1043]]
        %s1049 = scalar_lea.vmem [#allocation14], %s1048
        %v1050 = vld [vmem:[%s1049] sm:$0x1]
        %1051 = vst [vmem:[#allocation4 + $0x6] sm:$0x1] %v1050
        %s1052 = sadd.s32 %s827, 25
        %s1053 = sld [smem:[#allocation8 + %s1052]]
        %s1054 = scalar_lea.vmem [#allocation2], %s1053
        %v1055 = vld [vmem:[%s1054] sm:$0x1]
        %1056 = vst [vmem:[#allocation3 + $0xe] sm:$0x1] %v1055
        %s1057 = sld [smem:[#allocation9 + %s1052]]
        %s1058 = scalar_lea.vmem [#allocation14], %s1057
        %v1059 = vld [vmem:[%s1058] sm:$0x1]
        %1060 = vst [vmem:[#allocation4 + $0xe] sm:$0x1] %v1059
        %s1061 = sadd.s32 %s827, 26
        %s1062 = sld [smem:[#allocation8 + %s1061]]
        %s1063 = scalar_lea.vmem [#allocation2], %s1062
        %v1064 = vld [vmem:[%s1063] sm:$0x1]
        %1065 = vst [vmem:[#allocation3 + $0x16] sm:$0x1] %v1064
        %s1066 = sld [smem:[#allocation9 + %s1061]]
        %s1067 = scalar_lea.vmem [#allocation14], %s1066
        %v1068 = vld [vmem:[%s1067] sm:$0x1]
        %1069 = vst [vmem:[#allocation4 + $0x16] sm:$0x1] %v1068
        %s1070 = sadd.s32 %s827, 27
        %s1071 = sld [smem:[#allocation8 + %s1070]]
        %s1072 = scalar_lea.vmem [#allocation2], %s1071
        %v1073 = vld [vmem:[%s1072] sm:$0x1]
        %1074 = vst [vmem:[#allocation3 + $0x1e] sm:$0x1] %v1073
        %s1075 = sld [smem:[#allocation9 + %s1070]]
        %s1076 = scalar_lea.vmem [#allocation14], %s1075
        %v1077 = vld [vmem:[%s1076] sm:$0x1]
        %1078 = vst [vmem:[#allocation4 + $0x1e] sm:$0x1] %v1077
        %s1079 = sadd.s32 %s827, 28
        %s1080 = sld [smem:[#allocation8 + %s1079]]
        %s1081 = scalar_lea.vmem [#allocation2], %s1080
        %v1082 = vld [vmem:[%s1081] sm:$0x1]
        %1083 = vst [vmem:[#allocation3 + $0x7] sm:$0x1] %v1082
        %s1084 = sld [smem:[#allocation9 + %s1079]]
        %s1085 = scalar_lea.vmem [#allocation14], %s1084
        %v1086 = vld [vmem:[%s1085] sm:$0x1]
        %1087 = vst [vmem:[#allocation4 + $0x7] sm:$0x1] %v1086
        %s1088 = sadd.s32 %s827, 29
        %s1089 = sld [smem:[#allocation8 + %s1088]]
        %s1090 = scalar_lea.vmem [#allocation2], %s1089
        %v1091 = vld [vmem:[%s1090] sm:$0x1]
        %1092 = vst [vmem:[#allocation3 + $0xf] sm:$0x1] %v1091
        %s1093 = sld [smem:[#allocation9 + %s1088]]
        %s1094 = scalar_lea.vmem [#allocation14], %s1093
        %v1095 = vld [vmem:[%s1094] sm:$0x1]
        %1096 = vst [vmem:[#allocation4 + $0xf] sm:$0x1] %v1095
        %s1097 = sadd.s32 %s827, 30
        %s1098 = sld [smem:[#allocation8 + %s1097]]
        %s1099 = scalar_lea.vmem [#allocation2], %s1098
        %v1100 = vld [vmem:[%s1099] sm:$0x1]
        %1101 = vst [vmem:[#allocation3 + $0x17] sm:$0x1] %v1100
        %s1102 = sld [smem:[#allocation9 + %s1097]]
        %s1103 = scalar_lea.vmem [#allocation14], %s1102
        %v1104 = vld [vmem:[%s1103] sm:$0x1]
        %1105 = vst [vmem:[#allocation4 + $0x17] sm:$0x1] %v1104
        %s1106 = sadd.s32 %s827, 31
        %s1107 = sld [smem:[#allocation8 + %s1106]]
        %s1108 = scalar_lea.vmem [#allocation2], %s1107
        %v1109 = vld [vmem:[%s1108] sm:$0x1]
        %1110 = vst [vmem:[#allocation3 + $0x1f] sm:$0x1] %v1109
        %s1111 = sld [smem:[#allocation9 + %s1106]]
        %s1112 = scalar_lea.vmem [#allocation14], %s1111
        %v1113 = vld [vmem:[%s1112] sm:$0x1]
        %1114 = vst [vmem:[#allocation4 + $0x1f] sm:$0x1] %v1113
        %v1115 = vld [vmem:[#allocation3] sm:$0xff]
        %v1116 = vld [vmem:[#allocation3 + $0x8] sm:$0xff]
        %v1117 = vld [vmem:[#allocation3 + $0x10] sm:$0xff]
        %v1118 = vld [vmem:[#allocation3 + $0x18] sm:$0xff]
        %v1119 = vld [vmem:[#allocation4] sm:$0xff]
        %v1120 = vld [vmem:[#allocation4 + $0x8] sm:$0xff]
        %v1121 = vld [vmem:[#allocation4 + $0x10] sm:$0xff]
        %v1122 = vld [vmem:[#allocation4 + $0x18] sm:$0xff]
        %v1123 = vadd.f32 %v1115, 0.0
        %v1124 = vadd.f32 %v1119, 0.0
        %v1125 = vadd.f32 %v1123, %v1116
        %v1126 = vadd.f32 %v1124, %v1120
        %v1127 = vadd.f32 %v1125, %v1117
        %v1128 = vadd.f32 %v1126, %v1121
        %v1129 = vadd.f32 %v1127, %v1118
        %v1130 = vadd.f32 %v1128, %v1122
        %v1131 = vld [vmem:[%s705] sm:$0xff]
        %v1132 = vpack.c.bf16 %v1131, %v1131
        %v1133 = vpack.c.bf16 %v1129, %v1129
        %v1134 = vpack.c.bf16 %v1130, %v1130
        %v1135 = vld [vmem:[#allocation16] sm:$0xff]
        %v1136 = vld [vmem:[#allocation16 + $0x8] sm:$0xff]
        %v1137 = vld [vmem:[#allocation16 + $0x10] sm:$0xff]
        %v1138 = vld [vmem:[#allocation16 + $0x18] sm:$0xff]
        %v1139 = vld [vmem:[#allocation16 + $0x20] sm:$0xff]
        %v1140 = vld [vmem:[#allocation16 + $0x28] sm:$0xff]
        %v1141 = vld [vmem:[#allocation16 + $0x30] sm:$0xff]
        %v1142 = vld [vmem:[#allocation16 + $0x38] sm:$0xff]
        %v1143 = vld [vmem:[#allocation16 + $0x40] sm:$0xff]
        %v1144 = vld [vmem:[#allocation16 + $0x48] sm:$0xff]
        %v1145 = vld [vmem:[#allocation16 + $0x50] sm:$0xff]
        %v1146 = vld [vmem:[#allocation16 + $0x58] sm:$0xff]
        %v1147 = vld [vmem:[#allocation16 + $0x60] sm:$0xff]
        %v1148 = vld [vmem:[#allocation16 + $0x68] sm:$0xff]
        %v1149 = vld [vmem:[#allocation16 + $0x70] sm:$0xff]
        %v1150 = vld [vmem:[#allocation16 + $0x78] sm:$0xff]
        %v1151 = vld [vmem:[#allocation16 + $0x80] sm:$0xff]
        %v1152 = vld [vmem:[#allocation16 + $0x88] sm:$0xff]
        %v1153 = vld [vmem:[#allocation16 + $0x90] sm:$0xff]
        %v1154 = vld [vmem:[#allocation16 + $0x98] sm:$0xff]
        %v1155 = vld [vmem:[#allocation16 + $0xa0] sm:$0xff]
        %v1156 = vld [vmem:[#allocation16 + $0xa8] sm:$0xff]
        %v1157 = vld [vmem:[#allocation16 + $0xb0] sm:$0xff]
        %v1158 = vld [vmem:[#allocation16 + $0xb8] sm:$0xff]
        %v1159 = vld [vmem:[#allocation16 + $0xc0] sm:$0xff]
        %v1160 = vld [vmem:[#allocation16 + $0xc8] sm:$0xff]
        %v1161 = vld [vmem:[#allocation16 + $0xd0] sm:$0xff]
        %v1162 = vld [vmem:[#allocation16 + $0xd8] sm:$0xff]
        %v1163 = vld [vmem:[#allocation16 + $0xe0] sm:$0xff]
        %v1164 = vld [vmem:[#allocation16 + $0xe8] sm:$0xff]
        %v1165 = vld [vmem:[#allocation16 + $0xf0] sm:$0xff]
        %v1166 = vld [vmem:[#allocation16 + $0xf8] sm:$0xff]
        %v1167 = vld [vmem:[#allocation16 + $0x100] sm:$0xff]
        %v1168 = vld [vmem:[#allocation16 + $0x108] sm:$0xff]
        %v1169 = vld [vmem:[#allocation16 + $0x110] sm:$0xff]
        %v1170 = vld [vmem:[#allocation16 + $0x118] sm:$0xff]
        %v1171 = vld [vmem:[#allocation16 + $0x120] sm:$0xff]
        %v1172 = vld [vmem:[#allocation16 + $0x128] sm:$0xff]
        %v1173 = vld [vmem:[#allocation16 + $0x130] sm:$0xff]
        %v1174 = vld [vmem:[#allocation16 + $0x138] sm:$0xff]
        %v1175 = vld [vmem:[#allocation16 + $0x140] sm:$0xff]
        %v1176 = vld [vmem:[#allocation16 + $0x148] sm:$0xff]
        %v1177 = vld [vmem:[#allocation16 + $0x150] sm:$0xff]
        %v1178 = vld [vmem:[#allocation16 + $0x158] sm:$0xff]
        %v1179 = vld [vmem:[#allocation16 + $0x160] sm:$0xff]
        %v1180 = vld [vmem:[#allocation16 + $0x168] sm:$0xff]
        %v1181 = vld [vmem:[#allocation16 + $0x170] sm:$0xff]
        %v1182 = vld [vmem:[#allocation16 + $0x178] sm:$0xff]
        %v1183 = vld [vmem:[#allocation17] sm:$0x3]
        %v1185 = vlaneseq
        %v1186 = vshrl.u32 %v1185, 7
        %v1187 = vsub.s32 0, %v1186
        %v1188 = vrot.slane %v1183, %v1187
        %v1189 = vlaneseq
        %v1190 = vshrl.u32 %v1189, 7
        %v1191 = vsub.s32 1, %v1190
        %v1192 = vrot.slane %v1183, %v1191
        %v1243 = vunpack.c.l.b16 %v1135
        %v1244 = vunpack.c.h.b16 %v1135
        %v1245 = vunpack.c.l.b16 %v1136
        %v1246 = vunpack.c.h.b16 %v1136
        %v1247 = vunpack.c.l.b16 %v1137
        %v1248 = vunpack.c.h.b16 %v1137
        %v1249 = vunpack.c.l.b16 %v1138
        %v1250 = vunpack.c.h.b16 %v1138
        %v1251 = vunpack.c.l.b16 %v1139
        %v1252 = vunpack.c.h.b16 %v1139
        %v1253 = vunpack.c.l.b16 %v1140
        %v1254 = vunpack.c.h.b16 %v1140
        %v1255 = vunpack.c.l.b16 %v1141
        %v1256 = vunpack.c.h.b16 %v1141
        %v1257 = vunpack.c.l.b16 %v1142
        %v1258 = vunpack.c.h.b16 %v1142
        %v1259 = vunpack.c.l.b16 %v1143
        %v1260 = vunpack.c.h.b16 %v1143
        %v1261 = vunpack.c.l.b16 %v1144
        %v1262 = vunpack.c.h.b16 %v1144
        %v1263 = vunpack.c.l.b16 %v1145
        %v1264 = vunpack.c.h.b16 %v1145
        %v1265 = vunpack.c.l.b16 %v1146
        %v1266 = vunpack.c.h.b16 %v1146
        %v1267 = vunpack.c.l.b16 %v1147
        %v1268 = vunpack.c.h.b16 %v1147
        %v1269 = vunpack.c.l.b16 %v1148
        %v1270 = vunpack.c.h.b16 %v1148
        %v1271 = vunpack.c.l.b16 %v1149
        %v1272 = vunpack.c.h.b16 %v1149
        %v1273 = vunpack.c.l.b16 %v1150
        %v1274 = vunpack.c.h.b16 %v1150
        %v1275 = vunpack.c.l.b16 %v1151
        %v1276 = vunpack.c.h.b16 %v1151
        %v1277 = vunpack.c.l.b16 %v1152
        %v1278 = vunpack.c.h.b16 %v1152
        %v1279 = vunpack.c.l.b16 %v1153
        %v1280 = vunpack.c.h.b16 %v1153
        %v1281 = vunpack.c.l.b16 %v1154
        %v1282 = vunpack.c.h.b16 %v1154
        %v1283 = vunpack.c.l.b16 %v1155
        %v1284 = vunpack.c.h.b16 %v1155
        %v1285 = vunpack.c.l.b16 %v1156
        %v1286 = vunpack.c.h.b16 %v1156
        %v1287 = vunpack.c.l.b16 %v1157
        %v1288 = vunpack.c.h.b16 %v1157
        %v1289 = vunpack.c.l.b16 %v1158
        %v1290 = vunpack.c.h.b16 %v1158
        %v1291 = vunpack.c.l.b16 %v1159
        %v1292 = vunpack.c.h.b16 %v1159
        %v1293 = vunpack.c.l.b16 %v1160
        %v1294 = vunpack.c.h.b16 %v1160
        %v1295 = vunpack.c.l.b16 %v1161
        %v1296 = vunpack.c.h.b16 %v1161
        %v1297 = vunpack.c.l.b16 %v1162
        %v1298 = vunpack.c.h.b16 %v1162
        %v1299 = vunpack.c.l.b16 %v1163
        %v1300 = vunpack.c.h.b16 %v1163
        %v1301 = vunpack.c.l.b16 %v1164
        %v1302 = vunpack.c.h.b16 %v1164
        %v1303 = vunpack.c.l.b16 %v1165
        %v1304 = vunpack.c.h.b16 %v1165
        %v1305 = vunpack.c.l.b16 %v1166
        %v1306 = vunpack.c.h.b16 %v1166
        %v1307 = vunpack.c.l.b16 %v1167
        %v1308 = vunpack.c.h.b16 %v1167
        %v1309 = vunpack.c.l.b16 %v1168
        %v1310 = vunpack.c.h.b16 %v1168
        %v1311 = vunpack.c.l.b16 %v1169
        %v1312 = vunpack.c.h.b16 %v1169
        %v1313 = vunpack.c.l.b16 %v1170
        %v1314 = vunpack.c.h.b16 %v1170
        %v1315 = vunpack.c.l.b16 %v1171
        %v1316 = vunpack.c.h.b16 %v1171
        %v1317 = vunpack.c.l.b16 %v1172
        %v1318 = vunpack.c.h.b16 %v1172
        %v1319 = vunpack.c.l.b16 %v1173
        %v1320 = vunpack.c.h.b16 %v1173
        %v1321 = vunpack.c.l.b16 %v1174
        %v1322 = vunpack.c.h.b16 %v1174
        %v1323 = vunpack.c.l.b16 %v1175
        %v1324 = vunpack.c.h.b16 %v1175
        %v1325 = vunpack.c.l.b16 %v1176
        %v1326 = vunpack.c.h.b16 %v1176
        %v1327 = vunpack.c.l.b16 %v1177
        %v1328 = vunpack.c.h.b16 %v1177
        %v1329 = vunpack.c.l.b16 %v1178
        %v1330 = vunpack.c.h.b16 %v1178
        %v1331 = vunpack.c.l.b16 %v1179
        %v1332 = vunpack.c.h.b16 %v1179
        %v1333 = vunpack.c.l.b16 %v1180
        %v1334 = vunpack.c.h.b16 %v1180
        %v1335 = vunpack.c.l.b16 %v1181
        %v1336 = vunpack.c.h.b16 %v1181
        %v1337 = vunpack.c.l.b16 %v1182
        %v1338 = vunpack.c.h.b16 %v1182
        %v1339 = vpack.c.b16 %v1245, %v1243
        %v1340 = vpack.c.b16 %v1246, %v1244
        %v1341 = vpack.c.b16 %v1249, %v1247
        %v1342 = vpack.c.b16 %v1250, %v1248
        %v1343 = vpack.c.b16 %v1253, %v1251
        %v1344 = vpack.c.b16 %v1254, %v1252
        %v1345 = vpack.c.b16 %v1257, %v1255
        %v1346 = vpack.c.b16 %v1258, %v1256
        %v1347 = vpack.c.b16 %v1261, %v1259
        %v1348 = vpack.c.b16 %v1262, %v1260
        %v1349 = vpack.c.b16 %v1265, %v1263
        %v1350 = vpack.c.b16 %v1266, %v1264
        %v1351 = vpack.c.b16 %v1269, %v1267
        %v1352 = vpack.c.b16 %v1270, %v1268
        %v1353 = vpack.c.b16 %v1273, %v1271
        %v1354 = vpack.c.b16 %v1274, %v1272
        %v1355 = vpack.c.b16 %v1277, %v1275
        %v1356 = vpack.c.b16 %v1278, %v1276
        %v1357 = vpack.c.b16 %v1281, %v1279
        %v1358 = vpack.c.b16 %v1282, %v1280
        %v1359 = vpack.c.b16 %v1285, %v1283
        %v1360 = vpack.c.b16 %v1286, %v1284
        %v1361 = vpack.c.b16 %v1289, %v1287
        %v1362 = vpack.c.b16 %v1290, %v1288
        %v1363 = vpack.c.b16 %v1293, %v1291
        %v1364 = vpack.c.b16 %v1294, %v1292
        %v1365 = vpack.c.b16 %v1297, %v1295
        %v1366 = vpack.c.b16 %v1298, %v1296
        %v1367 = vpack.c.b16 %v1301, %v1299
        %v1368 = vpack.c.b16 %v1302, %v1300
        %v1369 = vpack.c.b16 %v1305, %v1303
        %v1370 = vpack.c.b16 %v1306, %v1304
        %v1371 = vpack.c.b16 %v1309, %v1307
        %v1372 = vpack.c.b16 %v1310, %v1308
        %v1373 = vpack.c.b16 %v1313, %v1311
        %v1374 = vpack.c.b16 %v1314, %v1312
        %v1375 = vpack.c.b16 %v1317, %v1315
        %v1376 = vpack.c.b16 %v1318, %v1316
        %v1377 = vpack.c.b16 %v1321, %v1319
        %v1378 = vpack.c.b16 %v1322, %v1320
        %v1379 = vpack.c.b16 %v1325, %v1323
        %v1380 = vpack.c.b16 %v1326, %v1324
        %v1381 = vpack.c.b16 %v1329, %v1327
        %v1382 = vpack.c.b16 %v1330, %v1328
        %v1383 = vpack.c.b16 %v1333, %v1331
        %v1384 = vpack.c.b16 %v1334, %v1332
        %v1385 = vpack.c.b16 %v1337, %v1335
        %v1386 = vpack.c.b16 %v1338, %v1336
        %1435 = vmatprep.subr.bf16.mxu0 %v1340
        %1436 = vmatpush1.bf16.msra.mxu0 %v1339
        %1437 = vmatprep.subr.bf16.mxu0 %v1342
        %1438 = vmatpush1.bf16.msra.mxu0 %v1341
        %1439 = vmatprep.subr.bf16.mxu0 %v1344
        %1440 = vmatpush1.bf16.msra.mxu0 %v1343
        %1441 = vmatprep.subr.bf16.mxu0 %v1346
        %1442 = vmatpush1.bf16.msra.mxu0 %v1345
        %1443 = vmatprep.subr.bf16.mxu0 %v1348
        %1444 = vmatpush1.bf16.msra.mxu0 %v1347
        %1445 = vmatprep.subr.bf16.mxu0 %v1350
        %1446 = vmatpush1.bf16.msra.mxu0 %v1349
        %1447 = vmatprep.subr.bf16.mxu0 %v1352
        %1448 = vmatpush1.bf16.msra.mxu0 %v1351
        %1449 = vmatprep.subr.bf16.mxu0 %v1354
        %1450 = vmatpush1.bf16.msra.mxu0 %v1353
        %1451 = vmatprep.subr.bf16.mxu0 %v1356
        %1452 = vmatpush1.bf16.msra.mxu0 %v1355
        %1453 = vmatprep.subr.bf16.mxu0 %v1358
        %1454 = vmatpush1.bf16.msra.mxu0 %v1357
        %1455 = vmatprep.subr.bf16.mxu0 %v1360
        %1456 = vmatpush1.bf16.msra.mxu0 %v1359
        %1457 = vmatprep.subr.bf16.mxu0 %v1362
        %1458 = vmatpush1.bf16.msra.mxu0 %v1361
        %1459 = vmatprep.subr.bf16.mxu0 %v1364
        %1460 = vmatpush1.bf16.msra.mxu0 %v1363
        %1461 = vmatprep.subr.bf16.mxu0 %v1366
        %1462 = vmatpush1.bf16.msra.mxu0 %v1365
        %1463 = vmatprep.subr.bf16.mxu0 %v1368
        %1464 = vmatpush1.bf16.msra.mxu0 %v1367
        %1465 = vmatprep.subr.bf16.mxu0 %v1370
        %1466 = vmatpush1.bf16.msra.mxu0 %v1369
        %1467 = vmatprep.mubr.bf16.mxu0 %v1133
        %1468 = vmatmul.mubr.bf16.gmra.mrb[0].mxu0 %v1132
        %v1469 = vpop.f32.mrb[0].mxu0
        %v1470 = vadd.f32 %v1188, %v1469
        %v1471 = vpop.f32.mrb[0].mxu0
        %v1472 = vadd.f32 %v1192, %v1471
        %v1473 = vpop.f32.mrb[0].mxu0
        %v1474 = vpop.f32.mrb[0].mxu0
        %1475 = vdwg.mxu0
        %1476 = vmatprep.subr.bf16.mxu0 %v1372
        %1477 = vmatpush1.bf16.msra.mxu0 %v1371
        %1478 = vmatprep.subr.bf16.mxu0 %v1374
        %1479 = vmatpush1.bf16.msra.mxu0 %v1373
        %1480 = vmatprep.subr.bf16.mxu0 %v1376
        %1481 = vmatpush1.bf16.msra.mxu0 %v1375
        %1482 = vmatprep.subr.bf16.mxu0 %v1378
        %1483 = vmatpush1.bf16.msra.mxu0 %v1377
        %1484 = vmatprep.subr.bf16.mxu0 %v1380
        %1485 = vmatpush1.bf16.msra.mxu0 %v1379
        %1486 = vmatprep.subr.bf16.mxu0 %v1382
        %1487 = vmatpush1.bf16.msra.mxu0 %v1381
        %1488 = vmatprep.subr.bf16.mxu0 %v1384
        %1489 = vmatpush1.bf16.msra.mxu0 %v1383
        %1490 = vmatprep.subr.bf16.mxu0 %v1386
        %1491 = vmatpush1.bf16.msra.mxu0 %v1385
        %1492 = vmatprep.subr.bf16.mxu0 0
        %1493 = vmatpush1.bf16.msra.mxu0 0
        %1494 = vmatprep.subr.bf16.mxu0 0
        %1495 = vmatpush1.bf16.msra.mxu0 0
        %1496 = vmatprep.subr.bf16.mxu0 0
        %1497 = vmatpush1.bf16.msra.mxu0 0
        %1498 = vmatprep.subr.bf16.mxu0 0
        %1499 = vmatpush1.bf16.msra.mxu0 0
        %1500 = vmatprep.subr.bf16.mxu0 0
        %1501 = vmatpush1.bf16.msra.mxu0 0
        %1502 = vmatprep.subr.bf16.mxu0 0
        %1503 = vmatpush1.bf16.msra.mxu0 0
        %1504 = vmatprep.subr.bf16.mxu0 0
        %1505 = vmatpush1.bf16.msra.mxu0 0
        %1506 = vmatprep.subr.bf16.mxu0 0
        %1507 = vmatpush1.bf16.msra.mxu0 0
        %1508 = vmatprep.mubr.bf16.mxu0 0
        %1509 = vmatmul.mubr.bf16.gmra.mrb[0].mxu0 %v1134
        %v1510 = vpop.f32.mrb[0].mxu0
        %v1511 = vadd.f32 %v1470, %v1510
        %v1512 = vpop.f32.mrb[0].mxu0
        %v1513 = vadd.f32 %v1472, %v1512
        %v1514 = vpop.f32.mrb[0].mxu0
        %v1515 = vpop.f32.mrb[0].mxu0
        %1516 = vdwg.mxu0
        %v1517 = vxor.u32 %v1511, 2147483648
        %v1518 = vmul.f32 %v1517, 1.442695
        %v1519 = vpow.pop %v1518
        %v1520 = vadd.f32 %v1519, 1.0
        %v1521 = vrcp.pop %v1520
        %v1522 = vmul.f32 1.0, %v1521
        %v1523 = vtanh.pop %v1513
        %v1524 = vld [vmem:[#allocation19] sm:$0xf]
        %v1525 = vld [vmem:[#allocation19 + $0x4] sm:$0xf]
        %v1526 = vld [vmem:[#allocation19 + $0x8] sm:$0xf]
        %v1527 = vld [vmem:[#allocation19 + $0xc] sm:$0xf]
        %v1528 = vld [vmem:[#allocation19 + $0x10] sm:$0xf]
        %v1529 = vld [vmem:[#allocation19 + $0x14] sm:$0xf]
        %v1530 = vld [vmem:[#allocation19 + $0x18] sm:$0xf]
        %v1531 = vld [vmem:[#allocation19 + $0x1c] sm:$0xf]
        %v1532 = vld [vmem:[#allocation19 + $0x20] sm:$0xf]
        %v1533 = vld [vmem:[#allocation19 + $0x24] sm:$0xf]
        %v1534 = vld [vmem:[#allocation19 + $0x28] sm:$0xf]
        %v1535 = vld [vmem:[#allocation19 + $0x2c] sm:$0xf]
        %v1536 = vld [vmem:[#allocation19 + $0x30] sm:$0xf]
        %v1537 = vld [vmem:[#allocation19 + $0x34] sm:$0xf]
        %v1538 = vld [vmem:[#allocation19 + $0x38] sm:$0xf]
        %v1539 = vld [vmem:[#allocation19 + $0x3c] sm:$0xf]
        %v1540 = vld [vmem:[#allocation22] sm:$0x1]
        %v1542 = vlaneseq
        %v1543 = vshrl.u32 %v1542, 7
        %v1544 = vsub.s32 0, %v1543
        %v1545 = vrot.slane %v1540, %v1544
        %v1563 = vunpack.c.l.b16 %v1524
        %v1564 = vunpack.c.l.b16 %v1525
        %v1565 = vunpack.c.l.b16 %v1526
        %v1566 = vunpack.c.l.b16 %v1527
        %v1567 = vunpack.c.l.b16 %v1528
        %v1568 = vunpack.c.l.b16 %v1529
        %v1569 = vunpack.c.l.b16 %v1530
        %v1570 = vunpack.c.l.b16 %v1531
        %v1571 = vunpack.c.l.b16 %v1532
        %v1572 = vunpack.c.l.b16 %v1533
        %v1573 = vunpack.c.l.b16 %v1534
        %v1574 = vunpack.c.l.b16 %v1535
        %v1575 = vunpack.c.l.b16 %v1536
        %v1576 = vunpack.c.l.b16 %v1537
        %v1577 = vunpack.c.l.b16 %v1538
        %v1578 = vunpack.c.l.b16 %v1539
        %v1579 = vpack.c.b16 %v1564, %v1563
        %v1580 = vpack.c.b16 %v1566, %v1565
        %v1581 = vpack.c.b16 %v1568, %v1567
        %v1582 = vpack.c.b16 %v1570, %v1569
        %v1583 = vpack.c.b16 %v1572, %v1571
        %v1584 = vpack.c.b16 %v1574, %v1573
        %v1585 = vpack.c.b16 %v1576, %v1575
        %v1586 = vpack.c.b16 %v1578, %v1577
        %1595 = vmatprep.subr.bf16.mxu0 0
        %1596 = vmatpush1.bf16.msra.mxu0 %v1579
        %1597 = vmatprep.subr.bf16.mxu0 0
        %1598 = vmatpush1.bf16.msra.mxu0 %v1580
        %1599 = vmatprep.subr.bf16.mxu0 0
        %1600 = vmatpush1.bf16.msra.mxu0 %v1581
        %1601 = vmatprep.subr.bf16.mxu0 0
        %1602 = vmatpush1.bf16.msra.mxu0 %v1582
        %1603 = vmatprep.subr.bf16.mxu0 0
        %1604 = vmatpush1.bf16.msra.mxu0 %v1583
        %1605 = vmatprep.subr.bf16.mxu0 0
        %1606 = vmatpush1.bf16.msra.mxu0 %v1584
        %1607 = vmatprep.subr.bf16.mxu0 0
        %1608 = vmatpush1.bf16.msra.mxu0 %v1585
        %1609 = vmatprep.subr.bf16.mxu0 0
        %1610 = vmatpush1.bf16.msra.mxu0 %v1586
        %1611 = vmatprep.subr.bf16.mxu0 0
        %1612 = vmatpush1.bf16.msra.mxu0 0
        %1613 = vmatprep.subr.bf16.mxu0 0
        %1614 = vmatpush1.bf16.msra.mxu0 0
        %1615 = vmatprep.subr.bf16.mxu0 0
        %1616 = vmatpush1.bf16.msra.mxu0 0
        %1617 = vmatprep.subr.bf16.mxu0 0
        %1618 = vmatpush1.bf16.msra.mxu0 0
        %1619 = vmatprep.subr.bf16.mxu0 0
        %1620 = vmatpush1.bf16.msra.mxu0 0
        %1621 = vmatprep.subr.bf16.mxu0 0
        %1622 = vmatpush1.bf16.msra.mxu0 0
        %1623 = vmatprep.subr.bf16.mxu0 0
        %1624 = vmatpush1.bf16.msra.mxu0 0
        %1625 = vmatprep.subr.bf16.mxu0 0
        %1626 = vmatpush1.bf16.msra.mxu0 0
        %1627 = vmatprep.mubr.bf16.mxu0 0
        %1628 = vmatmul.mubr.bf16.gmra.mrb[0].mxu0 %v1132
        %v1629 = vpop.f32.mrb[0].mxu0
        %v1630 = vadd.f32 %v1545, %v1629
        %v1631 = vpop.f32.mrb[0].mxu0
        %v1632 = vpop.f32.mrb[0].mxu0
        %v1633 = vpop.f32.mrb[0].mxu0
        %1634 = vdwg.mxu0
        %v1635 = vpack.c.bf16 %v1116, %v1115
        %v1636 = vpack.c.bf16 %v1120, %v1119
        %v1637 = vpack.c.bf16 %v1118, %v1117
        %v1638 = vpack.c.bf16 %v1122, %v1121
        %v1639 = vld [vmem:[#allocation20] sm:$0xf]
        %v1640 = vld [vmem:[#allocation20 + $0x4] sm:$0xf]
        %v1641 = vld [vmem:[#allocation20 + $0x8] sm:$0xf]
        %v1642 = vld [vmem:[#allocation20 + $0xc] sm:$0xf]
        %v1643 = vld [vmem:[#allocation20 + $0x10] sm:$0xf]
        %v1644 = vld [vmem:[#allocation20 + $0x14] sm:$0xf]
        %v1645 = vld [vmem:[#allocation20 + $0x18] sm:$0xf]
        %v1646 = vld [vmem:[#allocation20 + $0x1c] sm:$0xf]
        %v1647 = vld [vmem:[#allocation20 + $0x20] sm:$0xf]
        %v1648 = vld [vmem:[#allocation20 + $0x24] sm:$0xf]
        %v1649 = vld [vmem:[#allocation20 + $0x28] sm:$0xf]
        %v1650 = vld [vmem:[#allocation20 + $0x2c] sm:$0xf]
        %v1651 = vld [vmem:[#allocation20 + $0x30] sm:$0xf]
        %v1652 = vld [vmem:[#allocation20 + $0x34] sm:$0xf]
        %v1653 = vld [vmem:[#allocation20 + $0x38] sm:$0xf]
        %v1654 = vld [vmem:[#allocation20 + $0x3c] sm:$0xf]
        %v1655 = vld [vmem:[#allocation20 + $0x40] sm:$0xf]
        %v1656 = vld [vmem:[#allocation20 + $0x44] sm:$0xf]
        %v1657 = vld [vmem:[#allocation20 + $0x48] sm:$0xf]
        %v1658 = vld [vmem:[#allocation20 + $0x4c] sm:$0xf]
        %v1659 = vld [vmem:[#allocation20 + $0x50] sm:$0xf]
        %v1660 = vld [vmem:[#allocation20 + $0x54] sm:$0xf]
        %v1661 = vld [vmem:[#allocation20 + $0x58] sm:$0xf]
        %v1662 = vld [vmem:[#allocation20 + $0x5c] sm:$0xf]
        %v1663 = vld [vmem:[#allocation20 + $0x60] sm:$0xf]
        %v1664 = vld [vmem:[#allocation20 + $0x64] sm:$0xf]
        %v1665 = vld [vmem:[#allocation20 + $0x68] sm:$0xf]
        %v1666 = vld [vmem:[#allocation20 + $0x6c] sm:$0xf]
        %v1667 = vld [vmem:[#allocation20 + $0x70] sm:$0xf]
        %v1668 = vld [vmem:[#allocation20 + $0x74] sm:$0xf]
        %v1669 = vld [vmem:[#allocation20 + $0x78] sm:$0xf]
        %v1670 = vld [vmem:[#allocation20 + $0x7c] sm:$0xf]
        %v1703 = vunpack.c.l.b16 %v1639
        %v1704 = vunpack.c.l.b16 %v1640
        %v1705 = vunpack.c.l.b16 %v1641
        %v1706 = vunpack.c.l.b16 %v1642
        %v1707 = vunpack.c.l.b16 %v1643
        %v1708 = vunpack.c.l.b16 %v1644
        %v1709 = vunpack.c.l.b16 %v1645
        %v1710 = vunpack.c.l.b16 %v1646
        %v1711 = vunpack.c.l.b16 %v1647
        %v1712 = vunpack.c.l.b16 %v1648
        %v1713 = vunpack.c.l.b16 %v1649
        %v1714 = vunpack.c.l.b16 %v1650
        %v1715 = vunpack.c.l.b16 %v1651
        %v1716 = vunpack.c.l.b16 %v1652
        %v1717 = vunpack.c.l.b16 %v1653
        %v1718 = vunpack.c.l.b16 %v1654
        %v1719 = vunpack.c.l.b16 %v1655
        %v1720 = vunpack.c.l.b16 %v1656
        %v1721 = vunpack.c.l.b16 %v1657
        %v1722 = vunpack.c.l.b16 %v1658
        %v1723 = vunpack.c.l.b16 %v1659
        %v1724 = vunpack.c.l.b16 %v1660
        %v1725 = vunpack.c.l.b16 %v1661
        %v1726 = vunpack.c.l.b16 %v1662
        %v1727 = vunpack.c.l.b16 %v1663
        %v1728 = vunpack.c.l.b16 %v1664
        %v1729 = vunpack.c.l.b16 %v1665
        %v1730 = vunpack.c.l.b16 %v1666
        %v1731 = vunpack.c.l.b16 %v1667
        %v1732 = vunpack.c.l.b16 %v1668
        %v1733 = vunpack.c.l.b16 %v1669
        %v1734 = vunpack.c.l.b16 %v1670
        %v1735 = vpack.c.b16 %v1704, %v1703
        %v1736 = vpack.c.b16 %v1706, %v1705
        %v1737 = vpack.c.b16 %v1708, %v1707
        %v1738 = vpack.c.b16 %v1710, %v1709
        %v1739 = vpack.c.b16 %v1712, %v1711
        %v1740 = vpack.c.b16 %v1714, %v1713
        %v1741 = vpack.c.b16 %v1716, %v1715
        %v1742 = vpack.c.b16 %v1718, %v1717
        %v1743 = vpack.c.b16 %v1720, %v1719
        %v1744 = vpack.c.b16 %v1722, %v1721
        %v1745 = vpack.c.b16 %v1724, %v1723
        %v1746 = vpack.c.b16 %v1726, %v1725
        %v1747 = vpack.c.b16 %v1728, %v1727
        %v1748 = vpack.c.b16 %v1730, %v1729
        %v1749 = vpack.c.b16 %v1732, %v1731
        %v1750 = vpack.c.b16 %v1734, %v1733
        %1767 = vmatprep.subr.bf16.mxu0 0
        %1768 = vmatpush1.bf16.msra.mxu0 %v1735
        %1769 = vmatprep.subr.bf16.mxu0 0
        %1770 = vmatpush1.bf16.msra.mxu0 %v1736
        %1771 = vmatprep.subr.bf16.mxu0 0
        %1772 = vmatpush1.bf16.msra.mxu0 %v1737
        %1773 = vmatprep.subr.bf16.mxu0 0
        %1774 = vmatpush1.bf16.msra.mxu0 %v1738
        %1775 = vmatprep.subr.bf16.mxu0 0
        %1776 = vmatpush1.bf16.msra.mxu0 %v1739
        %1777 = vmatprep.subr.bf16.mxu0 0
        %1778 = vmatpush1.bf16.msra.mxu0 %v1740
        %1779 = vmatprep.subr.bf16.mxu0 0
        %1780 = vmatpush1.bf16.msra.mxu0 %v1741
        %1781 = vmatprep.subr.bf16.mxu0 0
        %1782 = vmatpush1.bf16.msra.mxu0 %v1742
        %1783 = vmatprep.subr.bf16.mxu0 0
        %1784 = vmatpush1.bf16.msra.mxu0 %v1743
        %1785 = vmatprep.subr.bf16.mxu0 0
        %1786 = vmatpush1.bf16.msra.mxu0 %v1744
        %1787 = vmatprep.subr.bf16.mxu0 0
        %1788 = vmatpush1.bf16.msra.mxu0 %v1745
        %1789 = vmatprep.subr.bf16.mxu0 0
        %1790 = vmatpush1.bf16.msra.mxu0 %v1746
        %1791 = vmatprep.subr.bf16.mxu0 0
        %1792 = vmatpush1.bf16.msra.mxu0 %v1747
        %1793 = vmatprep.subr.bf16.mxu0 0
        %1794 = vmatpush1.bf16.msra.mxu0 %v1748
        %1795 = vmatprep.subr.bf16.mxu0 0
        %1796 = vmatpush1.bf16.msra.mxu0 %v1749
        %1797 = vmatprep.subr.bf16.mxu0 0
        %1798 = vmatpush1.bf16.msra.mxu0 %v1750
        %1799 = vmatprep.mubr.bf16.mxu0 %v1636
        %1800 = vmatmul.mubr.bf16.gmra.mrb[0].mxu0 %v1635
        %v1801 = vpop.f32.mrb[0].mxu0
        %v1802 = vadd.f32 0.0, %v1801
        %v1803 = vpop.f32.mrb[0].mxu0
        %v1804 = vpop.f32.mrb[0].mxu0
        %v1805 = vadd.f32 0.0, %v1804
        %v1806 = vpop.f32.mrb[0].mxu0
        %1807 = vmatprep.mubr.bf16.mxu0 %v1638
        %1808 = vmatmul.mubr.bf16.gmra.mrb[0].mxu0 %v1637
        %v1809 = vpop.f32.mrb[0].mxu0
        %v1810 = vadd.f32 0.0, %v1809
        %v1811 = vpop.f32.mrb[0].mxu0
        %v1812 = vpop.f32.mrb[0].mxu0
        %v1813 = vadd.f32 0.0, %v1812
        %v1814 = vpop.f32.mrb[0].mxu0
        %1815 = vdwg.mxu0
        %v1816 = vadd.f32 %v1802, %v1630
        %v1817 = vxor.u32 %v1816, 2147483648
        %v1818 = vmul.f32 %v1817, 1.442695
        %v1819 = vpow.pop %v1818
        %v1820 = vadd.f32 %v1819, 1.0
        %v1821 = vrcp.pop %v1820
        %v1822 = vmul.f32 1.0, %v1821
        %v1823 = vmul.f32 %v1822, %v1115
        %v1824 = vadd.f32 %v1823, 0.0
        %v1825 = vadd.f32 %v1805, %v1630
        %v1826 = vxor.u32 %v1825, 2147483648
        %v1827 = vmul.f32 %v1826, 1.442695
        %v1828 = vpow.pop %v1827
        %v1829 = vadd.f32 %v1828, 1.0
        %v1830 = vrcp.pop %v1829
        %v1831 = vmul.f32 1.0, %v1830
        %v1832 = vmul.f32 %v1831, %v1116
        %v1833 = vadd.f32 %v1824, %v1832
        %v1834 = vadd.f32 %v1810, %v1630
        %v1835 = vxor.u32 %v1834, 2147483648
        %v1836 = vmul.f32 %v1835, 1.442695
        %v1837 = vpow.pop %v1836
        %v1838 = vadd.f32 %v1837, 1.0
        %v1839 = vrcp.pop %v1838
        %v1840 = vmul.f32 1.0, %v1839
        %v1841 = vmul.f32 %v1840, %v1117
        %v1842 = vadd.f32 %v1833, %v1841
        %v1843 = vadd.f32 %v1813, %v1630
        %v1844 = vxor.u32 %v1843, 2147483648
        %v1845 = vmul.f32 %v1844, 1.442695
        %v1846 = vpow.pop %v1845
        %v1847 = vadd.f32 %v1846, 1.0
        %v1848 = vrcp.pop %v1847
        %v1849 = vmul.f32 1.0, %v1848
        %v1850 = vmul.f32 %v1849, %v1118
        %v1851 = vadd.f32 %v1842, %v1850
        %v1852 = vmul.f32 %v1522, %v1523
        %v1853 = vadd.f32 %v1852, %v1851
        %v1854 = vtanh.pop %v1853
        %s1855 = smul.u32 %s53, 8
        %s1856 = scalar_lea.vmem [#allocation2], %s1855
        %1857 = vst [vmem:[%s1856] sm:$0xff] %v1854
        %p1858 = scmp.eq.s32.totalorder %s53, 2
        // Predicated region
        $region169: #{gated_drgt_forward.1} parent=91 // pred_check
          %p1859 = pneg %p1858
        $region170: #{gated_drgt_forward.1} parent=91 // pred_check_branch
          %1861 = sbr.rel (%p1859) target = $region172
        $region171: #{gated_drgt_forward.1} parent=91 // pred_region
          %1862 = vst [vmem:[#allocation5] sm:$0xff] 0.0
          %s1863 = sld [smem:[#allocation10]]
          %s1864 = scalar_lea.vmem [#allocation2], %s1863
          %v1865 = vld [vmem:[%s1864] sm:$0x1]
          %1866 = vst [vmem:[#allocation5] sm:$0x1] %v1865
          %s1867 = sld [smem:[#allocation10 + $0x1]]
          %s1868 = scalar_lea.vmem [#allocation2], %s1867
          %v1869 = vld [vmem:[%s1868] sm:$0x1]
          %1870 = vst [vmem:[#allocation5 + $0x1] sm:$0x1] %v1869
          %s1871 = sld [smem:[#allocation10 + $0x2]]
          %s1872 = scalar_lea.vmem [#allocation2], %s1871
          %v1873 = vld [vmem:[%s1872] sm:$0x1]
          %1874 = vst [vmem:[#allocation5 + $0x2] sm:$0x1] %v1873
          %v1875 = vld [vmem:[#allocation5] sm:$0xff]
          %v1876 = vpack.c.bf16 %v1875, %v1875
          %v1877 = vld [vmem:[#allocation25] sm:$0xff]
          %v1878 = vld [vmem:[#allocation25 + $0x8] sm:$0xf]
          %v1879 = vld [vmem:[#allocation25 + $0xc] sm:$0xff]
          %v1880 = vld [vmem:[#allocation25 + $0x14] sm:$0xf]
          %v1881 = vld [vmem:[#allocation25 + $0x18] sm:$0xff]
          %v1882 = vld [vmem:[#allocation25 + $0x20] sm:$0xf]
          %v1883 = vld [vmem:[#allocation25 + $0x24] sm:$0xff]
          %v1884 = vld [vmem:[#allocation25 + $0x2c] sm:$0xf]
          %v1885 = vld [vmem:[#allocation25 + $0x30] sm:$0xff]
          %v1886 = vld [vmem:[#allocation25 + $0x38] sm:$0xf]
          %v1887 = vld [vmem:[#allocation25 + $0x3c] sm:$0xff]
          %v1888 = vld [vmem:[#allocation25 + $0x44] sm:$0xf]
          %v1889 = vld [vmem:[#allocation25 + $0x48] sm:$0xff]
          %v1890 = vld [vmem:[#allocation25 + $0x50] sm:$0xf]
          %v1891 = vld [vmem:[#allocation25 + $0x54] sm:$0xff]
          %v1892 = vld [vmem:[#allocation25 + $0x5c] sm:$0xf]
          %v1893 = vld [vmem:[#allocation25 + $0x60] sm:$0xff]
          %v1894 = vld [vmem:[#allocation25 + $0x68] sm:$0xf]
          %v1895 = vld [vmem:[#allocation25 + $0x6c] sm:$0xff]
          %v1896 = vld [vmem:[#allocation25 + $0x74] sm:$0xf]
          %v1897 = vld [vmem:[#allocation25 + $0x78] sm:$0xff]
          %v1898 = vld [vmem:[#allocation25 + $0x80] sm:$0xf]
          %v1899 = vld [vmem:[#allocation25 + $0x84] sm:$0xff]
          %v1900 = vld [vmem:[#allocation25 + $0x8c] sm:$0xf]
          %v1901 = vld [vmem:[#allocation25 + $0x90] sm:$0xff]
          %v1902 = vld [vmem:[#allocation25 + $0x98] sm:$0xf]
          %v1903 = vld [vmem:[#allocation25 + $0x9c] sm:$0xff]
          %v1904 = vld [vmem:[#allocation25 + $0xa4] sm:$0xf]
          %v1905 = vld [vmem:[#allocation25 + $0xa8] sm:$0xff]
          %v1906 = vld [vmem:[#allocation25 + $0xb0] sm:$0xf]
          %v1907 = vld [vmem:[#allocation25 + $0xb4] sm:$0xff]
          %v1908 = vld [vmem:[#allocation25 + $0xbc] sm:$0xf]
          %v1909 = vld [vmem:[#allocation26] sm:$0x7]
          %v1911 = vlaneseq
          %v1912 = vshrl.u32 %v1911, 7
          %v1913 = vsub.s32 0, %v1912
          %v1914 = vrot.slane %v1909, %v1913
          %v1915 = vlaneseq
          %v1916 = vshrl.u32 %v1915, 7
          %v1917 = vsub.s32 1, %v1916
          %v1918 = vrot.slane %v1909, %v1917
          %v1919 = vlaneseq
          %v1920 = vshrl.u32 %v1919, 7
          %v1921 = vsub.s32 2, %v1920
          %v1922 = vrot.slane %v1909, %v1921
          %v1958 = vunpack.c.l.b16 %v1877
          %v1959 = vunpack.c.h.b16 %v1877
          %v1960 = vunpack.c.l.b16 %v1878
          %v1961 = vunpack.c.l.b16 %v1879
          %v1962 = vunpack.c.h.b16 %v1879
          %v1963 = vunpack.c.l.b16 %v1880
          %v1964 = vunpack.c.l.b16 %v1881
          %v1965 = vunpack.c.h.b16 %v1881
          %v1966 = vunpack.c.l.b16 %v1882
          %v1967 = vunpack.c.l.b16 %v1883
          %v1968 = vunpack.c.h.b16 %v1883
          %v1969 = vunpack.c.l.b16 %v1884
          %v1970 = vunpack.c.l.b16 %v1885
          %v1971 = vunpack.c.h.b16 %v1885
          %v1972 = vunpack.c.l.b16 %v1886
          %v1973 = vunpack.c.l.b16 %v1887
          %v1974 = vunpack.c.h.b16 %v1887
          %v1975 = vunpack.c.l.b16 %v1888
          %v1976 = vunpack.c.l.b16 %v1889
          %v1977 = vunpack.c.h.b16 %v1889
          %v1978 = vunpack.c.l.b16 %v1890
          %v1979 = vunpack.c.l.b16 %v1891
          %v1980 = vunpack.c.h.b16 %v1891
          %v1981 = vunpack.c.l.b16 %v1892
          %v1982 = vunpack.c.l.b16 %v1893
          %v1983 = vunpack.c.h.b16 %v1893
          %v1984 = vunpack.c.l.b16 %v1894
          %v1985 = vunpack.c.l.b16 %v1895
          %v1986 = vunpack.c.h.b16 %v1895
          %v1987 = vunpack.c.l.b16 %v1896
          %v1988 = vunpack.c.l.b16 %v1897
          %v1989 = vunpack.c.h.b16 %v1897
          %v1990 = vunpack.c.l.b16 %v1898
          %v1991 = vunpack.c.l.b16 %v1899
          %v1992 = vunpack.c.h.b16 %v1899
          %v1993 = vunpack.c.l.b16 %v1900
          %v1994 = vunpack.c.l.b16 %v1901
          %v1995 = vunpack.c.h.b16 %v1901
          %v1996 = vunpack.c.l.b16 %v1902
          %v1997 = vunpack.c.l.b16 %v1903
          %v1998 = vunpack.c.h.b16 %v1903
          %v1999 = vunpack.c.l.b16 %v1904
          %v2000 = vunpack.c.l.b16 %v1905
          %v2001 = vunpack.c.h.b16 %v1905
          %v2002 = vunpack.c.l.b16 %v1906
          %v2003 = vunpack.c.l.b16 %v1907
          %v2004 = vunpack.c.h.b16 %v1907
          %v2005 = vunpack.c.l.b16 %v1908
          %v2006 = vpack.c.b16 %v1961, %v1958
          %v2007 = vpack.c.b16 %v1962, %v1959
          %v2008 = vpack.c.b16 %v1963, %v1960
          %v2009 = vpack.c.b16 %v1967, %v1964
          %v2010 = vpack.c.b16 %v1968, %v1965
          %v2011 = vpack.c.b16 %v1969, %v1966
          %v2012 = vpack.c.b16 %v1973, %v1970
          %v2013 = vpack.c.b16 %v1974, %v1971
          %v2014 = vpack.c.b16 %v1975, %v1972
          %v2015 = vpack.c.b16 %v1979, %v1976
          %v2016 = vpack.c.b16 %v1980, %v1977
          %v2017 = vpack.c.b16 %v1981, %v1978
          %v2018 = vpack.c.b16 %v1985, %v1982
          %v2019 = vpack.c.b16 %v1986, %v1983
          %v2020 = vpack.c.b16 %v1987, %v1984
          %v2021 = vpack.c.b16 %v1991, %v1988
          %v2022 = vpack.c.b16 %v1992, %v1989
          %v2023 = vpack.c.b16 %v1993, %v1990
          %v2024 = vpack.c.b16 %v1997, %v1994
          %v2025 = vpack.c.b16 %v1998, %v1995
          %v2026 = vpack.c.b16 %v1999, %v1996
          %v2027 = vpack.c.b16 %v2003, %v2000
          %v2028 = vpack.c.b16 %v2004, %v2001
          %v2029 = vpack.c.b16 %v2005, %v2002
          %2054 = vmatprep.subr.bf16.mxu0 %v2007
          %2055 = vmatpush1.bf16.msra.mxu0 %v2006
          %2056 = vmatprep.subr.bf16.mxu0 %v2010
          %2057 = vmatpush1.bf16.msra.mxu0 %v2009
          %2058 = vmatprep.subr.bf16.mxu0 %v2013
          %2059 = vmatpush1.bf16.msra.mxu0 %v2012
          %2060 = vmatprep.subr.bf16.mxu0 %v2016
          %2061 = vmatpush1.bf16.msra.mxu0 %v2015
          %2062 = vmatprep.subr.bf16.mxu0 %v2019
          %2063 = vmatpush1.bf16.msra.mxu0 %v2018
          %2064 = vmatprep.subr.bf16.mxu0 %v2022
          %2065 = vmatpush1.bf16.msra.mxu0 %v2021
          %2066 = vmatprep.subr.bf16.mxu0 %v2025
          %2067 = vmatpush1.bf16.msra.mxu0 %v2024
          %2068 = vmatprep.subr.bf16.mxu0 %v2028
          %2069 = vmatpush1.bf16.msra.mxu0 %v2027
          %2070 = vmatprep.subr.bf16.mxu0 0
          %2071 = vmatpush1.bf16.msra.mxu0 0
          %2072 = vmatprep.subr.bf16.mxu0 0
          %2073 = vmatpush1.bf16.msra.mxu0 0
          %2074 = vmatprep.subr.bf16.mxu0 0
          %2075 = vmatpush1.bf16.msra.mxu0 0
          %2076 = vmatprep.subr.bf16.mxu0 0
          %2077 = vmatpush1.bf16.msra.mxu0 0
          %2078 = vmatprep.subr.bf16.mxu0 0
          %2079 = vmatpush1.bf16.msra.mxu0 0
          %2080 = vmatprep.subr.bf16.mxu0 0
          %2081 = vmatpush1.bf16.msra.mxu0 0
          %2082 = vmatprep.subr.bf16.mxu0 0
          %2083 = vmatpush1.bf16.msra.mxu0 0
          %2084 = vmatprep.subr.bf16.mxu0 0
          %2085 = vmatpush1.bf16.msra.mxu0 0
          %2086 = vmatprep.mubr.bf16.mxu0 0
          %2087 = vmatmul.mubr.bf16.gmra.mrb[0].mxu0 %v1876
          %v2088 = vpop.f32.mrb[0].mxu0
          %v2089 = vadd.f32 %v1914, %v2088
          %v2090 = vpop.f32.mrb[0].mxu0
          %v2091 = vadd.f32 %v1918, %v2090
          %v2092 = vpop.f32.mrb[0].mxu0
          %v2093 = vpop.f32.mrb[0].mxu0
          %2094 = vdwg.mxu0
          %2095 = vmatprep.subr.bf16.mxu0 0
          %2096 = vmatpush1.bf16.msra.mxu0 %v2008
          %2097 = vmatprep.subr.bf16.mxu0 0
          %2098 = vmatpush1.bf16.msra.mxu0 %v2011
          %2099 = vmatprep.subr.bf16.mxu0 0
          %2100 = vmatpush1.bf16.msra.mxu0 %v2014
          %2101 = vmatprep.subr.bf16.mxu0 0
          %2102 = vmatpush1.bf16.msra.mxu0 %v2017
          %2103 = vmatprep.subr.bf16.mxu0 0
          %2104 = vmatpush1.bf16.msra.mxu0 %v2020
          %2105 = vmatprep.subr.bf16.mxu0 0
          %2106 = vmatpush1.bf16.msra.mxu0 %v2023
          %2107 = vmatprep.subr.bf16.mxu0 0
          %2108 = vmatpush1.bf16.msra.mxu0 %v2026
          %2109 = vmatprep.subr.bf16.mxu0 0
          %2110 = vmatpush1.bf16.msra.mxu0 %v2029
          %2111 = vmatprep.subr.bf16.mxu0 0
          %2112 = vmatpush1.bf16.msra.mxu0 0
          %2113 = vmatprep.subr.bf16.mxu0 0
          %2114 = vmatpush1.bf16.msra.mxu0 0
          %2115 = vmatprep.subr.bf16.mxu0 0
          %2116 = vmatpush1.bf16.msra.mxu0 0
          %2117 = vmatprep.subr.bf16.mxu0 0
          %2118 = vmatpush1.bf16.msra.mxu0 0
          %2119 = vmatprep.subr.bf16.mxu0 0
          %2120 = vmatpush1.bf16.msra.mxu0 0
          %2121 = vmatprep.subr.bf16.mxu0 0
          %2122 = vmatpush1.bf16.msra.mxu0 0
          %2123 = vmatprep.subr.bf16.mxu0 0
          %2124 = vmatpush1.bf16.msra.mxu0 0
          %2125 = vmatprep.subr.bf16.mxu0 0
          %2126 = vmatpush1.bf16.msra.mxu0 0
          %2127 = vmatprep.mubr.bf16.mxu0 0
          %2128 = vmatmul.mubr.bf16.gmra.mrb[0].mxu0 %v1876
          %v2129 = vpop.f32.mrb[0].mxu0
          %v2130 = vadd.f32 %v1922, %v2129
          %v2131 = vpop.f32.mrb[0].mxu0
          %v2132 = vpop.f32.mrb[0].mxu0
          %v2133 = vpop.f32.mrb[0].mxu0
          %2134 = vdwg.mxu0
          %2135 = vst [vmem:[#allocation6] sm:$0xff] %v2089
          %2136 = vst [vmem:[#allocation6 + $0x8] sm:$0xff] %v2091
          %2137 = vst [vmem:[#allocation6 + $0x10] sm:$0xff] %v2130
          %v2138 = vld [vmem:[#allocation6] ss:$8 sm:$0x7]
          %v2139 = vld [vmem:[#allocation28] sm:$0xff]
          %v2140 = vld [vmem:[#allocation28 + $0x8] sm:$0xf]
          %v2141 = vld [vmem:[#allocation28 + $0xc] sm:$0xff]
          %v2142 = vld [vmem:[#allocation28 + $0x14] sm:$0xf]
          %v2143 = vld [vmem:[#allocation28 + $0x18] sm:$0xff]
          %v2144 = vld [vmem:[#allocation28 + $0x20] sm:$0xf]
          %v2145 = vld [vmem:[#allocation28 + $0x24] sm:$0xff]
          %v2146 = vld [vmem:[#allocation28 + $0x2c] sm:$0xf]
          %v2147 = vld [vmem:[#allocation28 + $0x30] sm:$0xff]
          %v2148 = vld [vmem:[#allocation28 + $0x38] sm:$0xf]
          %v2149 = vld [vmem:[#allocation28 + $0x3c] sm:$0xff]
          %v2150 = vld [vmem:[#allocation28 + $0x44] sm:$0xf]
          %v2151 = vld [vmem:[#allocation28 + $0x48] sm:$0xff]
          %v2152 = vld [vmem:[#allocation28 + $0x50] sm:$0xf]
          %v2153 = vld [vmem:[#allocation28 + $0x54] sm:$0xff]
          %v2154 = vld [vmem:[#allocation28 + $0x5c] sm:$0xf]
          %v2155 = vld [vmem:[#allocation28 + $0x60] sm:$0xff]
          %v2156 = vld [vmem:[#allocation28 + $0x68] sm:$0xf]
          %v2157 = vld [vmem:[#allocation28 + $0x6c] sm:$0xff]
          %v2158 = vld [vmem:[#allocation28 + $0x74] sm:$0xf]
          %v2159 = vld [vmem:[#allocation28 + $0x78] sm:$0xff]
          %v2160 = vld [vmem:[#allocation28 + $0x80] sm:$0xf]
          %v2161 = vld [vmem:[#allocation28 + $0x84] sm:$0xff]
          %v2162 = vld [vmem:[#allocation28 + $0x8c] sm:$0xf]
          %v2163 = vld [vmem:[#allocation28 + $0x90] sm:$0xff]
          %v2164 = vld [vmem:[#allocation28 + $0x98] sm:$0xf]
          %v2165 = vld [vmem:[#allocation28 + $0x9c] sm:$0xff]
          %v2166 = vld [vmem:[#allocation28 + $0xa4] sm:$0xf]
          %v2167 = vld [vmem:[#allocation28 + $0xa8] sm:$0xff]
          %v2168 = vld [vmem:[#allocation28 + $0xb0] sm:$0xf]
          %v2169 = vld [vmem:[#allocation28 + $0xb4] sm:$0xff]
          %v2170 = vld [vmem:[#allocation28 + $0xbc] sm:$0xf]
          %v2171 = vld [vmem:[#allocation29] sm:$0x7]
          %v2204 = vunpack.c.l.b16 %v2139
          %v2205 = vunpack.c.h.b16 %v2139
          %v2206 = vunpack.c.l.b16 %v2140
          %v2207 = vunpack.c.l.b16 %v2141
          %v2208 = vunpack.c.h.b16 %v2141
          %v2209 = vunpack.c.l.b16 %v2142
          %v2210 = vunpack.c.l.b16 %v2143
          %v2211 = vunpack.c.h.b16 %v2143
          %v2212 = vunpack.c.l.b16 %v2144
          %v2213 = vunpack.c.l.b16 %v2145
          %v2214 = vunpack.c.h.b16 %v2145
          %v2215 = vunpack.c.l.b16 %v2146
          %v2216 = vunpack.c.l.b16 %v2147
          %v2217 = vunpack.c.h.b16 %v2147
          %v2218 = vunpack.c.l.b16 %v2148
          %v2219 = vunpack.c.l.b16 %v2149
          %v2220 = vunpack.c.h.b16 %v2149
          %v2221 = vunpack.c.l.b16 %v2150
          %v2222 = vunpack.c.l.b16 %v2151
          %v2223 = vunpack.c.h.b16 %v2151
          %v2224 = vunpack.c.l.b16 %v2152
          %v2225 = vunpack.c.l.b16 %v2153
          %v2226 = vunpack.c.h.b16 %v2153
          %v2227 = vunpack.c.l.b16 %v2154
          %v2228 = vunpack.c.l.b16 %v2155
          %v2229 = vunpack.c.h.b16 %v2155
          %v2230 = vunpack.c.l.b16 %v2156
          %v2231 = vunpack.c.l.b16 %v2157
          %v2232 = vunpack.c.h.b16 %v2157
          %v2233 = vunpack.c.l.b16 %v2158
          %v2234 = vunpack.c.l.b16 %v2159
          %v2235 = vunpack.c.h.b16 %v2159
          %v2236 = vunpack.c.l.b16 %v2160
          %v2237 = vunpack.c.l.b16 %v2161
          %v2238 = vunpack.c.h.b16 %v2161
          %v2239 = vunpack.c.l.b16 %v2162
          %v2240 = vunpack.c.l.b16 %v2163
          %v2241 = vunpack.c.h.b16 %v2163
          %v2242 = vunpack.c.l.b16 %v2164
          %v2243 = vunpack.c.l.b16 %v2165
          %v2244 = vunpack.c.h.b16 %v2165
          %v2245 = vunpack.c.l.b16 %v2166
          %v2246 = vunpack.c.l.b16 %v2167
          %v2247 = vunpack.c.h.b16 %v2167
          %v2248 = vunpack.c.l.b16 %v2168
          %v2249 = vunpack.c.l.b16 %v2169
          %v2250 = vunpack.c.h.b16 %v2169
          %v2251 = vunpack.c.l.b16 %v2170
          %v2252 = vpack.c.b16 %v2207, %v2204
          %v2253 = vpack.c.b16 %v2208, %v2205
          %v2254 = vpack.c.b16 %v2209, %v2206
          %v2255 = vpack.c.b16 %v2213, %v2210
          %v2256 = vpack.c.b16 %v2214, %v2211
          %v2257 = vpack.c.b16 %v2215, %v2212
          %v2258 = vpack.c.b16 %v2219, %v2216
          %v2259 = vpack.c.b16 %v2220, %v2217
          %v2260 = vpack.c.b16 %v2221, %v2218
          %v2261 = vpack.c.b16 %v2225, %v2222
          %v2262 = vpack.c.b16 %v2226, %v2223
          %v2263 = vpack.c.b16 %v2227, %v2224
          %v2264 = vpack.c.b16 %v2231, %v2228
          %v2265 = vpack.c.b16 %v2232, %v2229
          %v2266 = vpack.c.b16 %v2233, %v2230
          %v2267 = vpack.c.b16 %v2237, %v2234
          %v2268 = vpack.c.b16 %v2238, %v2235
          %v2269 = vpack.c.b16 %v2239, %v2236
          %v2270 = vpack.c.b16 %v2243, %v2240
          %v2271 = vpack.c.b16 %v2244, %v2241
          %v2272 = vpack.c.b16 %v2245, %v2242
          %v2273 = vpack.c.b16 %v2249, %v2246
          %v2274 = vpack.c.b16 %v2250, %v2247
          %v2275 = vpack.c.b16 %v2251, %v2248
          %v2301 = vlaneseq
          %v2302 = vshrl.u32 %v2301, 7
          %v2303 = vsub.s32 0, %v2302
          %v2304 = vrot.slane %v2171, %v2303
          %v2305 = vlaneseq
          %v2306 = vshrl.u32 %v2305, 7
          %v2307 = vsub.s32 1, %v2306
          %v2308 = vrot.slane %v2171, %v2307
          %v2309 = vlaneseq
          %v2310 = vshrl.u32 %v2309, 7
          %v2311 = vsub.s32 2, %v2310
          %v2312 = vrot.slane %v2171, %v2311
          %2316 = vmatprep.subr.bf16.mxu0 %v2253
          %2317 = vmatpush1.bf16.msra.mxu0 %v2252
          %2318 = vmatprep.subr.bf16.mxu0 %v2256
          %2319 = vmatpush1.bf16.msra.mxu0 %v2255
          %2320 = vmatprep.subr.bf16.mxu0 %v2259
          %2321 = vmatpush1.bf16.msra.mxu0 %v2258
          %2322 = vmatprep.subr.bf16.mxu0 %v2262
          %2323 = vmatpush1.bf16.msra.mxu0 %v2261
          %2324 = vmatprep.subr.bf16.mxu0 %v2265
          %2325 = vmatpush1.bf16.msra.mxu0 %v2264
          %2326 = vmatprep.subr.bf16.mxu0 %v2268
          %2327 = vmatpush1.bf16.msra.mxu0 %v2267
          %2328 = vmatprep.subr.bf16.mxu0 %v2271
          %2329 = vmatpush1.bf16.msra.mxu0 %v2270
          %2330 = vmatprep.subr.bf16.mxu0 %v2274
          %2331 = vmatpush1.bf16.msra.mxu0 %v2273
          %2332 = vmatprep.subr.bf16.mxu0 0
          %2333 = vmatpush1.bf16.msra.mxu0 0
          %2334 = vmatprep.subr.bf16.mxu0 0
          %2335 = vmatpush1.bf16.msra.mxu0 0
          %2336 = vmatprep.subr.bf16.mxu0 0
          %2337 = vmatpush1.bf16.msra.mxu0 0
          %2338 = vmatprep.subr.bf16.mxu0 0
          %2339 = vmatpush1.bf16.msra.mxu0 0
          %2340 = vmatprep.subr.bf16.mxu0 0
          %2341 = vmatpush1.bf16.msra.mxu0 0
          %2342 = vmatprep.subr.bf16.mxu0 0
          %2343 = vmatpush1.bf16.msra.mxu0 0
          %2344 = vmatprep.subr.bf16.mxu0 0
          %2345 = vmatpush1.bf16.msra.mxu0 0
          %2346 = vmatprep.subr.bf16.mxu0 0
          %2347 = vmatpush1.bf16.msra.mxu0 0
          %2348 = vmatprep.mubr.bf16.mxu0 0
          %2349 = vmatmul.mubr.bf16.gmra.mrb[0].mxu0 0
          %v2350 = vpop.f32.mrb[0].mxu0
          %v2351 = vadd.f32 %v2304, %v2350
          %v2352 = vpop.f32.mrb[0].mxu0
          %v2353 = vadd.f32 %v2308, %v2352
          %v2354 = vpop.f32.mrb[0].mxu0
          %v2355 = vpop.f32.mrb[0].mxu0
          %2356 = vdwg.mxu0
          %2357 = vmatprep.subr.bf16.mxu0 0
          %2358 = vmatpush1.bf16.msra.mxu0 %v2254
          %2359 = vmatprep.subr.bf16.mxu0 0
          %2360 = vmatpush1.bf16.msra.mxu0 %v2257
          %2361 = vmatprep.subr.bf16.mxu0 0
          %2362 = vmatpush1.bf16.msra.mxu0 %v2260
          %2363 = vmatprep.subr.bf16.mxu0 0
          %2364 = vmatpush1.bf16.msra.mxu0 %v2263
          %2365 = vmatprep.subr.bf16.mxu0 0
          %2366 = vmatpush1.bf16.msra.mxu0 %v2266
          %2367 = vmatprep.subr.bf16.mxu0 0
          %2368 = vmatpush1.bf16.msra.mxu0 %v2269
          %2369 = vmatprep.subr.bf16.mxu0 0
          %2370 = vmatpush1.bf16.msra.mxu0 %v2272
          %2371 = vmatprep.subr.bf16.mxu0 0
          %2372 = vmatpush1.bf16.msra.mxu0 %v2275
          %2373 = vmatprep.subr.bf16.mxu0 0
          %2374 = vmatpush1.bf16.msra.mxu0 0
          %2375 = vmatprep.subr.bf16.mxu0 0
          %2376 = vmatpush1.bf16.msra.mxu0 0
          %2377 = vmatprep.subr.bf16.mxu0 0
          %2378 = vmatpush1.bf16.msra.mxu0 0
          %2379 = vmatprep.subr.bf16.mxu0 0
          %2380 = vmatpush1.bf16.msra.mxu0 0
          %2381 = vmatprep.subr.bf16.mxu0 0
          %2382 = vmatpush1.bf16.msra.mxu0 0
          %2383 = vmatprep.subr.bf16.mxu0 0
          %2384 = vmatpush1.bf16.msra.mxu0 0
          %2385 = vmatprep.subr.bf16.mxu0 0
          %2386 = vmatpush1.bf16.msra.mxu0 0
          %2387 = vmatprep.subr.bf16.mxu0 0
          %2388 = vmatpush1.bf16.msra.mxu0 0
          %2389 = vmatprep.mubr.bf16.mxu0 0
          %2390 = vmatmul.mubr.bf16.gmra.mrb[0].mxu0 0
          %v2391 = vpop.f32.mrb[0].mxu0
          %v2392 = vadd.f32 %v2312, %v2391
          %v2393 = vpop.f32.mrb[0].mxu0
          %v2394 = vpop.f32.mrb[0].mxu0
          %v2395 = vpop.f32.mrb[0].mxu0
          %2396 = vdwg.mxu0
          %v2397 = vadd.f32 %v2138, %v2351
          %v2398 = vxor.u32 %v2397, 2147483648
          %v2399 = vmul.f32 %v2398, 1.442695
          %v2400 = vpow.pop %v2399
          %v2401 = vadd.f32 %v2400, 1.0
          %v2402 = vrcp.pop %v2401
          %v2403 = vmul.f32 1.0, %v2402
          %v2405 = vrot.slane %v2138, 1
          %v2407 = vadd.f32 %v2405, %v2353
          %v2408 = vxor.u32 %v2407, 2147483648
          %v2409 = vmul.f32 %v2408, 1.442695
          %v2410 = vpow.pop %v2409
          %v2411 = vadd.f32 %v2410, 1.0
          %v2412 = vrcp.pop %v2411
          %v2413 = vmul.f32 1.0, %v2412
          %v2414 = vmul.f32 %v2403, %v2392
          %v2415 = vrot.slane %v2138, 2
          %v2417 = vadd.f32 %v2415, %v2414
          %v2418 = vtanh.pop %v2417
          %v2419 = vsub.f32 1.0, %v2413
          %v2420 = vmul.f32 %v2419, %v2418
          %v2421 = vmul.f32 %v2413, 0.0
          %v2422 = vadd.f32 %v2420, %v2421
          %s2423 = scalar_lea.vmem [#allocation6], 1
          %v2424 = vld [vmem:[%s2423] ss:$8 sm:$0x7]
          %v2425 = vpack.c.bf16 %v2422, %v2422
          %2426 = vmatprep.subr.bf16.mxu0 %v2253
          %2427 = vmatpush1.bf16.msra.mxu0 %v2252
          %2428 = vmatprep.subr.bf16.mxu0 %v2256
          %2429 = vmatpush1.bf16.msra.mxu0 %v2255
          %2430 = vmatprep.subr.bf16.mxu0 %v2259
          %2431 = vmatpush1.bf16.msra.mxu0 %v2258
          %2432 = vmatprep.subr.bf16.mxu0 %v2262
          %2433 = vmatpush1.bf16.msra.mxu0 %v2261
          %2434 = vmatprep.subr.bf16.mxu0 %v2265
          %2435 = vmatpush1.bf16.msra.mxu0 %v2264
          %2436 = vmatprep.subr.bf16.mxu0 %v2268
          %2437 = vmatpush1.bf16.msra.mxu0 %v2267
          %2438 = vmatprep.subr.bf16.mxu0 %v2271
          %2439 = vmatpush1.bf16.msra.mxu0 %v2270
          %2440 = vmatprep.subr.bf16.mxu0 %v2274
          %2441 = vmatpush1.bf16.msra.mxu0 %v2273
          %2442 = vmatprep.subr.bf16.mxu0 0
          %2443 = vmatpush1.bf16.msra.mxu0 0
          %2444 = vmatprep.subr.bf16.mxu0 0
          %2445 = vmatpush1.bf16.msra.mxu0 0
          %2446 = vmatprep.subr.bf16.mxu0 0
          %2447 = vmatpush1.bf16.msra.mxu0 0
          %2448 = vmatprep.subr.bf16.mxu0 0
          %2449 = vmatpush1.bf16.msra.mxu0 0
          %2450 = vmatprep.subr.bf16.mxu0 0
          %2451 = vmatpush1.bf16.msra.mxu0 0
          %2452 = vmatprep.subr.bf16.mxu0 0
          %2453 = vmatpush1.bf16.msra.mxu0 0
          %2454 = vmatprep.subr.bf16.mxu0 0
          %2455 = vmatpush1.bf16.msra.mxu0 0
          %2456 = vmatprep.subr.bf16.mxu0 0
          %2457 = vmatpush1.bf16.msra.mxu0 0
          %2458 = vmatprep.mubr.bf16.mxu0 0
          %2459 = vmatmul.mubr.bf16.gmra.mrb[0].mxu0 %v2425
          %v2460 = vpop.f32.mrb[0].mxu0
          %v2461 = vadd.f32 %v2304, %v2460
          %v2462 = vpop.f32.mrb[0].mxu0
          %v2463 = vadd.f32 %v2308, %v2462
          %v2464 = vpop.f32.mrb[0].mxu0
          %v2465 = vpop.f32.mrb[0].mxu0
          %2466 = vdwg.mxu0
          %2467 = vmatprep.subr.bf16.mxu0 0
          %2468 = vmatpush1.bf16.msra.mxu0 %v2254
          %2469 = vmatprep.subr.bf16.mxu0 0
          %2470 = vmatpush1.bf16.msra.mxu0 %v2257
          %2471 = vmatprep.subr.bf16.mxu0 0
          %2472 = vmatpush1.bf16.msra.mxu0 %v2260
          %2473 = vmatprep.subr.bf16.mxu0 0
          %2474 = vmatpush1.bf16.msra.mxu0 %v2263
          %2475 = vmatprep.subr.bf16.mxu0 0
          %2476 = vmatpush1.bf16.msra.mxu0 %v2266
          %2477 = vmatprep.subr.bf16.mxu0 0
          %2478 = vmatpush1.bf16.msra.mxu0 %v2269
          %2479 = vmatprep.subr.bf16.mxu0 0
          %2480 = vmatpush1.bf16.msra.mxu0 %v2272
          %2481 = vmatprep.subr.bf16.mxu0 0
          %2482 = vmatpush1.bf16.msra.mxu0 %v2275
          %2483 = vmatprep.subr.bf16.mxu0 0
          %2484 = vmatpush1.bf16.msra.mxu0 0
          %2485 = vmatprep.subr.bf16.mxu0 0
          %2486 = vmatpush1.bf16.msra.mxu0 0
          %2487 = vmatprep.subr.bf16.mxu0 0
          %2488 = vmatpush1.bf16.msra.mxu0 0
          %2489 = vmatprep.subr.bf16.mxu0 0
          %2490 = vmatpush1.bf16.msra.mxu0 0
          %2491 = vmatprep.subr.bf16.mxu0 0
          %2492 = vmatpush1.bf16.msra.mxu0 0
          %2493 = vmatprep.subr.bf16.mxu0 0
          %2494 = vmatpush1.bf16.msra.mxu0 0
          %2495 = vmatprep.subr.bf16.mxu0 0
          %2496 = vmatpush1.bf16.msra.mxu0 0
          %2497 = vmatprep.subr.bf16.mxu0 0
          %2498 = vmatpush1.bf16.msra.mxu0 0
          %2499 = vmatprep.mubr.bf16.mxu0 0
          %2500 = vmatmul.mubr.bf16.gmra.mrb[0].mxu0 %v2425
          %v2501 = vpop.f32.mrb[0].mxu0
          %v2502 = vadd.f32 %v2312, %v2501
          %v2503 = vpop.f32.mrb[0].mxu0
          %v2504 = vpop.f32.mrb[0].mxu0
          %v2505 = vpop.f32.mrb[0].mxu0
          %2506 = vdwg.mxu0
          %v2507 = vadd.f32 %v2424, %v2461
          %v2508 = vxor.u32 %v2507, 2147483648
          %v2509 = vmul.f32 %v2508, 1.442695
          %v2510 = vpow.pop %v2509
          %v2511 = vadd.f32 %v2510, 1.0
          %v2512 = vrcp.pop %v2511
          %v2513 = vmul.f32 1.0, %v2512
          %v2515 = vrot.slane %v2424, 1
          %v2517 = vadd.f32 %v2515, %v2463
          %v2518 = vxor.u32 %v2517, 2147483648
          %v2519 = vmul.f32 %v2518, 1.442695
          %v2520 = vpow.pop %v2519
          %v2521 = vadd.f32 %v2520, 1.0
          %v2522 = vrcp.pop %v2521
          %v2523 = vmul.f32 1.0, %v2522
          %v2524 = vmul.f32 %v2513, %v2502
          %v2525 = vrot.slane %v2424, 2
          %v2527 = vadd.f32 %v2525, %v2524
          %v2528 = vtanh.pop %v2527
          %v2529 = vsub.f32 1.0, %v2523
          %v2530 = vmul.f32 %v2529, %v2528
          %v2531 = vmul.f32 %v2523, %v2422
          %v2532 = vadd.f32 %v2530, %v2531
          %s2533 = scalar_lea.vmem [#allocation6], 2
          %v2534 = vld [vmem:[%s2533] ss:$8 sm:$0x7]
          %v2535 = vpack.c.bf16 %v2532, %v2532
          %2536 = vmatprep.subr.bf16.mxu0 %v2253
          %2537 = vmatpush1.bf16.msra.mxu0 %v2252
          %2538 = vmatprep.subr.bf16.mxu0 %v2256
          %2539 = vmatpush1.bf16.msra.mxu0 %v2255
          %2540 = vmatprep.subr.bf16.mxu0 %v2259
          %2541 = vmatpush1.bf16.msra.mxu0 %v2258
          %2542 = vmatprep.subr.bf16.mxu0 %v2262
          %2543 = vmatpush1.bf16.msra.mxu0 %v2261
          %2544 = vmatprep.subr.bf16.mxu0 %v2265
          %2545 = vmatpush1.bf16.msra.mxu0 %v2264
          %2546 = vmatprep.subr.bf16.mxu0 %v2268
          %2547 = vmatpush1.bf16.msra.mxu0 %v2267
          %2548 = vmatprep.subr.bf16.mxu0 %v2271
          %2549 = vmatpush1.bf16.msra.mxu0 %v2270
          %2550 = vmatprep.subr.bf16.mxu0 %v2274
          %2551 = vmatpush1.bf16.msra.mxu0 %v2273
          %2552 = vmatprep.subr.bf16.mxu0 0
          %2553 = vmatpush1.bf16.msra.mxu0 0
          %2554 = vmatprep.subr.bf16.mxu0 0
          %2555 = vmatpush1.bf16.msra.mxu0 0
          %2556 = vmatprep.subr.bf16.mxu0 0
          %2557 = vmatpush1.bf16.msra.mxu0 0
          %2558 = vmatprep.subr.bf16.mxu0 0
          %2559 = vmatpush1.bf16.msra.mxu0 0
          %2560 = vmatprep.subr.bf16.mxu0 0
          %2561 = vmatpush1.bf16.msra.mxu0 0
          %2562 = vmatprep.subr.bf16.mxu0 0
          %2563 = vmatpush1.bf16.msra.mxu0 0
          %2564 = vmatprep.subr.bf16.mxu0 0
          %2565 = vmatpush1.bf16.msra.mxu0 0
          %2566 = vmatprep.subr.bf16.mxu0 0
          %2567 = vmatpush1.bf16.msra.mxu0 0
          %2568 = vmatprep.mubr.bf16.mxu0 0
          %2569 = vmatmul.mubr.bf16.gmra.mrb[0].mxu0 %v2535
          %v2570 = vpop.f32.mrb[0].mxu0
          %v2571 = vadd.f32 %v2304, %v2570
          %v2572 = vpop.f32.mrb[0].mxu0
          %v2573 = vadd.f32 %v2308, %v2572
          %v2574 = vpop.f32.mrb[0].mxu0
          %v2575 = vpop.f32.mrb[0].mxu0
          %2576 = vdwg.mxu0
          %2577 = vmatprep.subr.bf16.mxu0 0
          %2578 = vmatpush1.bf16.msra.mxu0 %v2254
          %2579 = vmatprep.subr.bf16.mxu0 0
          %2580 = vmatpush1.bf16.msra.mxu0 %v2257
          %2581 = vmatprep.subr.bf16.mxu0 0
          %2582 = vmatpush1.bf16.msra.mxu0 %v2260
          %2583 = vmatprep.subr.bf16.mxu0 0
          %2584 = vmatpush1.bf16.msra.mxu0 %v2263
          %2585 = vmatprep.subr.bf16.mxu0 0
          %2586 = vmatpush1.bf16.msra.mxu0 %v2266
          %2587 = vmatprep.subr.bf16.mxu0 0
          %2588 = vmatpush1.bf16.msra.mxu0 %v2269
          %2589 = vmatprep.subr.bf16.mxu0 0
          %2590 = vmatpush1.bf16.msra.mxu0 %v2272
          %2591 = vmatprep.subr.bf16.mxu0 0
          %2592 = vmatpush1.bf16.msra.mxu0 %v2275
          %2593 = vmatprep.subr.bf16.mxu0 0
          %2594 = vmatpush1.bf16.msra.mxu0 0
          %2595 = vmatprep.subr.bf16.mxu0 0
          %2596 = vmatpush1.bf16.msra.mxu0 0
          %2597 = vmatprep.subr.bf16.mxu0 0
          %2598 = vmatpush1.bf16.msra.mxu0 0
          %2599 = vmatprep.subr.bf16.mxu0 0
          %2600 = vmatpush1.bf16.msra.mxu0 0
          %2601 = vmatprep.subr.bf16.mxu0 0
          %2602 = vmatpush1.bf16.msra.mxu0 0
          %2603 = vmatprep.subr.bf16.mxu0 0
          %2604 = vmatpush1.bf16.msra.mxu0 0
          %2605 = vmatprep.subr.bf16.mxu0 0
          %2606 = vmatpush1.bf16.msra.mxu0 0
          %2607 = vmatprep.subr.bf16.mxu0 0
          %2608 = vmatpush1.bf16.msra.mxu0 0
          %2609 = vmatprep.mubr.bf16.mxu0 0
          %2610 = vmatmul.mubr.bf16.gmra.mrb[0].mxu0 %v2535
          %v2611 = vpop.f32.mrb[0].mxu0
          %v2612 = vadd.f32 %v2312, %v2611
          %v2613 = vpop.f32.mrb[0].mxu0
          %v2614 = vpop.f32.mrb[0].mxu0
          %v2615 = vpop.f32.mrb[0].mxu0
          %2616 = vdwg.mxu0
          %v2617 = vadd.f32 %v2534, %v2571
          %v2618 = vxor.u32 %v2617, 2147483648
          %v2619 = vmul.f32 %v2618, 1.442695
          %v2620 = vpow.pop %v2619
          %v2621 = vadd.f32 %v2620, 1.0
          %v2622 = vrcp.pop %v2621
          %v2623 = vmul.f32 1.0, %v2622
          %v2625 = vrot.slane %v2534, 1
          %v2627 = vadd.f32 %v2625, %v2573
          %v2628 = vxor.u32 %v2627, 2147483648
          %v2629 = vmul.f32 %v2628, 1.442695
          %v2630 = vpow.pop %v2629
          %v2631 = vadd.f32 %v2630, 1.0
          %v2632 = vrcp.pop %v2631
          %v2633 = vmul.f32 1.0, %v2632
          %v2634 = vmul.f32 %v2623, %v2612
          %v2635 = vrot.slane %v2534, 2
          %v2637 = vadd.f32 %v2635, %v2634
          %v2638 = vtanh.pop %v2637
          %v2639 = vsub.f32 1.0, %v2633
          %v2640 = vmul.f32 %v2639, %v2638
          %v2641 = vmul.f32 %v2633, %v2532
          %v2642 = vadd.f32 %v2640, %v2641
          %v2643 = vld [vmem:[#allocation23] sm:$0x1]
          %v2644 = vpack.c.bf16 %v2643, %v2643
          %v2645 = vld [vmem:[#allocation31] sm:$0xf]
          %v2646 = vld [vmem:[#allocation31 + $0x4] sm:$0xf]
          %v2647 = vld [vmem:[#allocation31 + $0x8] sm:$0xf]
          %v2648 = vld [vmem:[#allocation31 + $0xc] sm:$0xf]
          %v2649 = vld [vmem:[#allocation31 + $0x10] sm:$0xf]
          %v2650 = vld [vmem:[#allocation31 + $0x14] sm:$0xf]
          %v2651 = vld [vmem:[#allocation31 + $0x18] sm:$0xf]
          %v2652 = vld [vmem:[#allocation31 + $0x1c] sm:$0xf]
          %v2653 = vld [vmem:[#allocation31 + $0x20] sm:$0xf]
          %v2654 = vld [vmem:[#allocation31 + $0x24] sm:$0xf]
          %v2655 = vld [vmem:[#allocation31 + $0x28] sm:$0xf]
          %v2656 = vld [vmem:[#allocation31 + $0x2c] sm:$0xf]
          %v2657 = vld [vmem:[#allocation31 + $0x30] sm:$0xf]
          %v2658 = vld [vmem:[#allocation31 + $0x34] sm:$0xf]
          %v2659 = vld [vmem:[#allocation31 + $0x38] sm:$0xf]
          %v2660 = vld [vmem:[#allocation31 + $0x3c] sm:$0xf]
          %v2661 = vld [vmem:[#allocation32] sm:$0x1]
          %v2678 = vunpack.c.l.b16 %v2645
          %v2679 = vunpack.c.l.b16 %v2646
          %v2680 = vunpack.c.l.b16 %v2647
          %v2681 = vunpack.c.l.b16 %v2648
          %v2682 = vunpack.c.l.b16 %v2649
          %v2683 = vunpack.c.l.b16 %v2650
          %v2684 = vunpack.c.l.b16 %v2651
          %v2685 = vunpack.c.l.b16 %v2652
          %v2686 = vunpack.c.l.b16 %v2653
          %v2687 = vunpack.c.l.b16 %v2654
          %v2688 = vunpack.c.l.b16 %v2655
          %v2689 = vunpack.c.l.b16 %v2656
          %v2690 = vunpack.c.l.b16 %v2657
          %v2691 = vunpack.c.l.b16 %v2658
          %v2692 = vunpack.c.l.b16 %v2659
          %v2693 = vunpack.c.l.b16 %v2660
          %v2694 = vpack.c.b16 %v2679, %v2678
          %v2695 = vpack.c.b16 %v2681, %v2680
          %v2696 = vpack.c.b16 %v2683, %v2682
          %v2697 = vpack.c.b16 %v2685, %v2684
          %v2698 = vpack.c.b16 %v2687, %v2686
          %v2699 = vpack.c.b16 %v2689, %v2688
          %v2700 = vpack.c.b16 %v2691, %v2690
          %v2701 = vpack.c.b16 %v2693, %v2692
          %2710 = vmatprep.subr.bf16.mxu0 0
          %2711 = vmatpush1.bf16.msra.mxu0 %v2694
          %2712 = vmatprep.subr.bf16.mxu0 0
          %2713 = vmatpush1.bf16.msra.mxu0 %v2695
          %2714 = vmatprep.subr.bf16.mxu0 0
          %2715 = vmatpush1.bf16.msra.mxu0 %v2696
          %2716 = vmatprep.subr.bf16.mxu0 0
          %2717 = vmatpush1.bf16.msra.mxu0 %v2697
          %2718 = vmatprep.subr.bf16.mxu0 0
          %2719 = vmatpush1.bf16.msra.mxu0 %v2698
          %2720 = vmatprep.subr.bf16.mxu0 0
          %2721 = vmatpush1.bf16.msra.mxu0 %v2699
          %2722 = vmatprep.subr.bf16.mxu0 0
          %2723 = vmatpush1.bf16.msra.mxu0 %v2700
          %2724 = vmatprep.subr.bf16.mxu0 0
          %2725 = vmatpush1.bf16.msra.mxu0 %v2701
          %2726 = vmatprep.subr.bf16.mxu0 0
          %2727 = vmatpush1.bf16.msra.mxu0 0
          %2728 = vmatprep.subr.bf16.mxu0 0
          %2729 = vmatpush1.bf16.msra.mxu0 0
          %2730 = vmatprep.subr.bf16.mxu0 0
          %2731 = vmatpush1.bf16.msra.mxu0 0
          %2732 = vmatprep.subr.bf16.mxu0 0
          %2733 = vmatpush1.bf16.msra.mxu0 0
          %2734 = vmatprep.subr.bf16.mxu0 0
          %2735 = vmatpush1.bf16.msra.mxu0 0
          %2736 = vmatprep.subr.bf16.mxu0 0
          %2737 = vmatpush1.bf16.msra.mxu0 0
          %2738 = vmatprep.subr.bf16.mxu0 0
          %2739 = vmatpush1.bf16.msra.mxu0 0
          %2740 = vmatprep.subr.bf16.mxu0 0
          %2741 = vmatpush1.bf16.msra.mxu0 0
          %2742 = vmatprep.mubr.bf16.mxu0 0
          %2743 = vmatmul.mubr.bf16.gmra.mrb[0].mxu0 %v2644
          %v2744 = vpop.f32.mrb[0].mxu0
          %v2745 = vadd.f32 %v2661, %v2744
          %v2746 = vpop.f32.mrb[0].mxu0
          %v2747 = vpop.f32.mrb[0].mxu0
          %v2748 = vpop.f32.mrb[0].mxu0
          %2749 = vdwg.mxu0
          %v2750 = vtanh.pop %v2745
          %v2751 = vpack.c.bf16 %v2642, %v2642
          %v2752 = vpack.c.bf16 %v2750, %v2750
          %v2753 = vld [vmem:[#allocation34] sm:$0xff]
          %v2754 = vld [vmem:[#allocation34 + $0x8] sm:$0xff]
          %v2755 = vld [vmem:[#allocation34 + $0x10] sm:$0xff]
          %v2756 = vld [vmem:[#allocation34 + $0x18] sm:$0xff]
          %v2757 = vld [vmem:[#allocation34 + $0x20] sm:$0xff]
          %v2758 = vld [vmem:[#allocation34 + $0x28] sm:$0xff]
          %v2759 = vld [vmem:[#allocation34 + $0x30] sm:$0xff]
          %v2760 = vld [vmem:[#allocation34 + $0x38] sm:$0xff]
          %v2761 = vld [vmem:[#allocation34 + $0x40] sm:$0xff]
          %v2762 = vld [vmem:[#allocation34 + $0x48] sm:$0xff]
          %v2763 = vld [vmem:[#allocation34 + $0x50] sm:$0xff]
          %v2764 = vld [vmem:[#allocation34 + $0x58] sm:$0xff]
          %v2765 = vld [vmem:[#allocation34 + $0x60] sm:$0xff]
          %v2766 = vld [vmem:[#allocation34 + $0x68] sm:$0xff]
          %v2767 = vld [vmem:[#allocation34 + $0x70] sm:$0xff]
          %v2768 = vld [vmem:[#allocation34 + $0x78] sm:$0xff]
          %v2769 = vld [vmem:[#allocation34 + $0x80] sm:$0xff]
          %v2770 = vld [vmem:[#allocation34 + $0x88] sm:$0xff]
          %v2771 = vld [vmem:[#allocation34 + $0x90] sm:$0xff]
          %v2772 = vld [vmem:[#allocation34 + $0x98] sm:$0xff]
          %v2773 = vld [vmem:[#allocation34 + $0xa0] sm:$0xff]
          %v2774 = vld [vmem:[#allocation34 + $0xa8] sm:$0xff]
          %v2775 = vld [vmem:[#allocation34 + $0xb0] sm:$0xff]
          %v2776 = vld [vmem:[#allocation34 + $0xb8] sm:$0xff]
          %v2777 = vld [vmem:[#allocation34 + $0xc0] sm:$0xff]
          %v2778 = vld [vmem:[#allocation34 + $0xc8] sm:$0xff]
          %v2779 = vld [vmem:[#allocation34 + $0xd0] sm:$0xff]
          %v2780 = vld [vmem:[#allocation34 + $0xd8] sm:$0xff]
          %v2781 = vld [vmem:[#allocation34 + $0xe0] sm:$0xff]
          %v2782 = vld [vmem:[#allocation34 + $0xe8] sm:$0xff]
          %v2783 = vld [vmem:[#allocation34 + $0xf0] sm:$0xff]
          %v2784 = vld [vmem:[#allocation34 + $0xf8] sm:$0xff]
          %v2785 = vld [vmem:[#allocation35] sm:$0x3]
          %v2818 = vunpack.c.l.b16 %v2753
          %v2819 = vunpack.c.h.b16 %v2753
          %v2820 = vunpack.c.l.b16 %v2754
          %v2821 = vunpack.c.h.b16 %v2754
          %v2822 = vunpack.c.l.b16 %v2755
          %v2823 = vunpack.c.h.b16 %v2755
          %v2824 = vunpack.c.l.b16 %v2756
          %v2825 = vunpack.c.h.b16 %v2756
          %v2826 = vunpack.c.l.b16 %v2757
          %v2827 = vunpack.c.h.b16 %v2757
          %v2828 = vunpack.c.l.b16 %v2758
          %v2829 = vunpack.c.h.b16 %v2758
          %v2830 = vunpack.c.l.b16 %v2759
          %v2831 = vunpack.c.h.b16 %v2759
          %v2832 = vunpack.c.l.b16 %v2760
          %v2833 = vunpack.c.h.b16 %v2760
          %v2834 = vunpack.c.l.b16 %v2761
          %v2835 = vunpack.c.h.b16 %v2761
          %v2836 = vunpack.c.l.b16 %v2762
          %v2837 = vunpack.c.h.b16 %v2762
          %v2838 = vunpack.c.l.b16 %v2763
          %v2839 = vunpack.c.h.b16 %v2763
          %v2840 = vunpack.c.l.b16 %v2764
          %v2841 = vunpack.c.h.b16 %v2764
          %v2842 = vunpack.c.l.b16 %v2765
          %v2843 = vunpack.c.h.b16 %v2765
          %v2844 = vunpack.c.l.b16 %v2766
          %v2845 = vunpack.c.h.b16 %v2766
          %v2846 = vunpack.c.l.b16 %v2767
          %v2847 = vunpack.c.h.b16 %v2767
          %v2848 = vunpack.c.l.b16 %v2768
          %v2849 = vunpack.c.h.b16 %v2768
          %v2850 = vunpack.c.l.b16 %v2769
          %v2851 = vunpack.c.h.b16 %v2769
          %v2852 = vunpack.c.l.b16 %v2770
          %v2853 = vunpack.c.h.b16 %v2770
          %v2854 = vunpack.c.l.b16 %v2771
          %v2855 = vunpack.c.h.b16 %v2771
          %v2856 = vunpack.c.l.b16 %v2772
          %v2857 = vunpack.c.h.b16 %v2772
          %v2858 = vunpack.c.l.b16 %v2773
          %v2859 = vunpack.c.h.b16 %v2773
          %v2860 = vunpack.c.l.b16 %v2774
          %v2861 = vunpack.c.h.b16 %v2774
          %v2862 = vunpack.c.l.b16 %v2775
          %v2863 = vunpack.c.h.b16 %v2775
          %v2864 = vunpack.c.l.b16 %v2776
          %v2865 = vunpack.c.h.b16 %v2776
          %v2866 = vunpack.c.l.b16 %v2777
          %v2867 = vunpack.c.h.b16 %v2777
          %v2868 = vunpack.c.l.b16 %v2778
          %v2869 = vunpack.c.h.b16 %v2778
          %v2870 = vunpack.c.l.b16 %v2779
          %v2871 = vunpack.c.h.b16 %v2779
          %v2872 = vunpack.c.l.b16 %v2780
          %v2873 = vunpack.c.h.b16 %v2780
          %v2874 = vunpack.c.l.b16 %v2781
          %v2875 = vunpack.c.h.b16 %v2781
          %v2876 = vunpack.c.l.b16 %v2782
          %v2877 = vunpack.c.h.b16 %v2782
          %v2878 = vunpack.c.l.b16 %v2783
          %v2879 = vunpack.c.h.b16 %v2783
          %v2880 = vunpack.c.l.b16 %v2784
          %v2881 = vunpack.c.h.b16 %v2784
          %v2882 = vpack.c.b16 %v2820, %v2818
          %v2883 = vpack.c.b16 %v2821, %v2819
          %v2884 = vpack.c.b16 %v2824, %v2822
          %v2885 = vpack.c.b16 %v2825, %v2823
          %v2886 = vpack.c.b16 %v2828, %v2826
          %v2887 = vpack.c.b16 %v2829, %v2827
          %v2888 = vpack.c.b16 %v2832, %v2830
          %v2889 = vpack.c.b16 %v2833, %v2831
          %v2890 = vpack.c.b16 %v2836, %v2834
          %v2891 = vpack.c.b16 %v2837, %v2835
          %v2892 = vpack.c.b16 %v2840, %v2838
          %v2893 = vpack.c.b16 %v2841, %v2839
          %v2894 = vpack.c.b16 %v2844, %v2842
          %v2895 = vpack.c.b16 %v2845, %v2843
          %v2896 = vpack.c.b16 %v2848, %v2846
          %v2897 = vpack.c.b16 %v2849, %v2847
          %v2898 = vpack.c.b16 %v2852, %v2850
          %v2899 = vpack.c.b16 %v2853, %v2851
          %v2900 = vpack.c.b16 %v2856, %v2854
          %v2901 = vpack.c.b16 %v2857, %v2855
          %v2902 = vpack.c.b16 %v2860, %v2858
          %v2903 = vpack.c.b16 %v2861, %v2859
          %v2904 = vpack.c.b16 %v2864, %v2862
          %v2905 = vpack.c.b16 %v2865, %v2863
          %v2906 = vpack.c.b16 %v2868, %v2866
          %v2907 = vpack.c.b16 %v2869, %v2867
          %v2908 = vpack.c.b16 %v2872, %v2870
          %v2909 = vpack.c.b16 %v2873, %v2871
          %v2910 = vpack.c.b16 %v2876, %v2874
          %v2911 = vpack.c.b16 %v2877, %v2875
          %v2912 = vpack.c.b16 %v2880, %v2878
          %v2913 = vpack.c.b16 %v2881, %v2879
          %v2947 = vlaneseq
          %v2948 = vshrl.u32 %v2947, 7
          %v2949 = vsub.s32 0, %v2948
          %v2950 = vrot.slane %v2785, %v2949
          %v2951 = vlaneseq
          %v2952 = vshrl.u32 %v2951, 7
          %v2953 = vsub.s32 1, %v2952
          %v2954 = vrot.slane %v2785, %v2953
          %2957 = vmatprep.subr.bf16.mxu0 %v2883
          %2958 = vmatpush1.bf16.msra.mxu0 %v2882
          %2959 = vmatprep.subr.bf16.mxu0 %v2885
          %2960 = vmatpush1.bf16.msra.mxu0 %v2884
          %2961 = vmatprep.subr.bf16.mxu0 %v2887
          %2962 = vmatpush1.bf16.msra.mxu0 %v2886
          %2963 = vmatprep.subr.bf16.mxu0 %v2889
          %2964 = vmatpush1.bf16.msra.mxu0 %v2888
          %2965 = vmatprep.subr.bf16.mxu0 %v2891
          %2966 = vmatpush1.bf16.msra.mxu0 %v2890
          %2967 = vmatprep.subr.bf16.mxu0 %v2893
          %2968 = vmatpush1.bf16.msra.mxu0 %v2892
          %2969 = vmatprep.subr.bf16.mxu0 %v2895
          %2970 = vmatpush1.bf16.msra.mxu0 %v2894
          %2971 = vmatprep.subr.bf16.mxu0 %v2897
          %2972 = vmatpush1.bf16.msra.mxu0 %v2896
          %2973 = vmatprep.subr.bf16.mxu0 %v2899
          %2974 = vmatpush1.bf16.msra.mxu0 %v2898
          %2975 = vmatprep.subr.bf16.mxu0 %v2901
          %2976 = vmatpush1.bf16.msra.mxu0 %v2900
          %2977 = vmatprep.subr.bf16.mxu0 %v2903
          %2978 = vmatpush1.bf16.msra.mxu0 %v2902
          %2979 = vmatprep.subr.bf16.mxu0 %v2905
          %2980 = vmatpush1.bf16.msra.mxu0 %v2904
          %2981 = vmatprep.subr.bf16.mxu0 %v2907
          %2982 = vmatpush1.bf16.msra.mxu0 %v2906
          %2983 = vmatprep.subr.bf16.mxu0 %v2909
          %2984 = vmatpush1.bf16.msra.mxu0 %v2908
          %2985 = vmatprep.subr.bf16.mxu0 %v2911
          %2986 = vmatpush1.bf16.msra.mxu0 %v2910
          %2987 = vmatprep.subr.bf16.mxu0 %v2913
          %2988 = vmatpush1.bf16.msra.mxu0 %v2912
          %2989 = vmatprep.mubr.bf16.mxu0 %v2752
          %2990 = vmatmul.mubr.bf16.gmra.mrb[0].mxu0 %v2751
          %v2991 = vpop.f32.mrb[0].mxu0
          %v2992 = vadd.f32 %v2950, %v2991
          %v2993 = vpop.f32.mrb[0].mxu0
          %v2994 = vadd.f32 %v2954, %v2993
          %v2995 = vpop.f32.mrb[0].mxu0
          %v2996 = vpop.f32.mrb[0].mxu0
          %2997 = vdwg.mxu0
          %v2998 = vxor.u32 %v2992, 2147483648
          %v2999 = vxor.u32 %v2994, 2147483648
          %v3000 = vmul.f32 %v2998, 1.442695
          %v3001 = vpow.pop %v3000
          %v3002 = vmul.f32 %v2999, 1.442695
          %v3003 = vpow.pop %v3002
          %v3004 = vadd.f32 %v3001, 1.0
          %v3005 = vadd.f32 %v3003, 1.0
          %v3006 = vrcp.pop %v3004
          %v3007 = vmul.f32 1.0, %v3006
          %v3008 = vrcp.pop %v3005
          %v3009 = vmul.f32 1.0, %v3008
          %v3010 = vmul.f32 %v2642, %v3007
          %v3011 = vmul.f32 %v2750, %v3009
          %v3012 = vadd.f32 %v3010, %v3011
          %v3013 = vtanh.pop %v3012
          %v3014 = vpack.c.bf16 %v3013, %v3013
          %v3015 = vld [vmem:[#allocation37] sm:$0xf]
          %v3016 = vld [vmem:[#allocation37 + $0x4] sm:$0xf]
          %v3017 = vld [vmem:[#allocation37 + $0x8] sm:$0xf]
          %v3018 = vld [vmem:[#allocation37 + $0xc] sm:$0xf]
          %v3019 = vld [vmem:[#allocation37 + $0x10] sm:$0xf]
          %v3020 = vld [vmem:[#allocation37 + $0x14] sm:$0xf]
          %v3021 = vld [vmem:[#allocation37 + $0x18] sm:$0xf]
          %v3022 = vld [vmem:[#allocation37 + $0x1c] sm:$0xf]
          %v3023 = vld [vmem:[#allocation37 + $0x20] sm:$0xf]
          %v3024 = vld [vmem:[#allocation37 + $0x24] sm:$0xf]
          %v3025 = vld [vmem:[#allocation37 + $0x28] sm:$0xf]
          %v3026 = vld [vmem:[#allocation37 + $0x2c] sm:$0xf]
          %v3027 = vld [vmem:[#allocation37 + $0x30] sm:$0xf]
          %v3028 = vld [vmem:[#allocation37 + $0x34] sm:$0xf]
          %v3029 = vld [vmem:[#allocation37 + $0x38] sm:$0xf]
          %v3030 = vld [vmem:[#allocation37 + $0x3c] sm:$0xf]
          %v3031 = vld [vmem:[#allocation38] sm:$0x1]
          %v3048 = vunpack.c.l.b16 %v3015
          %v3049 = vunpack.c.l.b16 %v3016
          %v3050 = vunpack.c.l.b16 %v3017
          %v3051 = vunpack.c.l.b16 %v3018
          %v3052 = vunpack.c.l.b16 %v3019
          %v3053 = vunpack.c.l.b16 %v3020
          %v3054 = vunpack.c.l.b16 %v3021
          %v3055 = vunpack.c.l.b16 %v3022
          %v3056 = vunpack.c.l.b16 %v3023
          %v3057 = vunpack.c.l.b16 %v3024
          %v3058 = vunpack.c.l.b16 %v3025
          %v3059 = vunpack.c.l.b16 %v3026
          %v3060 = vunpack.c.l.b16 %v3027
          %v3061 = vunpack.c.l.b16 %v3028
          %v3062 = vunpack.c.l.b16 %v3029
          %v3063 = vunpack.c.l.b16 %v3030
          %v3064 = vpack.c.b16 %v3049, %v3048
          %v3065 = vpack.c.b16 %v3051, %v3050
          %v3066 = vpack.c.b16 %v3053, %v3052
          %v3067 = vpack.c.b16 %v3055, %v3054
          %v3068 = vpack.c.b16 %v3057, %v3056
          %v3069 = vpack.c.b16 %v3059, %v3058
          %v3070 = vpack.c.b16 %v3061, %v3060
          %v3071 = vpack.c.b16 %v3063, %v3062
          %3080 = vmatprep.subr.bf16.mxu0 0
          %3081 = vmatpush1.bf16.msra.mxu0 %v3064
          %3082 = vmatprep.subr.bf16.mxu0 0
          %3083 = vmatpush1.bf16.msra.mxu0 %v3065
          %3084 = vmatprep.subr.bf16.mxu0 0
          %3085 = vmatpush1.bf16.msra.mxu0 %v3066
          %3086 = vmatprep.subr.bf16.mxu0 0
          %3087 = vmatpush1.bf16.msra.mxu0 %v3067
          %3088 = vmatprep.subr.bf16.mxu0 0
          %3089 = vmatpush1.bf16.msra.mxu0 %v3068
          %3090 = vmatprep.subr.bf16.mxu0 0
          %3091 = vmatpush1.bf16.msra.mxu0 %v3069
          %3092 = vmatprep.subr.bf16.mxu0 0
          %3093 = vmatpush1.bf16.msra.mxu0 %v3070
          %3094 = vmatprep.subr.bf16.mxu0 0
          %3095 = vmatpush1.bf16.msra.mxu0 %v3071
          %3096 = vmatprep.subr.bf16.mxu0 0
          %3097 = vmatpush1.bf16.msra.mxu0 0
          %3098 = vmatprep.subr.bf16.mxu0 0
          %3099 = vmatpush1.bf16.msra.mxu0 0
          %3100 = vmatprep.subr.bf16.mxu0 0
          %3101 = vmatpush1.bf16.msra.mxu0 0
          %3102 = vmatprep.subr.bf16.mxu0 0
          %3103 = vmatpush1.bf16.msra.mxu0 0
          %3104 = vmatprep.subr.bf16.mxu0 0
          %3105 = vmatpush1.bf16.msra.mxu0 0
          %3106 = vmatprep.subr.bf16.mxu0 0
          %3107 = vmatpush1.bf16.msra.mxu0 0
          %3108 = vmatprep.subr.bf16.mxu0 0
          %3109 = vmatpush1.bf16.msra.mxu0 0
          %3110 = vmatprep.subr.bf16.mxu0 0
          %3111 = vmatpush1.bf16.msra.mxu0 0
          %3112 = vmatprep.mubr.bf16.mxu0 0
          %3113 = vmatmul.mubr.bf16.gmra.mrb[0].mxu0 %v3014
          %v3114 = vpop.f32.mrb[0].mxu0
          %v3115 = vadd.f32 %v3031, %v3114
          %v3116 = vpop.f32.mrb[0].mxu0
          %v3117 = vpop.f32.mrb[0].mxu0
          %v3118 = vpop.f32.mrb[0].mxu0
          %3119 = vdwg.mxu0
          %v3120 = vlaneseq
          %v3121 = vand.u32 %v3120, 127
          %vm3122 = vcmp.lt.s32.totalorder %v3121, 4
          %v3123 = vsel %vm3122, %v3115, -1e+30
          %vm3124 = vcmask 1040384
          %v3125 = vsel %vm3124, %v3123, -inf
          %3126 = vmax.xlane.f32.xlu0 %v3125
          %v3127 = vpop.xlane.xlu0 %3126
          %v3128 = vsub.f32 %v3123, %v3127
          %v3129 = vmul.f32 %v3128, 1.442695
          %v3130 = vpow.pop %v3129
          %v3131 = vsel %vm3124, %v3130, 0.0
          %3132 = vadd.xlane.f32.xlu0 %v3131
          %v3133 = vpop.xlane.xlu0 %3132
          %v3134 = vlog2.pop %v3133
          %v3135 = vmul.f32 %v3134, 0.6931472
          %v3136 = vsub.f32 %v3128, %v3135
          %3137 = vst [vmem:[#allocation40] sm:$0x1] %v3136
        $region172: #{gated_drgt_forward.1} parent=91 // pred_fallthru
          _
        // Predicated region
        $region173: #{gated_drgt_forward.1} parent=91 // pred_check
          %p3138 = pneg %p449
        $region174: #{gated_drgt_forward.1} parent=91 // pred_check_branch
          %3140 = sbr.rel (%p3138) target = $region176
        $region175: #{gated_drgt_forward.1} parent=91 // pred_region
          %s3142 = ssub.s32 16, 16
          %3143 = vsyncadd [#allocation13], %s3142
          %s3145 = sshll.u32 [#allocation40], 4
          %s3146 = int_to_ptr.vmem [resolvable:$true] %s3145
          %3148 = dma.vmem_to_hbm [thread:$0]  %s3146, 16, %s21, [#allocation13]
        $region176: #{gated_drgt_forward.1} parent=91 // pred_fallthru
          _
        // Predicated region
        $region177: #{gated_drgt_forward.1} parent=91 // pred_check
          %p3149 = pneg %p449
        $region178: #{gated_drgt_forward.1} parent=91 // pred_check_branch
          %3151 = sbr.rel (%p3149) target = $region180
        $region179: #{gated_drgt_forward.1} parent=91 // pred_region
          %3152 = dma.done [#allocation13], 16
        $region180: #{gated_drgt_forward.1} parent=91 // pred_fallthru
          _
      $region92: #{gated_drgt_forward.1} parent=5 // pred_fallthru
        _
      %p3153 = scmp.le.s32.totalorder 2, %s48
      // Predicated region
      $region181: #{gated_drgt_forward.1} parent=5 // pred_check
        %p3154 = pneg %p3153
      $region182: #{gated_drgt_forward.1} parent=5 // pred_check_branch
        %3156 = sbr.rel (%p3154) target = $region184
      $region183: #{gated_drgt_forward.1} parent=5 // pred_region
        %s3157 = ssub.s32 %s48, 2
      $region184: #{gated_drgt_forward.1} parent=5 // pred_fallthru
        _
    $region6: #{gated_drgt_forward.1} parent=1 // loop_footer
      %s52 = sadd.s32 1, %s48
    $region7: #{gated_drgt_forward.1} parent=1 // loop_footer_branch
      %47 = sbr.rel target = $region3
    $region8: #{gated_drgt_forward.1} parent=1 // loop_exit
      _
    %3158 = vsyncpa [#allocation12], 1
    %s3159 = scalar_lea.sflag [#allocation12], 1
    %3160 = vsyncpa %s3159, 1
    %3161 = vsyncpa [#allocation15], 1
    %3162 = vsyncpa [#allocation18], 1
    %3163 = vsyncpa [#allocation21], 1
    %3164 = vsyncpa [#allocation24], 1
    %3165 = vsyncpa [#allocation27], 1
    %3166 = vsyncpa [#allocation30], 1
    %3167 = vsyncpa [#allocation33], 1
    %3168 = vsyncpa [#allocation36], 1
    %3169 = vsyncpa [#allocation39], 1
    %3170 = vsyncpa [#allocation13], 1
    %s3171 = scalar_lea.sflag [#allocation13], 1
    %3172 = vsyncpa %s3171, 1

</llo_original>
